<compile_context>
chip_gen: v7x
topology: tpu7x:2x2x1
jax: 0.10.0
libtpu: 0.0.40
codegen_flags: <defaults>
</compile_context>

<pallas_src>
import jax
import jax.numpy as jnp
from jax.experimental import pallas as pl
from jax.experimental.pallas import tpu as pltpu

# ---------------- configuration (small shapes consistent with the module) ----
CHAR_LIST = ['a', 'b', 'c', 'd', 'e', 'f', 'g', 'h', 'i', 'j', 'k', 'l', 'm',
             'n', 'o', 'p', 'q', 'r', 's', 't', 'u', 'v', 'w', 'x', 'y', 'z',
             'greaterThan', 'comma', 'apostrophe', 'tilde', 'questionMark']
NUM_CLASSES = len(CHAR_LIST)      # 31
PATCH = 16
HIDDEN = 32                       # hidden_dim (768 in the full module)
NUM_HEADS = 4                     # (12 in the full module)
NUM_LAYERS = 2                    # (6 in the full module)
HEAD_DIM = HIDDEN // NUM_HEADS
FF = 4 * HIDDEN
IMG = 32                          # H = W = 32 -> (32/16)^2 = 4 patches
LN_EPS = 1e-5

# NOTE: at HIDDEN=32 the model is latency/launch bound, not MXU bound.  If
# scaled back up to the full 768-dim ViT, the FFN matmuls must be re-tiled
# (tm=tn=128, tk=256-512) with a grid and vmem_limit_bytes re-checked on v7x.


# ------------------------------ helpers ---------------------------------------
def _layernorm(x, gamma, beta):
    mu = jnp.mean(x, axis=-1, keepdims=True)
    var = jnp.mean((x - mu) ** 2, axis=-1, keepdims=True)
    return (x - mu) * jax.lax.rsqrt(var + LN_EPS) * gamma + beta


def _modi(x, n):
    """Integer modulo by a static n (bitwise AND when n is a power of two)."""
    if n & (n - 1) == 0:
        return jnp.bitwise_and(x, n - 1)
    return jax.lax.rem(x, jnp.int32(n))


# --------------------------------- fused kernel -------------------------------
def _make_fused_kernel(B, N):
    T = B * N
    D = HIDDEN
    HD = HEAD_DIM
    scale = 1.0 / (HD ** 0.5)
    bf16 = jnp.bfloat16

    def kernel(patches_ref, patch_w_ref, patch_b_ref, pos_ref,
               wqkv_ref, bqkv_ref, wo_ref, bo_ref,
               ln1_g_ref, ln1_b_ref, w1_ref, b1_ref, w2_ref, b2_ref,
               ln2_g_ref, ln2_b_ref, head_w_ref, head_b_ref, o_ref):
        # ---- patch embedding (Conv2d(k=p, stride=p) == per-patch linear) ----
        x = (jnp.dot(patches_ref[...].astype(bf16), patch_w_ref[...],
                     preferred_element_type=jnp.float32)
             + patch_b_ref[...])                              # (T, D), f32
        # positional embedding: rows are ordered (b, n) b-major -> tile over B
        pos = pos_ref[...]                                    # (N, D)
        x = x + jnp.concatenate([pos] * B, axis=0)

        # ---- additive attention mask reproducing batch_first=False grouping:
        # row i = (b, n) may only attend to rows j with the same n.
        row = jax.lax.broadcasted_iota(jnp.int32, (T, T), 0)
        col = jax.lax.broadcasted_iota(jnp.int32, (T, T), 1)
        same_seq = _modi(row, N) == _modi(col, N)
        attn_bias = jnp.where(same_seq, jnp.float32(0.0), jnp.float32(-1e30))

        # ---- transformer encoder layers (post-norm, ReLU FFN) ----------------
        for l in range(NUM_LAYERS):
            wqkv_l = wqkv_ref[l]                              # (D, 3D) bf16
            wo_l = wo_ref[l]                                  # (D, D)  bf16
            qkv = (jnp.dot(x.astype(bf16), wqkv_l,
                           preferred_element_type=jnp.float32)
                   + bqkv_ref[l])                             # (T, 3D) f32

            attn = jnp.zeros((T, D), jnp.float32)
            for h in range(NUM_HEADS):
                q = qkv[:, h * HD:(h + 1) * HD]               # (T, HD)
                k = qkv[:, D + h * HD:D + (h + 1) * HD]
                v = qkv[:, 2 * D + h * HD:2 * D + (h + 1) * HD]
                s = jax.lax.dot_general(
                    q, k, (((1,), (1,)), ((), ())),
                    preferred_element_type=jnp.float32)       # (T, T)
                s = s * scale + attn_bias
                s = s - jnp.max(s, axis=-1, keepdims=True)
                p = jnp.exp(s)
                p = p * pl.reciprocal(jnp.sum(p, axis=-1, keepdims=True),
                                      approx=True)
                ao = jnp.dot(p, v, preferred_element_type=jnp.float32)
                # out-projection folded per head:
                #   concat_h(ao_h) @ wo == sum_h ao_h @ wo[h*HD:(h+1)*HD, :]
                attn = attn + jnp.dot(
                    ao.astype(bf16), wo_l[h * HD:(h + 1) * HD, :],
                    preferred_element_type=jnp.float32)
            attn = attn + bo_ref[l]

            h1 = _layernorm(x + attn, ln1_g_ref[l], ln1_b_ref[l])   # norm1
            ff = (jnp.dot(h1.astype(bf16), w1_ref[l],
                          preferred_element_type=jnp.float32) + b1_ref[l])
            ff = jnp.maximum(ff, 0.0)                               # ReLU
            ff = (jnp.dot(ff.astype(bf16), w2_ref[l],
                          preferred_element_type=jnp.float32) + b2_ref[l])
            x = _layernorm(h1 + ff, ln2_g_ref[l], ln2_b_ref[l])     # norm2

        # ---- mean over the N patches of each image + classification head ----
        pooled = jnp.concatenate(
            [jnp.sum(x[b * N:(b + 1) * N, :], axis=0, keepdims=True)
             for b in range(B)], axis=0) * (1.0 / N)                # (B, D)
        o_ref[...] = (jnp.dot(pooled.astype(bf16), head_w_ref[...],
                              preferred_element_type=jnp.float32)
                      + head_b_ref[...])

    return kernel


# --------------------------------- params ------------------------------------
def init_params(key, num_patches):
    f32, bf16 = jnp.float32, jnp.bfloat16
    keys = iter(jax.random.split(key, 16))
    nxt = lambda: next(keys)
    K = 3 * PATCH * PATCH
    L = NUM_LAYERS
    return {
        # MXU matmul weights stored in bf16 (f32 accumulation in-kernel)
        'patch_w': (0.02 * jax.random.normal(nxt(), (K, HIDDEN), f32)).astype(bf16),
        'patch_b': 0.02 * jax.random.normal(nxt(), (1, HIDDEN), f32),
        'pos': jax.random.uniform(nxt(), (num_patches, HIDDEN), f32),
        'wqkv': (0.02 * jax.random.normal(nxt(), (L, HIDDEN, 3 * HIDDEN), f32)).astype(bf16),
        'bqkv': 0.02 * jax.random.normal(nxt(), (L, 1, 3 * HIDDEN), f32),
        'wo':   (0.02 * jax.random.normal(nxt(), (L, HIDDEN, HIDDEN), f32)).astype(bf16),
        'bo':   jnp.zeros((L, 1, HIDDEN), f32),
        'ln1_g': jnp.ones((L, 1, HIDDEN), f32),
        'ln1_b': jnp.zeros((L, 1, HIDDEN), f32),
        'w1':   (0.02 * jax.random.normal(nxt(), (L, HIDDEN, FF), f32)).astype(bf16),
        'b1':   0.02 * jax.random.normal(nxt(), (L, 1, FF), f32),
        'w2':   (0.02 * jax.random.normal(nxt(), (L, FF, HIDDEN), f32)).astype(bf16),
        'b2':   jnp.zeros((L, 1, HIDDEN), f32),
        'ln2_g': jnp.ones((L, 1, HIDDEN), f32),
        'ln2_b': jnp.zeros((L, 1, HIDDEN), f32),
        'head_w': (0.02 * jax.random.normal(nxt(), (HIDDEN, NUM_CLASSES), f32)).astype(bf16),
        'head_b': jnp.zeros((1, NUM_CLASSES), f32),
    }


# --------------------------------- forward -----------------------------------
def vit_forward(params, x):
    B, C, H, W = x.shape
    p = PATCH
    nh, nw = H // p, W // p
    N = nh * nw

    # Conv2d(k=p, stride=p) == per-patch linear: extract patches in (c,u,v)
    # order, matching the flattened Conv2d weight. (glue: layout only)
    patches = (x.reshape(B, C, nh, p, nw, p)
                 .transpose(0, 2, 4, 1, 3, 5)
                 .reshape(B * N, C * p * p))

    kernel = _make_fused_kernel(B, N)
    n_inputs = 18
    vmem = pl.BlockSpec(memory_space=pltpu.MemorySpace.VMEM)
    logits = pl.pallas_call(
        kernel,
        out_shape=jax.ShapeDtypeStruct((B, NUM_CLASSES), jnp.float32),
        in_specs=[vmem] * n_inputs,
        out_specs=vmem,
    )(patches,
      params['patch_w'], params['patch_b'], params['pos'],
      params['wqkv'], params['bqkv'], params['wo'], params['bo'],
      params['ln1_g'], params['ln1_b'], params['w1'], params['b1'],
      params['w2'], params['b2'], params['ln2_g'], params['ln2_b'],
      params['head_w'], params['head_b'])
    return logits


# ----------------------------------- main -------------------------------------
if __name__ == "__main__":
    key = jax.random.PRNGKey(0)
    k_x, k_p = jax.random.split(key)
    x = jax.random.normal(k_x, (2, 3, IMG, IMG), jnp.float32)   # NCHW
    num_patches = (IMG // PATCH) * (IMG // PATCH)
    params = init_params(k_p, num_patches)

    logits = jax.jit(vit_forward)(params, x)
    logits = jax.block_until_ready(logits)

    assert logits.shape == (2, NUM_CLASSES)
    assert bool(jnp.all(jnp.isfinite(logits)))
    print("KERNEL_OK")
</pallas_src>

<mosaic_0001>
module attributes {stable_mosaic.version = 11 : i64} {
  func.func @kernel(%arg0: memref<8x768xf32, #tpu.memory_space<vmem>>, %arg1: memref<768x32xbf16, #tpu.memory_space<vmem>>, %arg2: memref<1x32xf32, #tpu.memory_space<vmem>>, %arg3: memref<4x32xf32, #tpu.memory_space<vmem>>, %arg4: memref<2x32x96xbf16, #tpu.memory_space<vmem>>, %arg5: memref<2x1x96xf32, #tpu.memory_space<vmem>>, %arg6: memref<2x32x32xbf16, #tpu.memory_space<vmem>>, %arg7: memref<2x1x32xf32, #tpu.memory_space<vmem>>, %arg8: memref<2x1x32xf32, #tpu.memory_space<vmem>>, %arg9: memref<2x1x32xf32, #tpu.memory_space<vmem>>, %arg10: memref<2x32x128xbf16, #tpu.memory_space<vmem>>, %arg11: memref<2x1x128xf32, #tpu.memory_space<vmem>>, %arg12: memref<2x128x32xbf16, #tpu.memory_space<vmem>>, %arg13: memref<2x1x32xf32, #tpu.memory_space<vmem>>, %arg14: memref<2x1x32xf32, #tpu.memory_space<vmem>>, %arg15: memref<2x1x32xf32, #tpu.memory_space<vmem>>, %arg16: memref<32x31xbf16, #tpu.memory_space<vmem>>, %arg17: memref<1x31xf32, #tpu.memory_space<vmem>>, %arg18: memref<2x31xf32, #tpu.memory_space<vmem>>) attributes {dimension_semantics = [], scalar_prefetch = 0 : i64, scratch_operands = 0 : i64, tpu.core_type = #tpu.core_type<tc>} {
    %c0 = arith.constant 0 : index
    %c0_0 = arith.constant 0 : index
    %0 = vector.load %arg0[%c0, %c0_0] : memref<8x768xf32, #tpu.memory_space<vmem>>, vector<8x768xf32>
    %1 = arith.truncf %0 : vector<8x768xf32> to vector<8x768xbf16>
    %c0_1 = arith.constant 0 : index
    %c0_2 = arith.constant 0 : index
    %2 = vector.load %arg1[%c0_1, %c0_2] : memref<768x32xbf16, #tpu.memory_space<vmem>>, vector<768x32xbf16>
    %cst = arith.constant dense<0.000000e+00> : vector<8x32xf32>
    %3 = tpu.matmul %1, %2, %cst {dimension_numbers = #tpu.dot_dimension_numbers<[1], [0], [0], [1], [0, 0, 1, 1], [], []>} : vector<8x768xbf16>, vector<768x32xbf16>, vector<8x32xf32> -> vector<8x32xf32>
    %c0_3 = arith.constant 0 : index
    %c0_4 = arith.constant 0 : index
    %4 = vector.load %arg2[%c0_3, %c0_4] : memref<1x32xf32, #tpu.memory_space<vmem>>, vector<1x32xf32>
    %5 = vector.broadcast %4 : vector<1x32xf32> to vector<8x32xf32>
    %6 = arith.addf %3, %5 : vector<8x32xf32>
    %c0_5 = arith.constant 0 : index
    %c0_6 = arith.constant 0 : index
    %7 = vector.load %arg3[%c0_5, %c0_6] : memref<4x32xf32, #tpu.memory_space<vmem>>, vector<4x32xf32>
    %8 = tpu.concatenate %7, %7 in 0 : vector<4x32xf32>, vector<4x32xf32> -> vector<8x32xf32>
    %9 = arith.addf %6, %8 : vector<8x32xf32>
    %10 = tpu.iota {dimensions = array<i32: 0>} : vector<8x8xi32>
    %11 = tpu.iota {dimensions = array<i32: 1>} : vector<8x8xi32>
    %c3_i32 = arith.constant 3 : i32
    %12 = vector.broadcast %c3_i32 : i32 to vector<8x8xi32>
    %13 = arith.andi %10, %12 : vector<8x8xi32>
    %c3_i32_7 = arith.constant 3 : i32
    %14 = vector.broadcast %c3_i32_7 : i32 to vector<8x8xi32>
    %15 = arith.andi %11, %14 : vector<8x8xi32>
    %16 = arith.cmpi eq, %13, %15 : vector<8x8xi32>
    %cst_8 = arith.constant 0.000000e+00 : f32
    %cst_9 = arith.constant -1.000000e+30 : f32
    %17 = vector.broadcast %cst_8 : f32 to vector<8x8xf32>
    %18 = vector.broadcast %cst_9 : f32 to vector<8x8xf32>
    %19 = arith.select %16, %17, %18 : vector<8x8xi1>, vector<8x8xf32>
    %c0_10 = arith.constant 0 : index
    %c0_11 = arith.constant 0 : index
    %c0_12 = arith.constant 0 : index
    %20 = vector.load %arg4[%c0_10, %c0_11, %c0_12] : memref<2x32x96xbf16, #tpu.memory_space<vmem>>, vector<1x32x96xbf16>
    %21 = vector.shape_cast %20 : vector<1x32x96xbf16> to vector<32x96xbf16>
    %c0_13 = arith.constant 0 : index
    %c0_14 = arith.constant 0 : index
    %c0_15 = arith.constant 0 : index
    %22 = vector.load %arg6[%c0_13, %c0_14, %c0_15] : memref<2x32x32xbf16, #tpu.memory_space<vmem>>, vector<1x32x32xbf16>
    %23 = vector.shape_cast %22 : vector<1x32x32xbf16> to vector<32x32xbf16>
    %24 = arith.truncf %9 : vector<8x32xf32> to vector<8x32xbf16>
    %cst_16 = arith.constant dense<0.000000e+00> : vector<8x96xf32>
    %25 = tpu.matmul %24, %21, %cst_16 {dimension_numbers = #tpu.dot_dimension_numbers<[1], [0], [0], [1], [0, 0, 1, 1], [], []>} : vector<8x32xbf16>, vector<32x96xbf16>, vector<8x96xf32> -> vector<8x96xf32>
    %c0_17 = arith.constant 0 : index
    %c0_18 = arith.constant 0 : index
    %c0_19 = arith.constant 0 : index
    %26 = vector.load %arg5[%c0_17, %c0_18, %c0_19] : memref<2x1x96xf32, #tpu.memory_space<vmem>>, vector<1x1x96xf32>
    %27 = vector.shape_cast %26 : vector<1x1x96xf32> to vector<1x96xf32>
    %28 = vector.broadcast %27 : vector<1x96xf32> to vector<8x96xf32>
    %29 = arith.addf %25, %28 : vector<8x96xf32>
    %cst_20 = arith.constant 0.000000e+00 : f32
    %30 = vector.broadcast %cst_20 : f32 to vector<8x32xf32>
    %31 = vector.extract_strided_slice %29 {offsets = [0, 0], sizes = [8, 8], strides = [1, 1]} : vector<8x96xf32> to vector<8x8xf32>
    %32 = vector.extract_strided_slice %29 {offsets = [0, 32], sizes = [8, 8], strides = [1, 1]} : vector<8x96xf32> to vector<8x8xf32>
    %33 = vector.extract_strided_slice %29 {offsets = [0, 64], sizes = [8, 8], strides = [1, 1]} : vector<8x96xf32> to vector<8x8xf32>
    %cst_21 = arith.constant dense<0.000000e+00> : vector<8x8xf32>
    %34 = tpu.matmul %31, %32, %cst_21 {dimension_numbers = #tpu.dot_dimension_numbers<[1], [1], [0], [0], [0, 0, 1, 0], [], []>} : vector<8x8xf32>, vector<8x8xf32>, vector<8x8xf32> -> vector<8x8xf32>
    %cst_22 = arith.constant 0.353553385 : f32
    %35 = vector.broadcast %cst_22 : f32 to vector<8x8xf32>
    %36 = arith.mulf %34, %35 : vector<8x8xf32>
    %37 = arith.addf %36, %19 : vector<8x8xf32>
    %cst_23 = arith.constant dense<0xFF800000> : vector<8xf32>
    %38 = vector.multi_reduction <maximumf>, %37, %cst_23 [1] : vector<8x8xf32> to vector<8xf32>
    %39 = vector.shape_cast %38 : vector<8xf32> to vector<8x1xf32>
    %40 = vector.broadcast %39 : vector<8x1xf32> to vector<8x8xf32>
    %41 = arith.subf %37, %40 : vector<8x8xf32>
    %42 = math.exp %41 : vector<8x8xf32>
    %cst_24 = arith.constant dense<0.000000e+00> : vector<8xf32>
    %43 = vector.multi_reduction <add>, %42, %cst_24 [1] : vector<8x8xf32> to vector<8xf32>
    %44 = vector.shape_cast %43 : vector<8xf32> to vector<8x1xf32>
    %45 = tpu.reciprocal %44 {approx = true} : vector<8x1xf32> -> vector<8x1xf32>
    %46 = vector.broadcast %45 : vector<8x1xf32> to vector<8x8xf32>
    %47 = arith.mulf %42, %46 : vector<8x8xf32>
    %cst_25 = arith.constant dense<0.000000e+00> : vector<8x8xf32>
    %48 = tpu.matmul %47, %33, %cst_25 {dimension_numbers = #tpu.dot_dimension_numbers<[1], [0], [0], [1], [0, 0, 1, 1], [], []>} : vector<8x8xf32>, vector<8x8xf32>, vector<8x8xf32> -> vector<8x8xf32>
    %49 = arith.truncf %48 : vector<8x8xf32> to vector<8x8xbf16>
    %50 = vector.extract_strided_slice %23 {offsets = [0, 0], sizes = [8, 32], strides = [1, 1]} : vector<32x32xbf16> to vector<8x32xbf16>
    %cst_26 = arith.constant dense<0.000000e+00> : vector<8x32xf32>
    %51 = tpu.matmul %49, %50, %cst_26 {dimension_numbers = #tpu.dot_dimension_numbers<[1], [0], [0], [1], [0, 0, 1, 1], [], []>} : vector<8x8xbf16>, vector<8x32xbf16>, vector<8x32xf32> -> vector<8x32xf32>
    %52 = arith.addf %30, %51 : vector<8x32xf32>
    %53 = vector.extract_strided_slice %29 {offsets = [0, 8], sizes = [8, 8], strides = [1, 1]} : vector<8x96xf32> to vector<8x8xf32>
    %54 = vector.extract_strided_slice %29 {offsets = [0, 40], sizes = [8, 8], strides = [1, 1]} : vector<8x96xf32> to vector<8x8xf32>
    %55 = vector.extract_strided_slice %29 {offsets = [0, 72], sizes = [8, 8], strides = [1, 1]} : vector<8x96xf32> to vector<8x8xf32>
    %cst_27 = arith.constant dense<0.000000e+00> : vector<8x8xf32>
    %56 = tpu.matmul %53, %54, %cst_27 {dimension_numbers = #tpu.dot_dimension_numbers<[1], [1], [0], [0], [0, 0, 1, 0], [], []>} : vector<8x8xf32>, vector<8x8xf32>, vector<8x8xf32> -> vector<8x8xf32>
    %cst_28 = arith.constant 0.353553385 : f32
    %57 = vector.broadcast %cst_28 : f32 to vector<8x8xf32>
    %58 = arith.mulf %56, %57 : vector<8x8xf32>
    %59 = arith.addf %58, %19 : vector<8x8xf32>
    %cst_29 = arith.constant dense<0xFF800000> : vector<8xf32>
    %60 = vector.multi_reduction <maximumf>, %59, %cst_29 [1] : vector<8x8xf32> to vector<8xf32>
    %61 = vector.shape_cast %60 : vector<8xf32> to vector<8x1xf32>
    %62 = vector.broadcast %61 : vector<8x1xf32> to vector<8x8xf32>
    %63 = arith.subf %59, %62 : vector<8x8xf32>
    %64 = math.exp %63 : vector<8x8xf32>
    %cst_30 = arith.constant dense<0.000000e+00> : vector<8xf32>
    %65 = vector.multi_reduction <add>, %64, %cst_30 [1] : vector<8x8xf32> to vector<8xf32>
    %66 = vector.shape_cast %65 : vector<8xf32> to vector<8x1xf32>
    %67 = tpu.reciprocal %66 {approx = true} : vector<8x1xf32> -> vector<8x1xf32>
    %68 = vector.broadcast %67 : vector<8x1xf32> to vector<8x8xf32>
    %69 = arith.mulf %64, %68 : vector<8x8xf32>
    %cst_31 = arith.constant dense<0.000000e+00> : vector<8x8xf32>
    %70 = tpu.matmul %69, %55, %cst_31 {dimension_numbers = #tpu.dot_dimension_numbers<[1], [0], [0], [1], [0, 0, 1, 1], [], []>} : vector<8x8xf32>, vector<8x8xf32>, vector<8x8xf32> -> vector<8x8xf32>
    %71 = arith.truncf %70 : vector<8x8xf32> to vector<8x8xbf16>
    %72 = vector.extract_strided_slice %23 {offsets = [8, 0], sizes = [8, 32], strides = [1, 1]} : vector<32x32xbf16> to vector<8x32xbf16>
    %cst_32 = arith.constant dense<0.000000e+00> : vector<8x32xf32>
    %73 = tpu.matmul %71, %72, %cst_32 {dimension_numbers = #tpu.dot_dimension_numbers<[1], [0], [0], [1], [0, 0, 1, 1], [], []>} : vector<8x8xbf16>, vector<8x32xbf16>, vector<8x32xf32> -> vector<8x32xf32>
    %74 = arith.addf %52, %73 : vector<8x32xf32>
    %75 = vector.extract_strided_slice %29 {offsets = [0, 16], sizes = [8, 8], strides = [1, 1]} : vector<8x96xf32> to vector<8x8xf32>
    %76 = vector.extract_strided_slice %29 {offsets = [0, 48], sizes = [8, 8], strides = [1, 1]} : vector<8x96xf32> to vector<8x8xf32>
    %77 = vector.extract_strided_slice %29 {offsets = [0, 80], sizes = [8, 8], strides = [1, 1]} : vector<8x96xf32> to vector<8x8xf32>
    %cst_33 = arith.constant dense<0.000000e+00> : vector<8x8xf32>
    %78 = tpu.matmul %75, %76, %cst_33 {dimension_numbers = #tpu.dot_dimension_numbers<[1], [1], [0], [0], [0, 0, 1, 0], [], []>} : vector<8x8xf32>, vector<8x8xf32>, vector<8x8xf32> -> vector<8x8xf32>
    %cst_34 = arith.constant 0.353553385 : f32
    %79 = vector.broadcast %cst_34 : f32 to vector<8x8xf32>
    %80 = arith.mulf %78, %79 : vector<8x8xf32>
    %81 = arith.addf %80, %19 : vector<8x8xf32>
    %cst_35 = arith.constant dense<0xFF800000> : vector<8xf32>
    %82 = vector.multi_reduction <maximumf>, %81, %cst_35 [1] : vector<8x8xf32> to vector<8xf32>
    %83 = vector.shape_cast %82 : vector<8xf32> to vector<8x1xf32>
    %84 = vector.broadcast %83 : vector<8x1xf32> to vector<8x8xf32>
    %85 = arith.subf %81, %84 : vector<8x8xf32>
    %86 = math.exp %85 : vector<8x8xf32>
    %cst_36 = arith.constant dense<0.000000e+00> : vector<8xf32>
    %87 = vector.multi_reduction <add>, %86, %cst_36 [1] : vector<8x8xf32> to vector<8xf32>
    %88 = vector.shape_cast %87 : vector<8xf32> to vector<8x1xf32>
    %89 = tpu.reciprocal %88 {approx = true} : vector<8x1xf32> -> vector<8x1xf32>
    %90 = vector.broadcast %89 : vector<8x1xf32> to vector<8x8xf32>
    %91 = arith.mulf %86, %90 : vector<8x8xf32>
    %cst_37 = arith.constant dense<0.000000e+00> : vector<8x8xf32>
    %92 = tpu.matmul %91, %77, %cst_37 {dimension_numbers = #tpu.dot_dimension_numbers<[1], [0], [0], [1], [0, 0, 1, 1], [], []>} : vector<8x8xf32>, vector<8x8xf32>, vector<8x8xf32> -> vector<8x8xf32>
    %93 = arith.truncf %92 : vector<8x8xf32> to vector<8x8xbf16>
    %94 = vector.extract_strided_slice %23 {offsets = [16, 0], sizes = [8, 32], strides = [1, 1]} : vector<32x32xbf16> to vector<8x32xbf16>
    %cst_38 = arith.constant dense<0.000000e+00> : vector<8x32xf32>
    %95 = tpu.matmul %93, %94, %cst_38 {dimension_numbers = #tpu.dot_dimension_numbers<[1], [0], [0], [1], [0, 0, 1, 1], [], []>} : vector<8x8xbf16>, vector<8x32xbf16>, vector<8x32xf32> -> vector<8x32xf32>
    %96 = arith.addf %74, %95 : vector<8x32xf32>
    %97 = vector.extract_strided_slice %29 {offsets = [0, 24], sizes = [8, 8], strides = [1, 1]} : vector<8x96xf32> to vector<8x8xf32>
    %98 = vector.extract_strided_slice %29 {offsets = [0, 56], sizes = [8, 8], strides = [1, 1]} : vector<8x96xf32> to vector<8x8xf32>
    %99 = vector.extract_strided_slice %29 {offsets = [0, 88], sizes = [8, 8], strides = [1, 1]} : vector<8x96xf32> to vector<8x8xf32>
    %cst_39 = arith.constant dense<0.000000e+00> : vector<8x8xf32>
    %100 = tpu.matmul %97, %98, %cst_39 {dimension_numbers = #tpu.dot_dimension_numbers<[1], [1], [0], [0], [0, 0, 1, 0], [], []>} : vector<8x8xf32>, vector<8x8xf32>, vector<8x8xf32> -> vector<8x8xf32>
    %cst_40 = arith.constant 0.353553385 : f32
    %101 = vector.broadcast %cst_40 : f32 to vector<8x8xf32>
    %102 = arith.mulf %100, %101 : vector<8x8xf32>
    %103 = arith.addf %102, %19 : vector<8x8xf32>
    %cst_41 = arith.constant dense<0xFF800000> : vector<8xf32>
    %104 = vector.multi_reduction <maximumf>, %103, %cst_41 [1] : vector<8x8xf32> to vector<8xf32>
    %105 = vector.shape_cast %104 : vector<8xf32> to vector<8x1xf32>
    %106 = vector.broadcast %105 : vector<8x1xf32> to vector<8x8xf32>
    %107 = arith.subf %103, %106 : vector<8x8xf32>
    %108 = math.exp %107 : vector<8x8xf32>
    %cst_42 = arith.constant dense<0.000000e+00> : vector<8xf32>
    %109 = vector.multi_reduction <add>, %108, %cst_42 [1] : vector<8x8xf32> to vector<8xf32>
    %110 = vector.shape_cast %109 : vector<8xf32> to vector<8x1xf32>
    %111 = tpu.reciprocal %110 {approx = true} : vector<8x1xf32> -> vector<8x1xf32>
    %112 = vector.broadcast %111 : vector<8x1xf32> to vector<8x8xf32>
    %113 = arith.mulf %108, %112 : vector<8x8xf32>
    %cst_43 = arith.constant dense<0.000000e+00> : vector<8x8xf32>
    %114 = tpu.matmul %113, %99, %cst_43 {dimension_numbers = #tpu.dot_dimension_numbers<[1], [0], [0], [1], [0, 0, 1, 1], [], []>} : vector<8x8xf32>, vector<8x8xf32>, vector<8x8xf32> -> vector<8x8xf32>
    %115 = arith.truncf %114 : vector<8x8xf32> to vector<8x8xbf16>
    %116 = vector.extract_strided_slice %23 {offsets = [24, 0], sizes = [8, 32], strides = [1, 1]} : vector<32x32xbf16> to vector<8x32xbf16>
    %cst_44 = arith.constant dense<0.000000e+00> : vector<8x32xf32>
    %117 = tpu.matmul %115, %116, %cst_44 {dimension_numbers = #tpu.dot_dimension_numbers<[1], [0], [0], [1], [0, 0, 1, 1], [], []>} : vector<8x8xbf16>, vector<8x32xbf16>, vector<8x32xf32> -> vector<8x32xf32>
    %118 = arith.addf %96, %117 : vector<8x32xf32>
    %c0_45 = arith.constant 0 : index
    %c0_46 = arith.constant 0 : index
    %c0_47 = arith.constant 0 : index
    %119 = vector.load %arg7[%c0_45, %c0_46, %c0_47] : memref<2x1x32xf32, #tpu.memory_space<vmem>>, vector<1x1x32xf32>
    %120 = vector.shape_cast %119 : vector<1x1x32xf32> to vector<1x32xf32>
    %121 = vector.broadcast %120 : vector<1x32xf32> to vector<8x32xf32>
    %122 = arith.addf %118, %121 : vector<8x32xf32>
    %123 = arith.addf %9, %122 : vector<8x32xf32>
    %c0_48 = arith.constant 0 : index
    %c0_49 = arith.constant 0 : index
    %c0_50 = arith.constant 0 : index
    %124 = vector.load %arg8[%c0_48, %c0_49, %c0_50] : memref<2x1x32xf32, #tpu.memory_space<vmem>>, vector<1x1x32xf32>
    %125 = vector.shape_cast %124 : vector<1x1x32xf32> to vector<1x32xf32>
    %c0_51 = arith.constant 0 : index
    %c0_52 = arith.constant 0 : index
    %c0_53 = arith.constant 0 : index
    %126 = vector.load %arg9[%c0_51, %c0_52, %c0_53] : memref<2x1x32xf32, #tpu.memory_space<vmem>>, vector<1x1x32xf32>
    %127 = vector.shape_cast %126 : vector<1x1x32xf32> to vector<1x32xf32>
    %cst_54 = arith.constant dense<0.000000e+00> : vector<8xf32>
    %128 = vector.multi_reduction <add>, %123, %cst_54 [1] : vector<8x32xf32> to vector<8xf32>
    %129 = vector.shape_cast %128 : vector<8xf32> to vector<8x1xf32>
    %cst_55 = arith.constant 3.200000e+01 : f32
    %130 = vector.broadcast %cst_55 : f32 to vector<8x1xf32>
    %131 = arith.divf %129, %130 : vector<8x1xf32>
    %132 = vector.broadcast %131 : vector<8x1xf32> to vector<8x32xf32>
    %133 = arith.subf %123, %132 : vector<8x32xf32>
    %134 = arith.mulf %133, %133 : vector<8x32xf32>
    %cst_56 = arith.constant dense<0.000000e+00> : vector<8xf32>
    %135 = vector.multi_reduction <add>, %134, %cst_56 [1] : vector<8x32xf32> to vector<8xf32>
    %136 = vector.shape_cast %135 : vector<8xf32> to vector<8x1xf32>
    %cst_57 = arith.constant 3.200000e+01 : f32
    %137 = vector.broadcast %cst_57 : f32 to vector<8x1xf32>
    %138 = arith.divf %136, %137 : vector<8x1xf32>
    %139 = vector.broadcast %131 : vector<8x1xf32> to vector<8x32xf32>
    %140 = arith.subf %123, %139 : vector<8x32xf32>
    %cst_58 = arith.constant 9.99999974E-6 : f32
    %141 = vector.broadcast %cst_58 : f32 to vector<8x1xf32>
    %142 = arith.addf %138, %141 : vector<8x1xf32>
    %143 = math.rsqrt %142 : vector<8x1xf32>
    %144 = vector.broadcast %143 : vector<8x1xf32> to vector<8x32xf32>
    %145 = arith.mulf %140, %144 : vector<8x32xf32>
    %146 = vector.broadcast %125 : vector<1x32xf32> to vector<8x32xf32>
    %147 = arith.mulf %145, %146 : vector<8x32xf32>
    %148 = vector.broadcast %127 : vector<1x32xf32> to vector<8x32xf32>
    %149 = arith.addf %147, %148 : vector<8x32xf32>
    %150 = arith.truncf %149 : vector<8x32xf32> to vector<8x32xbf16>
    %c0_59 = arith.constant 0 : index
    %c0_60 = arith.constant 0 : index
    %c0_61 = arith.constant 0 : index
    %151 = vector.load %arg10[%c0_59, %c0_60, %c0_61] : memref<2x32x128xbf16, #tpu.memory_space<vmem>>, vector<1x32x128xbf16>
    %152 = vector.shape_cast %151 : vector<1x32x128xbf16> to vector<32x128xbf16>
    %cst_62 = arith.constant dense<0.000000e+00> : vector<8x128xf32>
    %153 = tpu.matmul %150, %152, %cst_62 {dimension_numbers = #tpu.dot_dimension_numbers<[1], [0], [0], [1], [0, 0, 1, 1], [], []>} : vector<8x32xbf16>, vector<32x128xbf16>, vector<8x128xf32> -> vector<8x128xf32>
    %c0_63 = arith.constant 0 : index
    %c0_64 = arith.constant 0 : index
    %c0_65 = arith.constant 0 : index
    %154 = vector.load %arg11[%c0_63, %c0_64, %c0_65] : memref<2x1x128xf32, #tpu.memory_space<vmem>>, vector<1x1x128xf32>
    %155 = vector.shape_cast %154 : vector<1x1x128xf32> to vector<1x128xf32>
    %156 = vector.broadcast %155 : vector<1x128xf32> to vector<8x128xf32>
    %157 = arith.addf %153, %156 : vector<8x128xf32>
    %cst_66 = arith.constant 0.000000e+00 : f32
    %158 = vector.broadcast %cst_66 : f32 to vector<8x128xf32>
    %159 = arith.maximumf %157, %158 : vector<8x128xf32>
    %160 = arith.truncf %159 : vector<8x128xf32> to vector<8x128xbf16>
    %c0_67 = arith.constant 0 : index
    %c0_68 = arith.constant 0 : index
    %c0_69 = arith.constant 0 : index
    %161 = vector.load %arg12[%c0_67, %c0_68, %c0_69] : memref<2x128x32xbf16, #tpu.memory_space<vmem>>, vector<1x128x32xbf16>
    %162 = vector.shape_cast %161 : vector<1x128x32xbf16> to vector<128x32xbf16>
    %cst_70 = arith.constant dense<0.000000e+00> : vector<8x32xf32>
    %163 = tpu.matmul %160, %162, %cst_70 {dimension_numbers = #tpu.dot_dimension_numbers<[1], [0], [0], [1], [0, 0, 1, 1], [], []>} : vector<8x128xbf16>, vector<128x32xbf16>, vector<8x32xf32> -> vector<8x32xf32>
    %c0_71 = arith.constant 0 : index
    %c0_72 = arith.constant 0 : index
    %c0_73 = arith.constant 0 : index
    %164 = vector.load %arg13[%c0_71, %c0_72, %c0_73] : memref<2x1x32xf32, #tpu.memory_space<vmem>>, vector<1x1x32xf32>
    %165 = vector.shape_cast %164 : vector<1x1x32xf32> to vector<1x32xf32>
    %166 = vector.broadcast %165 : vector<1x32xf32> to vector<8x32xf32>
    %167 = arith.addf %163, %166 : vector<8x32xf32>
    %168 = arith.addf %149, %167 : vector<8x32xf32>
    %c0_74 = arith.constant 0 : index
    %c0_75 = arith.constant 0 : index
    %c0_76 = arith.constant 0 : index
    %169 = vector.load %arg14[%c0_74, %c0_75, %c0_76] : memref<2x1x32xf32, #tpu.memory_space<vmem>>, vector<1x1x32xf32>
    %170 = vector.shape_cast %169 : vector<1x1x32xf32> to vector<1x32xf32>
    %c0_77 = arith.constant 0 : index
    %c0_78 = arith.constant 0 : index
    %c0_79 = arith.constant 0 : index
    %171 = vector.load %arg15[%c0_77, %c0_78, %c0_79] : memref<2x1x32xf32, #tpu.memory_space<vmem>>, vector<1x1x32xf32>
    %172 = vector.shape_cast %171 : vector<1x1x32xf32> to vector<1x32xf32>
    %cst_80 = arith.constant dense<0.000000e+00> : vector<8xf32>
    %173 = vector.multi_reduction <add>, %168, %cst_80 [1] : vector<8x32xf32> to vector<8xf32>
    %174 = vector.shape_cast %173 : vector<8xf32> to vector<8x1xf32>
    %cst_81 = arith.constant 3.200000e+01 : f32
    %175 = vector.broadcast %cst_81 : f32 to vector<8x1xf32>
    %176 = arith.divf %174, %175 : vector<8x1xf32>
    %177 = vector.broadcast %176 : vector<8x1xf32> to vector<8x32xf32>
    %178 = arith.subf %168, %177 : vector<8x32xf32>
    %179 = arith.mulf %178, %178 : vector<8x32xf32>
    %cst_82 = arith.constant dense<0.000000e+00> : vector<8xf32>
    %180 = vector.multi_reduction <add>, %179, %cst_82 [1] : vector<8x32xf32> to vector<8xf32>
    %181 = vector.shape_cast %180 : vector<8xf32> to vector<8x1xf32>
    %cst_83 = arith.constant 3.200000e+01 : f32
    %182 = vector.broadcast %cst_83 : f32 to vector<8x1xf32>
    %183 = arith.divf %181, %182 : vector<8x1xf32>
    %184 = vector.broadcast %176 : vector<8x1xf32> to vector<8x32xf32>
    %185 = arith.subf %168, %184 : vector<8x32xf32>
    %cst_84 = arith.constant 9.99999974E-6 : f32
    %186 = vector.broadcast %cst_84 : f32 to vector<8x1xf32>
    %187 = arith.addf %183, %186 : vector<8x1xf32>
    %188 = math.rsqrt %187 : vector<8x1xf32>
    %189 = vector.broadcast %188 : vector<8x1xf32> to vector<8x32xf32>
    %190 = arith.mulf %185, %189 : vector<8x32xf32>
    %191 = vector.broadcast %170 : vector<1x32xf32> to vector<8x32xf32>
    %192 = arith.mulf %190, %191 : vector<8x32xf32>
    %193 = vector.broadcast %172 : vector<1x32xf32> to vector<8x32xf32>
    %194 = arith.addf %192, %193 : vector<8x32xf32>
    %c1 = arith.constant 1 : index
    %c0_85 = arith.constant 0 : index
    %c0_86 = arith.constant 0 : index
    %195 = vector.load %arg4[%c1, %c0_85, %c0_86] : memref<2x32x96xbf16, #tpu.memory_space<vmem>>, vector<1x32x96xbf16>
    %196 = vector.shape_cast %195 : vector<1x32x96xbf16> to vector<32x96xbf16>
    %c1_87 = arith.constant 1 : index
    %c0_88 = arith.constant 0 : index
    %c0_89 = arith.constant 0 : index
    %197 = vector.load %arg6[%c1_87, %c0_88, %c0_89] : memref<2x32x32xbf16, #tpu.memory_space<vmem>>, vector<1x32x32xbf16>
    %198 = vector.shape_cast %197 : vector<1x32x32xbf16> to vector<32x32xbf16>
    %199 = arith.truncf %194 : vector<8x32xf32> to vector<8x32xbf16>
    %cst_90 = arith.constant dense<0.000000e+00> : vector<8x96xf32>
    %200 = tpu.matmul %199, %196, %cst_90 {dimension_numbers = #tpu.dot_dimension_numbers<[1], [0], [0], [1], [0, 0, 1, 1], [], []>} : vector<8x32xbf16>, vector<32x96xbf16>, vector<8x96xf32> -> vector<8x96xf32>
    %c1_91 = arith.constant 1 : index
    %c0_92 = arith.constant 0 : index
    %c0_93 = arith.constant 0 : index
    %201 = vector.load %arg5[%c1_91, %c0_92, %c0_93] : memref<2x1x96xf32, #tpu.memory_space<vmem>>, vector<1x1x96xf32>
    %202 = vector.shape_cast %201 : vector<1x1x96xf32> to vector<1x96xf32>
    %203 = vector.broadcast %202 : vector<1x96xf32> to vector<8x96xf32>
    %204 = arith.addf %200, %203 : vector<8x96xf32>
    %cst_94 = arith.constant 0.000000e+00 : f32
    %205 = vector.broadcast %cst_94 : f32 to vector<8x32xf32>
    %206 = vector.extract_strided_slice %204 {offsets = [0, 0], sizes = [8, 8], strides = [1, 1]} : vector<8x96xf32> to vector<8x8xf32>
    %207 = vector.extract_strided_slice %204 {offsets = [0, 32], sizes = [8, 8], strides = [1, 1]} : vector<8x96xf32> to vector<8x8xf32>
    %208 = vector.extract_strided_slice %204 {offsets = [0, 64], sizes = [8, 8], strides = [1, 1]} : vector<8x96xf32> to vector<8x8xf32>
    %cst_95 = arith.constant dense<0.000000e+00> : vector<8x8xf32>
    %209 = tpu.matmul %206, %207, %cst_95 {dimension_numbers = #tpu.dot_dimension_numbers<[1], [1], [0], [0], [0, 0, 1, 0], [], []>} : vector<8x8xf32>, vector<8x8xf32>, vector<8x8xf32> -> vector<8x8xf32>
    %cst_96 = arith.constant 0.353553385 : f32
    %210 = vector.broadcast %cst_96 : f32 to vector<8x8xf32>
    %211 = arith.mulf %209, %210 : vector<8x8xf32>
    %212 = arith.addf %211, %19 : vector<8x8xf32>
    %cst_97 = arith.constant dense<0xFF800000> : vector<8xf32>
    %213 = vector.multi_reduction <maximumf>, %212, %cst_97 [1] : vector<8x8xf32> to vector<8xf32>
    %214 = vector.shape_cast %213 : vector<8xf32> to vector<8x1xf32>
    %215 = vector.broadcast %214 : vector<8x1xf32> to vector<8x8xf32>
    %216 = arith.subf %212, %215 : vector<8x8xf32>
    %217 = math.exp %216 : vector<8x8xf32>
    %cst_98 = arith.constant dense<0.000000e+00> : vector<8xf32>
    %218 = vector.multi_reduction <add>, %217, %cst_98 [1] : vector<8x8xf32> to vector<8xf32>
    %219 = vector.shape_cast %218 : vector<8xf32> to vector<8x1xf32>
    %220 = tpu.reciprocal %219 {approx = true} : vector<8x1xf32> -> vector<8x1xf32>
    %221 = vector.broadcast %220 : vector<8x1xf32> to vector<8x8xf32>
    %222 = arith.mulf %217, %221 : vector<8x8xf32>
    %cst_99 = arith.constant dense<0.000000e+00> : vector<8x8xf32>
    %223 = tpu.matmul %222, %208, %cst_99 {dimension_numbers = #tpu.dot_dimension_numbers<[1], [0], [0], [1], [0, 0, 1, 1], [], []>} : vector<8x8xf32>, vector<8x8xf32>, vector<8x8xf32> -> vector<8x8xf32>
    %224 = arith.truncf %223 : vector<8x8xf32> to vector<8x8xbf16>
    %225 = vector.extract_strided_slice %198 {offsets = [0, 0], sizes = [8, 32], strides = [1, 1]} : vector<32x32xbf16> to vector<8x32xbf16>
    %cst_100 = arith.constant dense<0.000000e+00> : vector<8x32xf32>
    %226 = tpu.matmul %224, %225, %cst_100 {dimension_numbers = #tpu.dot_dimension_numbers<[1], [0], [0], [1], [0, 0, 1, 1], [], []>} : vector<8x8xbf16>, vector<8x32xbf16>, vector<8x32xf32> -> vector<8x32xf32>
    %227 = arith.addf %205, %226 : vector<8x32xf32>
    %228 = vector.extract_strided_slice %204 {offsets = [0, 8], sizes = [8, 8], strides = [1, 1]} : vector<8x96xf32> to vector<8x8xf32>
    %229 = vector.extract_strided_slice %204 {offsets = [0, 40], sizes = [8, 8], strides = [1, 1]} : vector<8x96xf32> to vector<8x8xf32>
    %230 = vector.extract_strided_slice %204 {offsets = [0, 72], sizes = [8, 8], strides = [1, 1]} : vector<8x96xf32> to vector<8x8xf32>
    %cst_101 = arith.constant dense<0.000000e+00> : vector<8x8xf32>
    %231 = tpu.matmul %228, %229, %cst_101 {dimension_numbers = #tpu.dot_dimension_numbers<[1], [1], [0], [0], [0, 0, 1, 0], [], []>} : vector<8x8xf32>, vector<8x8xf32>, vector<8x8xf32> -> vector<8x8xf32>
    %cst_102 = arith.constant 0.353553385 : f32
    %232 = vector.broadcast %cst_102 : f32 to vector<8x8xf32>
    %233 = arith.mulf %231, %232 : vector<8x8xf32>
    %234 = arith.addf %233, %19 : vector<8x8xf32>
    %cst_103 = arith.constant dense<0xFF800000> : vector<8xf32>
    %235 = vector.multi_reduction <maximumf>, %234, %cst_103 [1] : vector<8x8xf32> to vector<8xf32>
    %236 = vector.shape_cast %235 : vector<8xf32> to vector<8x1xf32>
    %237 = vector.broadcast %236 : vector<8x1xf32> to vector<8x8xf32>
    %238 = arith.subf %234, %237 : vector<8x8xf32>
    %239 = math.exp %238 : vector<8x8xf32>
    %cst_104 = arith.constant dense<0.000000e+00> : vector<8xf32>
    %240 = vector.multi_reduction <add>, %239, %cst_104 [1] : vector<8x8xf32> to vector<8xf32>
    %241 = vector.shape_cast %240 : vector<8xf32> to vector<8x1xf32>
    %242 = tpu.reciprocal %241 {approx = true} : vector<8x1xf32> -> vector<8x1xf32>
    %243 = vector.broadcast %242 : vector<8x1xf32> to vector<8x8xf32>
    %244 = arith.mulf %239, %243 : vector<8x8xf32>
    %cst_105 = arith.constant dense<0.000000e+00> : vector<8x8xf32>
    %245 = tpu.matmul %244, %230, %cst_105 {dimension_numbers = #tpu.dot_dimension_numbers<[1], [0], [0], [1], [0, 0, 1, 1], [], []>} : vector<8x8xf32>, vector<8x8xf32>, vector<8x8xf32> -> vector<8x8xf32>
    %246 = arith.truncf %245 : vector<8x8xf32> to vector<8x8xbf16>
    %247 = vector.extract_strided_slice %198 {offsets = [8, 0], sizes = [8, 32], strides = [1, 1]} : vector<32x32xbf16> to vector<8x32xbf16>
    %cst_106 = arith.constant dense<0.000000e+00> : vector<8x32xf32>
    %248 = tpu.matmul %246, %247, %cst_106 {dimension_numbers = #tpu.dot_dimension_numbers<[1], [0], [0], [1], [0, 0, 1, 1], [], []>} : vector<8x8xbf16>, vector<8x32xbf16>, vector<8x32xf32> -> vector<8x32xf32>
    %249 = arith.addf %227, %248 : vector<8x32xf32>
    %250 = vector.extract_strided_slice %204 {offsets = [0, 16], sizes = [8, 8], strides = [1, 1]} : vector<8x96xf32> to vector<8x8xf32>
    %251 = vector.extract_strided_slice %204 {offsets = [0, 48], sizes = [8, 8], strides = [1, 1]} : vector<8x96xf32> to vector<8x8xf32>
    %252 = vector.extract_strided_slice %204 {offsets = [0, 80], sizes = [8, 8], strides = [1, 1]} : vector<8x96xf32> to vector<8x8xf32>
    %cst_107 = arith.constant dense<0.000000e+00> : vector<8x8xf32>
    %253 = tpu.matmul %250, %251, %cst_107 {dimension_numbers = #tpu.dot_dimension_numbers<[1], [1], [0], [0], [0, 0, 1, 0], [], []>} : vector<8x8xf32>, vector<8x8xf32>, vector<8x8xf32> -> vector<8x8xf32>
    %cst_108 = arith.constant 0.353553385 : f32
    %254 = vector.broadcast %cst_108 : f32 to vector<8x8xf32>
    %255 = arith.mulf %253, %254 : vector<8x8xf32>
    %256 = arith.addf %255, %19 : vector<8x8xf32>
    %cst_109 = arith.constant dense<0xFF800000> : vector<8xf32>
    %257 = vector.multi_reduction <maximumf>, %256, %cst_109 [1] : vector<8x8xf32> to vector<8xf32>
    %258 = vector.shape_cast %257 : vector<8xf32> to vector<8x1xf32>
    %259 = vector.broadcast %258 : vector<8x1xf32> to vector<8x8xf32>
    %260 = arith.subf %256, %259 : vector<8x8xf32>
    %261 = math.exp %260 : vector<8x8xf32>
    %cst_110 = arith.constant dense<0.000000e+00> : vector<8xf32>
    %262 = vector.multi_reduction <add>, %261, %cst_110 [1] : vector<8x8xf32> to vector<8xf32>
    %263 = vector.shape_cast %262 : vector<8xf32> to vector<8x1xf32>
    %264 = tpu.reciprocal %263 {approx = true} : vector<8x1xf32> -> vector<8x1xf32>
    %265 = vector.broadcast %264 : vector<8x1xf32> to vector<8x8xf32>
    %266 = arith.mulf %261, %265 : vector<8x8xf32>
    %cst_111 = arith.constant dense<0.000000e+00> : vector<8x8xf32>
    %267 = tpu.matmul %266, %252, %cst_111 {dimension_numbers = #tpu.dot_dimension_numbers<[1], [0], [0], [1], [0, 0, 1, 1], [], []>} : vector<8x8xf32>, vector<8x8xf32>, vector<8x8xf32> -> vector<8x8xf32>
    %268 = arith.truncf %267 : vector<8x8xf32> to vector<8x8xbf16>
    %269 = vector.extract_strided_slice %198 {offsets = [16, 0], sizes = [8, 32], strides = [1, 1]} : vector<32x32xbf16> to vector<8x32xbf16>
    %cst_112 = arith.constant dense<0.000000e+00> : vector<8x32xf32>
    %270 = tpu.matmul %268, %269, %cst_112 {dimension_numbers = #tpu.dot_dimension_numbers<[1], [0], [0], [1], [0, 0, 1, 1], [], []>} : vector<8x8xbf16>, vector<8x32xbf16>, vector<8x32xf32> -> vector<8x32xf32>
    %271 = arith.addf %249, %270 : vector<8x32xf32>
    %272 = vector.extract_strided_slice %204 {offsets = [0, 24], sizes = [8, 8], strides = [1, 1]} : vector<8x96xf32> to vector<8x8xf32>
    %273 = vector.extract_strided_slice %204 {offsets = [0, 56], sizes = [8, 8], strides = [1, 1]} : vector<8x96xf32> to vector<8x8xf32>
    %274 = vector.extract_strided_slice %204 {offsets = [0, 88], sizes = [8, 8], strides = [1, 1]} : vector<8x96xf32> to vector<8x8xf32>
    %cst_113 = arith.constant dense<0.000000e+00> : vector<8x8xf32>
    %275 = tpu.matmul %272, %273, %cst_113 {dimension_numbers = #tpu.dot_dimension_numbers<[1], [1], [0], [0], [0, 0, 1, 0], [], []>} : vector<8x8xf32>, vector<8x8xf32>, vector<8x8xf32> -> vector<8x8xf32>
    %cst_114 = arith.constant 0.353553385 : f32
    %276 = vector.broadcast %cst_114 : f32 to vector<8x8xf32>
    %277 = arith.mulf %275, %276 : vector<8x8xf32>
    %278 = arith.addf %277, %19 : vector<8x8xf32>
    %cst_115 = arith.constant dense<0xFF800000> : vector<8xf32>
    %279 = vector.multi_reduction <maximumf>, %278, %cst_115 [1] : vector<8x8xf32> to vector<8xf32>
    %280 = vector.shape_cast %279 : vector<8xf32> to vector<8x1xf32>
    %281 = vector.broadcast %280 : vector<8x1xf32> to vector<8x8xf32>
    %282 = arith.subf %278, %281 : vector<8x8xf32>
    %283 = math.exp %282 : vector<8x8xf32>
    %cst_116 = arith.constant dense<0.000000e+00> : vector<8xf32>
    %284 = vector.multi_reduction <add>, %283, %cst_116 [1] : vector<8x8xf32> to vector<8xf32>
    %285 = vector.shape_cast %284 : vector<8xf32> to vector<8x1xf32>
    %286 = tpu.reciprocal %285 {approx = true} : vector<8x1xf32> -> vector<8x1xf32>
    %287 = vector.broadcast %286 : vector<8x1xf32> to vector<8x8xf32>
    %288 = arith.mulf %283, %287 : vector<8x8xf32>
    %cst_117 = arith.constant dense<0.000000e+00> : vector<8x8xf32>
    %289 = tpu.matmul %288, %274, %cst_117 {dimension_numbers = #tpu.dot_dimension_numbers<[1], [0], [0], [1], [0, 0, 1, 1], [], []>} : vector<8x8xf32>, vector<8x8xf32>, vector<8x8xf32> -> vector<8x8xf32>
    %290 = arith.truncf %289 : vector<8x8xf32> to vector<8x8xbf16>
    %291 = vector.extract_strided_slice %198 {offsets = [24, 0], sizes = [8, 32], strides = [1, 1]} : vector<32x32xbf16> to vector<8x32xbf16>
    %cst_118 = arith.constant dense<0.000000e+00> : vector<8x32xf32>
    %292 = tpu.matmul %290, %291, %cst_118 {dimension_numbers = #tpu.dot_dimension_numbers<[1], [0], [0], [1], [0, 0, 1, 1], [], []>} : vector<8x8xbf16>, vector<8x32xbf16>, vector<8x32xf32> -> vector<8x32xf32>
    %293 = arith.addf %271, %292 : vector<8x32xf32>
    %c1_119 = arith.constant 1 : index
    %c0_120 = arith.constant 0 : index
    %c0_121 = arith.constant 0 : index
    %294 = vector.load %arg7[%c1_119, %c0_120, %c0_121] : memref<2x1x32xf32, #tpu.memory_space<vmem>>, vector<1x1x32xf32>
    %295 = vector.shape_cast %294 : vector<1x1x32xf32> to vector<1x32xf32>
    %296 = vector.broadcast %295 : vector<1x32xf32> to vector<8x32xf32>
    %297 = arith.addf %293, %296 : vector<8x32xf32>
    %298 = arith.addf %194, %297 : vector<8x32xf32>
    %c1_122 = arith.constant 1 : index
    %c0_123 = arith.constant 0 : index
    %c0_124 = arith.constant 0 : index
    %299 = vector.load %arg8[%c1_122, %c0_123, %c0_124] : memref<2x1x32xf32, #tpu.memory_space<vmem>>, vector<1x1x32xf32>
    %300 = vector.shape_cast %299 : vector<1x1x32xf32> to vector<1x32xf32>
    %c1_125 = arith.constant 1 : index
    %c0_126 = arith.constant 0 : index
    %c0_127 = arith.constant 0 : index
    %301 = vector.load %arg9[%c1_125, %c0_126, %c0_127] : memref<2x1x32xf32, #tpu.memory_space<vmem>>, vector<1x1x32xf32>
    %302 = vector.shape_cast %301 : vector<1x1x32xf32> to vector<1x32xf32>
    %cst_128 = arith.constant dense<0.000000e+00> : vector<8xf32>
    %303 = vector.multi_reduction <add>, %298, %cst_128 [1] : vector<8x32xf32> to vector<8xf32>
    %304 = vector.shape_cast %303 : vector<8xf32> to vector<8x1xf32>
    %cst_129 = arith.constant 3.200000e+01 : f32
    %305 = vector.broadcast %cst_129 : f32 to vector<8x1xf32>
    %306 = arith.divf %304, %305 : vector<8x1xf32>
    %307 = vector.broadcast %306 : vector<8x1xf32> to vector<8x32xf32>
    %308 = arith.subf %298, %307 : vector<8x32xf32>
    %309 = arith.mulf %308, %308 : vector<8x32xf32>
    %cst_130 = arith.constant dense<0.000000e+00> : vector<8xf32>
    %310 = vector.multi_reduction <add>, %309, %cst_130 [1] : vector<8x32xf32> to vector<8xf32>
    %311 = vector.shape_cast %310 : vector<8xf32> to vector<8x1xf32>
    %cst_131 = arith.constant 3.200000e+01 : f32
    %312 = vector.broadcast %cst_131 : f32 to vector<8x1xf32>
    %313 = arith.divf %311, %312 : vector<8x1xf32>
    %314 = vector.broadcast %306 : vector<8x1xf32> to vector<8x32xf32>
    %315 = arith.subf %298, %314 : vector<8x32xf32>
    %cst_132 = arith.constant 9.99999974E-6 : f32
    %316 = vector.broadcast %cst_132 : f32 to vector<8x1xf32>
    %317 = arith.addf %313, %316 : vector<8x1xf32>
    %318 = math.rsqrt %317 : vector<8x1xf32>
    %319 = vector.broadcast %318 : vector<8x1xf32> to vector<8x32xf32>
    %320 = arith.mulf %315, %319 : vector<8x32xf32>
    %321 = vector.broadcast %300 : vector<1x32xf32> to vector<8x32xf32>
    %322 = arith.mulf %320, %321 : vector<8x32xf32>
    %323 = vector.broadcast %302 : vector<1x32xf32> to vector<8x32xf32>
    %324 = arith.addf %322, %323 : vector<8x32xf32>
    %325 = arith.truncf %324 : vector<8x32xf32> to vector<8x32xbf16>
    %c1_133 = arith.constant 1 : index
    %c0_134 = arith.constant 0 : index
    %c0_135 = arith.constant 0 : index
    %326 = vector.load %arg10[%c1_133, %c0_134, %c0_135] : memref<2x32x128xbf16, #tpu.memory_space<vmem>>, vector<1x32x128xbf16>
    %327 = vector.shape_cast %326 : vector<1x32x128xbf16> to vector<32x128xbf16>
    %cst_136 = arith.constant dense<0.000000e+00> : vector<8x128xf32>
    %328 = tpu.matmul %325, %327, %cst_136 {dimension_numbers = #tpu.dot_dimension_numbers<[1], [0], [0], [1], [0, 0, 1, 1], [], []>} : vector<8x32xbf16>, vector<32x128xbf16>, vector<8x128xf32> -> vector<8x128xf32>
    %c1_137 = arith.constant 1 : index
    %c0_138 = arith.constant 0 : index
    %c0_139 = arith.constant 0 : index
    %329 = vector.load %arg11[%c1_137, %c0_138, %c0_139] : memref<2x1x128xf32, #tpu.memory_space<vmem>>, vector<1x1x128xf32>
    %330 = vector.shape_cast %329 : vector<1x1x128xf32> to vector<1x128xf32>
    %331 = vector.broadcast %330 : vector<1x128xf32> to vector<8x128xf32>
    %332 = arith.addf %328, %331 : vector<8x128xf32>
    %cst_140 = arith.constant 0.000000e+00 : f32
    %333 = vector.broadcast %cst_140 : f32 to vector<8x128xf32>
    %334 = arith.maximumf %332, %333 : vector<8x128xf32>
    %335 = arith.truncf %334 : vector<8x128xf32> to vector<8x128xbf16>
    %c1_141 = arith.constant 1 : index
    %c0_142 = arith.constant 0 : index
    %c0_143 = arith.constant 0 : index
    %336 = vector.load %arg12[%c1_141, %c0_142, %c0_143] : memref<2x128x32xbf16, #tpu.memory_space<vmem>>, vector<1x128x32xbf16>
    %337 = vector.shape_cast %336 : vector<1x128x32xbf16> to vector<128x32xbf16>
    %cst_144 = arith.constant dense<0.000000e+00> : vector<8x32xf32>
    %338 = tpu.matmul %335, %337, %cst_144 {dimension_numbers = #tpu.dot_dimension_numbers<[1], [0], [0], [1], [0, 0, 1, 1], [], []>} : vector<8x128xbf16>, vector<128x32xbf16>, vector<8x32xf32> -> vector<8x32xf32>
    %c1_145 = arith.constant 1 : index
    %c0_146 = arith.constant 0 : index
    %c0_147 = arith.constant 0 : index
    %339 = vector.load %arg13[%c1_145, %c0_146, %c0_147] : memref<2x1x32xf32, #tpu.memory_space<vmem>>, vector<1x1x32xf32>
    %340 = vector.shape_cast %339 : vector<1x1x32xf32> to vector<1x32xf32>
    %341 = vector.broadcast %340 : vector<1x32xf32> to vector<8x32xf32>
    %342 = arith.addf %338, %341 : vector<8x32xf32>
    %343 = arith.addf %324, %342 : vector<8x32xf32>
    %c1_148 = arith.constant 1 : index
    %c0_149 = arith.constant 0 : index
    %c0_150 = arith.constant 0 : index
    %344 = vector.load %arg14[%c1_148, %c0_149, %c0_150] : memref<2x1x32xf32, #tpu.memory_space<vmem>>, vector<1x1x32xf32>
    %345 = vector.shape_cast %344 : vector<1x1x32xf32> to vector<1x32xf32>
    %c1_151 = arith.constant 1 : index
    %c0_152 = arith.constant 0 : index
    %c0_153 = arith.constant 0 : index
    %346 = vector.load %arg15[%c1_151, %c0_152, %c0_153] : memref<2x1x32xf32, #tpu.memory_space<vmem>>, vector<1x1x32xf32>
    %347 = vector.shape_cast %346 : vector<1x1x32xf32> to vector<1x32xf32>
    %cst_154 = arith.constant dense<0.000000e+00> : vector<8xf32>
    %348 = vector.multi_reduction <add>, %343, %cst_154 [1] : vector<8x32xf32> to vector<8xf32>
    %349 = vector.shape_cast %348 : vector<8xf32> to vector<8x1xf32>
    %cst_155 = arith.constant 3.200000e+01 : f32
    %350 = vector.broadcast %cst_155 : f32 to vector<8x1xf32>
    %351 = arith.divf %349, %350 : vector<8x1xf32>
    %352 = vector.broadcast %351 : vector<8x1xf32> to vector<8x32xf32>
    %353 = arith.subf %343, %352 : vector<8x32xf32>
    %354 = arith.mulf %353, %353 : vector<8x32xf32>
    %cst_156 = arith.constant dense<0.000000e+00> : vector<8xf32>
    %355 = vector.multi_reduction <add>, %354, %cst_156 [1] : vector<8x32xf32> to vector<8xf32>
    %356 = vector.shape_cast %355 : vector<8xf32> to vector<8x1xf32>
    %cst_157 = arith.constant 3.200000e+01 : f32
    %357 = vector.broadcast %cst_157 : f32 to vector<8x1xf32>
    %358 = arith.divf %356, %357 : vector<8x1xf32>
    %359 = vector.broadcast %351 : vector<8x1xf32> to vector<8x32xf32>
    %360 = arith.subf %343, %359 : vector<8x32xf32>
    %cst_158 = arith.constant 9.99999974E-6 : f32
    %361 = vector.broadcast %cst_158 : f32 to vector<8x1xf32>
    %362 = arith.addf %358, %361 : vector<8x1xf32>
    %363 = math.rsqrt %362 : vector<8x1xf32>
    %364 = vector.broadcast %363 : vector<8x1xf32> to vector<8x32xf32>
    %365 = arith.mulf %360, %364 : vector<8x32xf32>
    %366 = vector.broadcast %345 : vector<1x32xf32> to vector<8x32xf32>
    %367 = arith.mulf %365, %366 : vector<8x32xf32>
    %368 = vector.broadcast %347 : vector<1x32xf32> to vector<8x32xf32>
    %369 = arith.addf %367, %368 : vector<8x32xf32>
    %370 = vector.extract_strided_slice %369 {offsets = [0, 0], sizes = [4, 32], strides = [1, 1]} : vector<8x32xf32> to vector<4x32xf32>
    %cst_159 = arith.constant dense<0.000000e+00> : vector<32xf32>
    %371 = vector.multi_reduction <add>, %370, %cst_159 [0] : vector<4x32xf32> to vector<32xf32>
    %372 = vector.shape_cast %371 : vector<32xf32> to vector<1x32xf32>
    %373 = vector.extract_strided_slice %369 {offsets = [4, 0], sizes = [4, 32], strides = [1, 1]} : vector<8x32xf32> to vector<4x32xf32>
    %cst_160 = arith.constant dense<0.000000e+00> : vector<32xf32>
    %374 = vector.multi_reduction <add>, %373, %cst_160 [0] : vector<4x32xf32> to vector<32xf32>
    %375 = vector.shape_cast %374 : vector<32xf32> to vector<1x32xf32>
    %376 = tpu.concatenate %372, %375 in 0 : vector<1x32xf32>, vector<1x32xf32> -> vector<2x32xf32>
    %cst_161 = arith.constant 2.500000e-01 : f32
    %377 = vector.broadcast %cst_161 : f32 to vector<2x32xf32>
    %378 = arith.mulf %376, %377 : vector<2x32xf32>
    %379 = arith.truncf %378 : vector<2x32xf32> to vector<2x32xbf16>
    %c0_162 = arith.constant 0 : index
    %c0_163 = arith.constant 0 : index
    %380 = vector.load %arg16[%c0_162, %c0_163] : memref<32x31xbf16, #tpu.memory_space<vmem>>, vector<32x31xbf16>
    %cst_164 = arith.constant dense<0.000000e+00> : vector<2x31xf32>
    %381 = tpu.matmul %379, %380, %cst_164 {dimension_numbers = #tpu.dot_dimension_numbers<[1], [0], [0], [1], [0, 0, 1, 1], [], []>} : vector<2x32xbf16>, vector<32x31xbf16>, vector<2x31xf32> -> vector<2x31xf32>
    %c0_165 = arith.constant 0 : index
    %c0_166 = arith.constant 0 : index
    %382 = vector.load %arg17[%c0_165, %c0_166] : memref<1x31xf32, #tpu.memory_space<vmem>>, vector<1x31xf32>
    %383 = vector.broadcast %382 : vector<1x31xf32> to vector<2x31xf32>
    %384 = arith.addf %381, %383 : vector<2x31xf32>
    %c0_167 = arith.constant 0 : index
    %c0_168 = arith.constant 0 : index
    %385 = vector.load %arg18[%c0_167, %c0_168] : memref<2x31xf32, #tpu.memory_space<vmem>>, vector<2x31xf32>
    tpu.vector_store %arg18[%c0_167, %c0_168], %384 {strides = array<i32>} : memref<2x31xf32, #tpu.memory_space<vmem>>, vector<2x31xf32>,
    return
  }
}

</mosaic_0001>

<llo_original>
// kernel: vit_forward.1
$region0: #{vit_forward.1}
  #allocation0 [shape = 'u32[]', space=smem, size = 0x4, offset = 0x4, fixed_abs, tag = 'smem constant byte address 0x4 - core index']
  #allocation1 [shape = 'u32[144,128]{1,0:T(1,128)}', space=vmem, size = 0x12000, scoped, tag = 'internal scratch']
  %s0 = inlined_call_operand.vmem [shape: f32[8,768], index: 0, kind: input, shape index: {}]
  %s1 = inlined_call_operand.vmem [shape: bf16[768,32], index: 1, kind: input, shape index: {}]
  %s2 = inlined_call_operand.vmem [shape: f32[1,32], index: 2, kind: input, shape index: {}]
  %s3 = inlined_call_operand.vmem [shape: f32[4,32], index: 3, kind: input, shape index: {}]
  %s4 = inlined_call_operand.vmem [shape: bf16[2,32,96], index: 4, kind: input, shape index: {}]
  %s5 = inlined_call_operand.vmem [shape: f32[2,1,96], index: 5, kind: input, shape index: {}]
  %s6 = inlined_call_operand.vmem [shape: bf16[2,32,32], index: 6, kind: input, shape index: {}]
  %s7 = inlined_call_operand.vmem [shape: f32[2,1,32], index: 7, kind: input, shape index: {}]
  %s8 = inlined_call_operand.vmem [shape: f32[2,1,32], index: 8, kind: input, shape index: {}]
  %s9 = inlined_call_operand.vmem [shape: f32[2,1,32], index: 9, kind: input, shape index: {}]
  %s10 = inlined_call_operand.vmem [shape: bf16[2,32,128], index: 10, kind: input, shape index: {}]
  %s11 = inlined_call_operand.vmem [shape: f32[2,1,128], index: 11, kind: input, shape index: {}]
  %s12 = inlined_call_operand.vmem [shape: bf16[2,128,32], index: 12, kind: input, shape index: {}]
  %s13 = inlined_call_operand.vmem [shape: f32[2,1,32], index: 13, kind: input, shape index: {}]
  %s14 = inlined_call_operand.vmem [shape: f32[2,1,32], index: 14, kind: input, shape index: {}]
  %s15 = inlined_call_operand.vmem [shape: f32[2,1,32], index: 15, kind: input, shape index: {}]
  %s16 = inlined_call_operand.vmem [shape: bf16[32,31], index: 16, kind: input, shape index: {}]
  %s17 = inlined_call_operand.vmem [shape: f32[1,31], index: 17, kind: input, shape index: {}]
  %s18 = inlined_call_operand.hbm [shape: f32[2,31], index: 18, kind: output, shape index: {}]
  %s19 = sld [smem:[#allocation0]]
  $region82: #{vit_forward.1} parent=0
    _
  %s21 = ssub.s32 1, %s19
  %s22 = scalar_select 0, %s21, %s19
  $region1: #{vit_forward.1} parent=0
    #allocation2 [shape = 'u8[1024]{0}', space=vmem, size = 0x400, scoped, tag = 'output window, operand 0, single buffered']
    #allocation3 [shape = 's32[1]{0}', space=sflag, size = 0x4, scoped, tag = 'scoped memory for vit_forward.1']
    %23 = vsyncpa [#allocation3], 0
    // Predicated region
    $region2: #{vit_forward.1} parent=1 // pred_check
      _
    $region3: #{vit_forward.1} parent=1 // pred_check_branch
      %25 = sbr.rel (0) target = $region5
    $region4: #{vit_forward.1} parent=1 // pred_region
      _
    $region5: #{vit_forward.1} parent=1 // pred_fallthru
      _
    // Predicated region
    $region6: #{vit_forward.1} parent=1 // pred_check
      _
    $region7: #{vit_forward.1} parent=1 // pred_check_branch
      %27 = sbr.rel (0) target = $region9
    $region8: #{vit_forward.1} parent=1 // pred_region
      _
    $region9: #{vit_forward.1} parent=1 // pred_fallthru
      _
    // Predicated region
    $region10: #{vit_forward.1} parent=1 // pred_check
      _
    $region11: #{vit_forward.1} parent=1 // pred_check_branch
      %29 = sbr.rel (0) target = $region13
    $region12: #{vit_forward.1} parent=1 // pred_region
      _
    $region13: #{vit_forward.1} parent=1 // pred_fallthru
      _
    // Predicated region
    $region14: #{vit_forward.1} parent=1 // pred_check
      _
    $region15: #{vit_forward.1} parent=1 // pred_check_branch
      %31 = sbr.rel (0) target = $region17
    $region16: #{vit_forward.1} parent=1 // pred_region
      _
    $region17: #{vit_forward.1} parent=1 // pred_fallthru
      _
    // Predicated region
    $region18: #{vit_forward.1} parent=1 // pred_check
      _
    $region19: #{vit_forward.1} parent=1 // pred_check_branch
      %33 = sbr.rel (0) target = $region21
    $region20: #{vit_forward.1} parent=1 // pred_region
      _
    $region21: #{vit_forward.1} parent=1 // pred_fallthru
      _
    // Predicated region
    $region22: #{vit_forward.1} parent=1 // pred_check
      _
    $region23: #{vit_forward.1} parent=1 // pred_check_branch
      %35 = sbr.rel (0) target = $region25
    $region24: #{vit_forward.1} parent=1 // pred_region
      _
    $region25: #{vit_forward.1} parent=1 // pred_fallthru
      _
    // Predicated region
    $region26: #{vit_forward.1} parent=1 // pred_check
      _
    $region27: #{vit_forward.1} parent=1 // pred_check_branch
      %37 = sbr.rel (0) target = $region29
    $region28: #{vit_forward.1} parent=1 // pred_region
      _
    $region29: #{vit_forward.1} parent=1 // pred_fallthru
      _
    // Predicated region
    $region30: #{vit_forward.1} parent=1 // pred_check
      _
    $region31: #{vit_forward.1} parent=1 // pred_check_branch
      %39 = sbr.rel (0) target = $region33
    $region32: #{vit_forward.1} parent=1 // pred_region
      _
    $region33: #{vit_forward.1} parent=1 // pred_fallthru
      _
    // Predicated region
    $region34: #{vit_forward.1} parent=1 // pred_check
      _
    $region35: #{vit_forward.1} parent=1 // pred_check_branch
      %41 = sbr.rel (0) target = $region37
    $region36: #{vit_forward.1} parent=1 // pred_region
      _
    $region37: #{vit_forward.1} parent=1 // pred_fallthru
      _
    // Predicated region
    $region38: #{vit_forward.1} parent=1 // pred_check
      _
    $region39: #{vit_forward.1} parent=1 // pred_check_branch
      %43 = sbr.rel (0) target = $region41
    $region40: #{vit_forward.1} parent=1 // pred_region
      _
    $region41: #{vit_forward.1} parent=1 // pred_fallthru
      _
    // Predicated region
    $region42: #{vit_forward.1} parent=1 // pred_check
      _
    $region43: #{vit_forward.1} parent=1 // pred_check_branch
      %45 = sbr.rel (0) target = $region45
    $region44: #{vit_forward.1} parent=1 // pred_region
      _
    $region45: #{vit_forward.1} parent=1 // pred_fallthru
      _
    // Predicated region
    $region46: #{vit_forward.1} parent=1 // pred_check
      _
    $region47: #{vit_forward.1} parent=1 // pred_check_branch
      %47 = sbr.rel (0) target = $region49
    $region48: #{vit_forward.1} parent=1 // pred_region
      _
    $region49: #{vit_forward.1} parent=1 // pred_fallthru
      _
    // Predicated region
    $region50: #{vit_forward.1} parent=1 // pred_check
      _
    $region51: #{vit_forward.1} parent=1 // pred_check_branch
      %49 = sbr.rel (0) target = $region53
    $region52: #{vit_forward.1} parent=1 // pred_region
      _
    $region53: #{vit_forward.1} parent=1 // pred_fallthru
      _
    // Predicated region
    $region54: #{vit_forward.1} parent=1 // pred_check
      _
    $region55: #{vit_forward.1} parent=1 // pred_check_branch
      %51 = sbr.rel (0) target = $region57
    $region56: #{vit_forward.1} parent=1 // pred_region
      _
    $region57: #{vit_forward.1} parent=1 // pred_fallthru
      _
    // Predicated region
    $region58: #{vit_forward.1} parent=1 // pred_check
      _
    $region59: #{vit_forward.1} parent=1 // pred_check_branch
      %53 = sbr.rel (0) target = $region61
    $region60: #{vit_forward.1} parent=1 // pred_region
      _
    $region61: #{vit_forward.1} parent=1 // pred_fallthru
      _
    // Predicated region
    $region62: #{vit_forward.1} parent=1 // pred_check
      _
    $region63: #{vit_forward.1} parent=1 // pred_check_branch
      %55 = sbr.rel (0) target = $region65
    $region64: #{vit_forward.1} parent=1 // pred_region
      _
    $region65: #{vit_forward.1} parent=1 // pred_fallthru
      _
    // Predicated region
    $region66: #{vit_forward.1} parent=1 // pred_check
      _
    $region67: #{vit_forward.1} parent=1 // pred_check_branch
      %57 = sbr.rel (0) target = $region69
    $region68: #{vit_forward.1} parent=1 // pred_region
      _
    $region69: #{vit_forward.1} parent=1 // pred_fallthru
      _
    // Predicated region
    $region70: #{vit_forward.1} parent=1 // pred_check
      _
    $region71: #{vit_forward.1} parent=1 // pred_check_branch
      %59 = sbr.rel (0) target = $region73
    $region72: #{vit_forward.1} parent=1 // pred_region
      _
    $region73: #{vit_forward.1} parent=1 // pred_fallthru
      _
    %v61 = vld [vmem:[%s0] sm:$0xff]
    %v62 = vld [vmem:[%s0 + $0x8] sm:$0xff]
    %v63 = vld [vmem:[%s0 + $0x10] sm:$0xff]
    %v64 = vld [vmem:[%s0 + $0x18] sm:$0xff]
    %v65 = vld [vmem:[%s0 + $0x20] sm:$0xff]
    %v66 = vld [vmem:[%s0 + $0x28] sm:$0xff]
    %v67 = vpack.c.bf16 %v61, %v61
    %v68 = vpack.c.bf16 %v62, %v62
    %v69 = vpack.c.bf16 %v63, %v63
    %v70 = vpack.c.bf16 %v64, %v64
    %v71 = vpack.c.bf16 %v65, %v65
    %v72 = vpack.c.bf16 %v66, %v66
    %v73 = vld [vmem:[%s1] sm:$0xf]
    %v74 = vld [vmem:[%s1 + $0x4] sm:$0xf]
    %v75 = vld [vmem:[%s1 + $0x8] sm:$0xf]
    %v76 = vld [vmem:[%s1 + $0xc] sm:$0xf]
    %v77 = vld [vmem:[%s1 + $0x10] sm:$0xf]
    %v78 = vld [vmem:[%s1 + $0x14] sm:$0xf]
    %v79 = vld [vmem:[%s1 + $0x18] sm:$0xf]
    %v80 = vld [vmem:[%s1 + $0x1c] sm:$0xf]
    %v81 = vld [vmem:[%s1 + $0x20] sm:$0xf]
    %v82 = vld [vmem:[%s1 + $0x24] sm:$0xf]
    %v83 = vld [vmem:[%s1 + $0x28] sm:$0xf]
    %v84 = vld [vmem:[%s1 + $0x2c] sm:$0xf]
    %v85 = vld [vmem:[%s1 + $0x30] sm:$0xf]
    %v86 = vld [vmem:[%s1 + $0x34] sm:$0xf]
    %v87 = vld [vmem:[%s1 + $0x38] sm:$0xf]
    %v88 = vld [vmem:[%s1 + $0x3c] sm:$0xf]
    %v89 = vld [vmem:[%s1 + $0x40] sm:$0xf]
    %v90 = vld [vmem:[%s1 + $0x44] sm:$0xf]
    %v91 = vld [vmem:[%s1 + $0x48] sm:$0xf]
    %v92 = vld [vmem:[%s1 + $0x4c] sm:$0xf]
    %v93 = vld [vmem:[%s1 + $0x50] sm:$0xf]
    %v94 = vld [vmem:[%s1 + $0x54] sm:$0xf]
    %v95 = vld [vmem:[%s1 + $0x58] sm:$0xf]
    %v96 = vld [vmem:[%s1 + $0x5c] sm:$0xf]
    %v97 = vld [vmem:[%s1 + $0x60] sm:$0xf]
    %v98 = vld [vmem:[%s1 + $0x64] sm:$0xf]
    %v99 = vld [vmem:[%s1 + $0x68] sm:$0xf]
    %v100 = vld [vmem:[%s1 + $0x6c] sm:$0xf]
    %v101 = vld [vmem:[%s1 + $0x70] sm:$0xf]
    %v102 = vld [vmem:[%s1 + $0x74] sm:$0xf]
    %v103 = vld [vmem:[%s1 + $0x78] sm:$0xf]
    %v104 = vld [vmem:[%s1 + $0x7c] sm:$0xf]
    %v105 = vld [vmem:[%s1 + $0x80] sm:$0xf]
    %v106 = vld [vmem:[%s1 + $0x84] sm:$0xf]
    %v107 = vld [vmem:[%s1 + $0x88] sm:$0xf]
    %v108 = vld [vmem:[%s1 + $0x8c] sm:$0xf]
    %v109 = vld [vmem:[%s1 + $0x90] sm:$0xf]
    %v110 = vld [vmem:[%s1 + $0x94] sm:$0xf]
    %v111 = vld [vmem:[%s1 + $0x98] sm:$0xf]
    %v112 = vld [vmem:[%s1 + $0x9c] sm:$0xf]
    %v113 = vld [vmem:[%s1 + $0xa0] sm:$0xf]
    %v114 = vld [vmem:[%s1 + $0xa4] sm:$0xf]
    %v115 = vld [vmem:[%s1 + $0xa8] sm:$0xf]
    %v116 = vld [vmem:[%s1 + $0xac] sm:$0xf]
    %v117 = vld [vmem:[%s1 + $0xb0] sm:$0xf]
    %v118 = vld [vmem:[%s1 + $0xb4] sm:$0xf]
    %v119 = vld [vmem:[%s1 + $0xb8] sm:$0xf]
    %v120 = vld [vmem:[%s1 + $0xbc] sm:$0xf]
    %v121 = vld [vmem:[%s1 + $0xc0] sm:$0xf]
    %v122 = vld [vmem:[%s1 + $0xc4] sm:$0xf]
    %v123 = vld [vmem:[%s1 + $0xc8] sm:$0xf]
    %v124 = vld [vmem:[%s1 + $0xcc] sm:$0xf]
    %v125 = vld [vmem:[%s1 + $0xd0] sm:$0xf]
    %v126 = vld [vmem:[%s1 + $0xd4] sm:$0xf]
    %v127 = vld [vmem:[%s1 + $0xd8] sm:$0xf]
    %v128 = vld [vmem:[%s1 + $0xdc] sm:$0xf]
    %v129 = vld [vmem:[%s1 + $0xe0] sm:$0xf]
    %v130 = vld [vmem:[%s1 + $0xe4] sm:$0xf]
    %v131 = vld [vmem:[%s1 + $0xe8] sm:$0xf]
    %v132 = vld [vmem:[%s1 + $0xec] sm:$0xf]
    %v133 = vld [vmem:[%s1 + $0xf0] sm:$0xf]
    %v134 = vld [vmem:[%s1 + $0xf4] sm:$0xf]
    %v135 = vld [vmem:[%s1 + $0xf8] sm:$0xf]
    %v136 = vld [vmem:[%s1 + $0xfc] sm:$0xf]
    %v137 = vld [vmem:[%s1 + $0x100] sm:$0xf]
    %v138 = vld [vmem:[%s1 + $0x104] sm:$0xf]
    %v139 = vld [vmem:[%s1 + $0x108] sm:$0xf]
    %v140 = vld [vmem:[%s1 + $0x10c] sm:$0xf]
    %v141 = vld [vmem:[%s1 + $0x110] sm:$0xf]
    %v142 = vld [vmem:[%s1 + $0x114] sm:$0xf]
    %v143 = vld [vmem:[%s1 + $0x118] sm:$0xf]
    %v144 = vld [vmem:[%s1 + $0x11c] sm:$0xf]
    %v145 = vld [vmem:[%s1 + $0x120] sm:$0xf]
    %v146 = vld [vmem:[%s1 + $0x124] sm:$0xf]
    %v147 = vld [vmem:[%s1 + $0x128] sm:$0xf]
    %v148 = vld [vmem:[%s1 + $0x12c] sm:$0xf]
    %v149 = vld [vmem:[%s1 + $0x130] sm:$0xf]
    %v150 = vld [vmem:[%s1 + $0x134] sm:$0xf]
    %v151 = vld [vmem:[%s1 + $0x138] sm:$0xf]
    %v152 = vld [vmem:[%s1 + $0x13c] sm:$0xf]
    %v153 = vld [vmem:[%s1 + $0x140] sm:$0xf]
    %v154 = vld [vmem:[%s1 + $0x144] sm:$0xf]
    %v155 = vld [vmem:[%s1 + $0x148] sm:$0xf]
    %v156 = vld [vmem:[%s1 + $0x14c] sm:$0xf]
    %v157 = vld [vmem:[%s1 + $0x150] sm:$0xf]
    %v158 = vld [vmem:[%s1 + $0x154] sm:$0xf]
    %v159 = vld [vmem:[%s1 + $0x158] sm:$0xf]
    %v160 = vld [vmem:[%s1 + $0x15c] sm:$0xf]
    %v161 = vld [vmem:[%s1 + $0x160] sm:$0xf]
    %v162 = vld [vmem:[%s1 + $0x164] sm:$0xf]
    %v163 = vld [vmem:[%s1 + $0x168] sm:$0xf]
    %v164 = vld [vmem:[%s1 + $0x16c] sm:$0xf]
    %v165 = vld [vmem:[%s1 + $0x170] sm:$0xf]
    %v166 = vld [vmem:[%s1 + $0x174] sm:$0xf]
    %v167 = vld [vmem:[%s1 + $0x178] sm:$0xf]
    %v168 = vld [vmem:[%s1 + $0x17c] sm:$0xf]
    %v169 = vld [vmem:[%s2] sm:$0x1]
    %v171 = vlaneseq
    %v172 = vshrl.u32 %v171, 7
    %v173 = vsub.s32 0, %v172
    %v174 = vrot.slane %v169, %v173
    %v272 = vunpack.c.l.b16 %v73
    %v273 = vunpack.c.l.b16 %v74
    %v274 = vunpack.c.l.b16 %v75
    %v275 = vunpack.c.l.b16 %v76
    %v276 = vunpack.c.l.b16 %v77
    %v277 = vunpack.c.l.b16 %v78
    %v278 = vunpack.c.l.b16 %v79
    %v279 = vunpack.c.l.b16 %v80
    %v280 = vunpack.c.l.b16 %v81
    %v281 = vunpack.c.l.b16 %v82
    %v282 = vunpack.c.l.b16 %v83
    %v283 = vunpack.c.l.b16 %v84
    %v284 = vunpack.c.l.b16 %v85
    %v285 = vunpack.c.l.b16 %v86
    %v286 = vunpack.c.l.b16 %v87
    %v287 = vunpack.c.l.b16 %v88
    %v288 = vunpack.c.l.b16 %v89
    %v289 = vunpack.c.l.b16 %v90
    %v290 = vunpack.c.l.b16 %v91
    %v291 = vunpack.c.l.b16 %v92
    %v292 = vunpack.c.l.b16 %v93
    %v293 = vunpack.c.l.b16 %v94
    %v294 = vunpack.c.l.b16 %v95
    %v295 = vunpack.c.l.b16 %v96
    %v296 = vunpack.c.l.b16 %v97
    %v297 = vunpack.c.l.b16 %v98
    %v298 = vunpack.c.l.b16 %v99
    %v299 = vunpack.c.l.b16 %v100
    %v300 = vunpack.c.l.b16 %v101
    %v301 = vunpack.c.l.b16 %v102
    %v302 = vunpack.c.l.b16 %v103
    %v303 = vunpack.c.l.b16 %v104
    %v304 = vunpack.c.l.b16 %v105
    %v305 = vunpack.c.l.b16 %v106
    %v306 = vunpack.c.l.b16 %v107
    %v307 = vunpack.c.l.b16 %v108
    %v308 = vunpack.c.l.b16 %v109
    %v309 = vunpack.c.l.b16 %v110
    %v310 = vunpack.c.l.b16 %v111
    %v311 = vunpack.c.l.b16 %v112
    %v312 = vunpack.c.l.b16 %v113
    %v313 = vunpack.c.l.b16 %v114
    %v314 = vunpack.c.l.b16 %v115
    %v315 = vunpack.c.l.b16 %v116
    %v316 = vunpack.c.l.b16 %v117
    %v317 = vunpack.c.l.b16 %v118
    %v318 = vunpack.c.l.b16 %v119
    %v319 = vunpack.c.l.b16 %v120
    %v320 = vunpack.c.l.b16 %v121
    %v321 = vunpack.c.l.b16 %v122
    %v322 = vunpack.c.l.b16 %v123
    %v323 = vunpack.c.l.b16 %v124
    %v324 = vunpack.c.l.b16 %v125
    %v325 = vunpack.c.l.b16 %v126
    %v326 = vunpack.c.l.b16 %v127
    %v327 = vunpack.c.l.b16 %v128
    %v328 = vunpack.c.l.b16 %v129
    %v329 = vunpack.c.l.b16 %v130
    %v330 = vunpack.c.l.b16 %v131
    %v331 = vunpack.c.l.b16 %v132
    %v332 = vunpack.c.l.b16 %v133
    %v333 = vunpack.c.l.b16 %v134
    %v334 = vunpack.c.l.b16 %v135
    %v335 = vunpack.c.l.b16 %v136
    %v336 = vunpack.c.l.b16 %v137
    %v337 = vunpack.c.l.b16 %v138
    %v338 = vunpack.c.l.b16 %v139
    %v339 = vunpack.c.l.b16 %v140
    %v340 = vunpack.c.l.b16 %v141
    %v341 = vunpack.c.l.b16 %v142
    %v342 = vunpack.c.l.b16 %v143
    %v343 = vunpack.c.l.b16 %v144
    %v344 = vunpack.c.l.b16 %v145
    %v345 = vunpack.c.l.b16 %v146
    %v346 = vunpack.c.l.b16 %v147
    %v347 = vunpack.c.l.b16 %v148
    %v348 = vunpack.c.l.b16 %v149
    %v349 = vunpack.c.l.b16 %v150
    %v350 = vunpack.c.l.b16 %v151
    %v351 = vunpack.c.l.b16 %v152
    %v352 = vunpack.c.l.b16 %v153
    %v353 = vunpack.c.l.b16 %v154
    %v354 = vunpack.c.l.b16 %v155
    %v355 = vunpack.c.l.b16 %v156
    %v356 = vunpack.c.l.b16 %v157
    %v357 = vunpack.c.l.b16 %v158
    %v358 = vunpack.c.l.b16 %v159
    %v359 = vunpack.c.l.b16 %v160
    %v360 = vunpack.c.l.b16 %v161
    %v361 = vunpack.c.l.b16 %v162
    %v362 = vunpack.c.l.b16 %v163
    %v363 = vunpack.c.l.b16 %v164
    %v364 = vunpack.c.l.b16 %v165
    %v365 = vunpack.c.l.b16 %v166
    %v366 = vunpack.c.l.b16 %v167
    %v367 = vunpack.c.l.b16 %v168
    %v368 = vpack.c.b16 %v273, %v272
    %v369 = vpack.c.b16 %v275, %v274
    %v370 = vpack.c.b16 %v277, %v276
    %v371 = vpack.c.b16 %v279, %v278
    %v372 = vpack.c.b16 %v281, %v280
    %v373 = vpack.c.b16 %v283, %v282
    %v374 = vpack.c.b16 %v285, %v284
    %v375 = vpack.c.b16 %v287, %v286
    %v376 = vpack.c.b16 %v289, %v288
    %v377 = vpack.c.b16 %v291, %v290
    %v378 = vpack.c.b16 %v293, %v292
    %v379 = vpack.c.b16 %v295, %v294
    %v380 = vpack.c.b16 %v297, %v296
    %v381 = vpack.c.b16 %v299, %v298
    %v382 = vpack.c.b16 %v301, %v300
    %v383 = vpack.c.b16 %v303, %v302
    %v384 = vpack.c.b16 %v305, %v304
    %v385 = vpack.c.b16 %v307, %v306
    %v386 = vpack.c.b16 %v309, %v308
    %v387 = vpack.c.b16 %v311, %v310
    %v388 = vpack.c.b16 %v313, %v312
    %v389 = vpack.c.b16 %v315, %v314
    %v390 = vpack.c.b16 %v317, %v316
    %v391 = vpack.c.b16 %v319, %v318
    %v392 = vpack.c.b16 %v321, %v320
    %v393 = vpack.c.b16 %v323, %v322
    %v394 = vpack.c.b16 %v325, %v324
    %v395 = vpack.c.b16 %v327, %v326
    %v396 = vpack.c.b16 %v329, %v328
    %v397 = vpack.c.b16 %v331, %v330
    %v398 = vpack.c.b16 %v333, %v332
    %v399 = vpack.c.b16 %v335, %v334
    %v400 = vpack.c.b16 %v337, %v336
    %v401 = vpack.c.b16 %v339, %v338
    %v402 = vpack.c.b16 %v341, %v340
    %v403 = vpack.c.b16 %v343, %v342
    %v404 = vpack.c.b16 %v345, %v344
    %v405 = vpack.c.b16 %v347, %v346
    %v406 = vpack.c.b16 %v349, %v348
    %v407 = vpack.c.b16 %v351, %v350
    %v408 = vpack.c.b16 %v353, %v352
    %v409 = vpack.c.b16 %v355, %v354
    %v410 = vpack.c.b16 %v357, %v356
    %v411 = vpack.c.b16 %v359, %v358
    %v412 = vpack.c.b16 %v361, %v360
    %v413 = vpack.c.b16 %v363, %v362
    %v414 = vpack.c.b16 %v365, %v364
    %v415 = vpack.c.b16 %v367, %v366
    %464 = vmatprep.subr.bf16.mxu0 0
    %465 = vmatpush1.bf16.msra.mxu0 %v368
    %466 = vmatprep.subr.bf16.mxu0 0
    %467 = vmatpush1.bf16.msra.mxu0 %v369
    %468 = vmatprep.subr.bf16.mxu0 0
    %469 = vmatpush1.bf16.msra.mxu0 %v370
    %470 = vmatprep.subr.bf16.mxu0 0
    %471 = vmatpush1.bf16.msra.mxu0 %v371
    %472 = vmatprep.subr.bf16.mxu0 0
    %473 = vmatpush1.bf16.msra.mxu0 %v372
    %474 = vmatprep.subr.bf16.mxu0 0
    %475 = vmatpush1.bf16.msra.mxu0 %v373
    %476 = vmatprep.subr.bf16.mxu0 0
    %477 = vmatpush1.bf16.msra.mxu0 %v374
    %478 = vmatprep.subr.bf16.mxu0 0
    %479 = vmatpush1.bf16.msra.mxu0 %v375
    %480 = vmatprep.subr.bf16.mxu0 0
    %481 = vmatpush1.bf16.msra.mxu0 %v376
    %482 = vmatprep.subr.bf16.mxu0 0
    %483 = vmatpush1.bf16.msra.mxu0 %v377
    %484 = vmatprep.subr.bf16.mxu0 0
    %485 = vmatpush1.bf16.msra.mxu0 %v378
    %486 = vmatprep.subr.bf16.mxu0 0
    %487 = vmatpush1.bf16.msra.mxu0 %v379
    %488 = vmatprep.subr.bf16.mxu0 0
    %489 = vmatpush1.bf16.msra.mxu0 %v380
    %490 = vmatprep.subr.bf16.mxu0 0
    %491 = vmatpush1.bf16.msra.mxu0 %v381
    %492 = vmatprep.subr.bf16.mxu0 0
    %493 = vmatpush1.bf16.msra.mxu0 %v382
    %494 = vmatprep.subr.bf16.mxu0 0
    %495 = vmatpush1.bf16.msra.mxu0 %v383
    %496 = vmatprep.mubr.bf16.mxu0 %v68
    %497 = vmatmul.mubr.bf16.gmra.mrb[0].mxu0 %v67
    %v498 = vpop.f32.mrb[0].mxu0
    %v499 = vadd.f32 %v174, %v498
    %v500 = vpop.f32.mrb[0].mxu0
    %v501 = vpop.f32.mrb[0].mxu0
    %v502 = vpop.f32.mrb[0].mxu0
    %503 = vdwg.mxu0
    %504 = vmatprep.subr.bf16.mxu0 0
    %505 = vmatpush1.bf16.msra.mxu0 %v384
    %506 = vmatprep.subr.bf16.mxu0 0
    %507 = vmatpush1.bf16.msra.mxu0 %v385
    %508 = vmatprep.subr.bf16.mxu0 0
    %509 = vmatpush1.bf16.msra.mxu0 %v386
    %510 = vmatprep.subr.bf16.mxu0 0
    %511 = vmatpush1.bf16.msra.mxu0 %v387
    %512 = vmatprep.subr.bf16.mxu0 0
    %513 = vmatpush1.bf16.msra.mxu0 %v388
    %514 = vmatprep.subr.bf16.mxu0 0
    %515 = vmatpush1.bf16.msra.mxu0 %v389
    %516 = vmatprep.subr.bf16.mxu0 0
    %517 = vmatpush1.bf16.msra.mxu0 %v390
    %518 = vmatprep.subr.bf16.mxu0 0
    %519 = vmatpush1.bf16.msra.mxu0 %v391
    %520 = vmatprep.subr.bf16.mxu0 0
    %521 = vmatpush1.bf16.msra.mxu0 %v392
    %522 = vmatprep.subr.bf16.mxu0 0
    %523 = vmatpush1.bf16.msra.mxu0 %v393
    %524 = vmatprep.subr.bf16.mxu0 0
    %525 = vmatpush1.bf16.msra.mxu0 %v394
    %526 = vmatprep.subr.bf16.mxu0 0
    %527 = vmatpush1.bf16.msra.mxu0 %v395
    %528 = vmatprep.subr.bf16.mxu0 0
    %529 = vmatpush1.bf16.msra.mxu0 %v396
    %530 = vmatprep.subr.bf16.mxu0 0
    %531 = vmatpush1.bf16.msra.mxu0 %v397
    %532 = vmatprep.subr.bf16.mxu0 0
    %533 = vmatpush1.bf16.msra.mxu0 %v398
    %534 = vmatprep.subr.bf16.mxu0 0
    %535 = vmatpush1.bf16.msra.mxu0 %v399
    %536 = vmatprep.mubr.bf16.mxu0 %v70
    %537 = vmatmul.mubr.bf16.gmra.mrb[0].mxu0 %v69
    %v538 = vpop.f32.mrb[0].mxu0
    %v539 = vadd.f32 %v499, %v538
    %v540 = vpop.f32.mrb[0].mxu0
    %v541 = vpop.f32.mrb[0].mxu0
    %v542 = vpop.f32.mrb[0].mxu0
    %543 = vdwg.mxu0
    %544 = vmatprep.subr.bf16.mxu0 0
    %545 = vmatpush1.bf16.msra.mxu0 %v400
    %546 = vmatprep.subr.bf16.mxu0 0
    %547 = vmatpush1.bf16.msra.mxu0 %v401
    %548 = vmatprep.subr.bf16.mxu0 0
    %549 = vmatpush1.bf16.msra.mxu0 %v402
    %550 = vmatprep.subr.bf16.mxu0 0
    %551 = vmatpush1.bf16.msra.mxu0 %v403
    %552 = vmatprep.subr.bf16.mxu0 0
    %553 = vmatpush1.bf16.msra.mxu0 %v404
    %554 = vmatprep.subr.bf16.mxu0 0
    %555 = vmatpush1.bf16.msra.mxu0 %v405
    %556 = vmatprep.subr.bf16.mxu0 0
    %557 = vmatpush1.bf16.msra.mxu0 %v406
    %558 = vmatprep.subr.bf16.mxu0 0
    %559 = vmatpush1.bf16.msra.mxu0 %v407
    %560 = vmatprep.subr.bf16.mxu0 0
    %561 = vmatpush1.bf16.msra.mxu0 %v408
    %562 = vmatprep.subr.bf16.mxu0 0
    %563 = vmatpush1.bf16.msra.mxu0 %v409
    %564 = vmatprep.subr.bf16.mxu0 0
    %565 = vmatpush1.bf16.msra.mxu0 %v410
    %566 = vmatprep.subr.bf16.mxu0 0
    %567 = vmatpush1.bf16.msra.mxu0 %v411
    %568 = vmatprep.subr.bf16.mxu0 0
    %569 = vmatpush1.bf16.msra.mxu0 %v412
    %570 = vmatprep.subr.bf16.mxu0 0
    %571 = vmatpush1.bf16.msra.mxu0 %v413
    %572 = vmatprep.subr.bf16.mxu0 0
    %573 = vmatpush1.bf16.msra.mxu0 %v414
    %574 = vmatprep.subr.bf16.mxu0 0
    %575 = vmatpush1.bf16.msra.mxu0 %v415
    %576 = vmatprep.mubr.bf16.mxu0 %v72
    %577 = vmatmul.mubr.bf16.gmra.mrb[0].mxu0 %v71
    %v578 = vpop.f32.mrb[0].mxu0
    %v579 = vadd.f32 %v539, %v578
    %v580 = vpop.f32.mrb[0].mxu0
    %v581 = vpop.f32.mrb[0].mxu0
    %v582 = vpop.f32.mrb[0].mxu0
    %583 = vdwg.mxu0
    %v584 = vld [vmem:[%s3] sm:$0xf]
    %v586 = vrot.slane %v584, 4
    %vm588 = vcmask 1043456
    %v589 = vsel %vm588, %v584, %v586
    %v590 = vadd.f32 %v579, %v589
    %v591 = vlaneseq
    %v592 = vshrl.u32 %v591, 7
    %v593 = vlaneseq
    %v594 = vand.u32 %v593, 127
    %v595 = vand.u32 %v592, 3
    %v596 = vand.u32 %v594, 3
    %vm597 = vcmp.eq.s32.totalorder %v595, %v596
    %v598 = vsel %vm597, 0.0, -1e+30
    %v599 = vld [vmem:[%s4] sm:$0xf]
    %v600 = vld [vmem:[%s4 + $0x4] sm:$0xf]
    %v601 = vld [vmem:[%s4 + $0x8] sm:$0xf]
    %v602 = vld [vmem:[%s4 + $0xc] sm:$0xf]
    %v603 = vld [vmem:[%s6] sm:$0xf]
    %v604 = vld [vmem:[%s6 + $0x4] sm:$0xf]
    %v605 = vld [vmem:[%s6 + $0x8] sm:$0xf]
    %v606 = vld [vmem:[%s6 + $0xc] sm:$0xf]
    %v607 = vpack.c.bf16 %v590, %v590
    %v608 = vld [vmem:[%s5] sm:$0x1]
    %v610 = vlaneseq
    %v611 = vshrl.u32 %v610, 7
    %v612 = vsub.s32 0, %v611
    %v613 = vrot.slane %v608, %v612
    %v619 = vunpack.c.l.b16 %v599
    %v620 = vunpack.c.l.b16 %v600
    %v621 = vunpack.c.l.b16 %v601
    %v622 = vunpack.c.l.b16 %v602
    %v623 = vpack.c.b16 %v620, %v619
    %v624 = vpack.c.b16 %v622, %v621
    %vm627 = vcmask 261120
    %v629 = vsel %vm627, %v607, 0
    %631 = vmatprep.subr.bf16.mxu0 0
    %632 = vmatpush1.bf16.msra.mxu0 %v623
    %633 = vmatprep.subr.bf16.mxu0 0
    %634 = vmatpush1.bf16.msra.mxu0 %v624
    %635 = vmatprep.subr.bf16.mxu0 0
    %636 = vmatpush1.bf16.msra.mxu0 0
    %637 = vmatprep.subr.bf16.mxu0 0
    %638 = vmatpush1.bf16.msra.mxu0 0
    %639 = vmatprep.subr.bf16.mxu0 0
    %640 = vmatpush1.bf16.msra.mxu0 0
    %641 = vmatprep.subr.bf16.mxu0 0
    %642 = vmatpush1.bf16.msra.mxu0 0
    %643 = vmatprep.subr.bf16.mxu0 0
    %644 = vmatpush1.bf16.msra.mxu0 0
    %645 = vmatprep.subr.bf16.mxu0 0
    %646 = vmatpush1.bf16.msra.mxu0 0
    %647 = vmatprep.subr.bf16.mxu0 0
    %648 = vmatpush1.bf16.msra.mxu0 0
    %649 = vmatprep.subr.bf16.mxu0 0
    %650 = vmatpush1.bf16.msra.mxu0 0
    %651 = vmatprep.subr.bf16.mxu0 0
    %652 = vmatpush1.bf16.msra.mxu0 0
    %653 = vmatprep.subr.bf16.mxu0 0
    %654 = vmatpush1.bf16.msra.mxu0 0
    %655 = vmatprep.subr.bf16.mxu0 0
    %656 = vmatpush1.bf16.msra.mxu0 0
    %657 = vmatprep.subr.bf16.mxu0 0
    %658 = vmatpush1.bf16.msra.mxu0 0
    %659 = vmatprep.subr.bf16.mxu0 0
    %660 = vmatpush1.bf16.msra.mxu0 0
    %661 = vmatprep.subr.bf16.mxu0 0
    %662 = vmatpush1.bf16.msra.mxu0 0
    %663 = vmatprep.mubr.bf16.mxu0 0
    %664 = vmatmul.mubr.bf16.gmra.mrb[0].mxu0 %v629
    %v665 = vpop.f32.mrb[0].mxu0
    %v666 = vadd.f32 %v613, %v665
    %v667 = vpop.f32.mrb[0].mxu0
    %v668 = vpop.f32.mrb[0].mxu0
    %v669 = vpop.f32.mrb[0].mxu0
    %670 = vdwg.mxu0
    %672 = vrot.lane.b32.xlu0 %v666, 96
    %v673 = vpop.permute.xlu0 %672
    %vm674 = vcmask 64512
    %v675 = vsel %vm674, %v666, 0
    %v677 = vsel %vm674, %v673, 0
    %679 = vmatprep.subr.mxu0 0.0
    %680 = vmatpush1.xpose.msra.mxu0 %v677
    %681 = vmatprep.subr.mxu0 0.0
    %682 = vmatpush1.xpose.msra.mxu0 0.0
    %683 = vmatprep.subr.mxu0 0.0
    %684 = vmatpush1.xpose.msra.mxu0 0.0
    %685 = vmatprep.subr.mxu0 0.0
    %686 = vmatpush1.xpose.msra.mxu0 0.0
    %687 = vmatprep.subr.mxu0 0.0
    %688 = vmatpush1.xpose.msra.mxu0 0.0
    %689 = vmatprep.subr.mxu0 0.0
    %690 = vmatpush1.xpose.msra.mxu0 0.0
    %691 = vmatprep.subr.mxu0 0.0
    %692 = vmatpush1.xpose.msra.mxu0 0.0
    %693 = vmatprep.subr.mxu0 0.0
    %694 = vmatpush1.xpose.msra.mxu0 0.0
    %695 = vmatprep.subr.mxu0 0.0
    %696 = vmatpush1.xpose.msra.mxu0 0.0
    %697 = vmatprep.subr.mxu0 0.0
    %698 = vmatpush1.xpose.msra.mxu0 0.0
    %699 = vmatprep.subr.mxu0 0.0
    %700 = vmatpush1.xpose.msra.mxu0 0.0
    %701 = vmatprep.subr.mxu0 0.0
    %702 = vmatpush1.xpose.msra.mxu0 0.0
    %703 = vmatprep.subr.mxu0 0.0
    %704 = vmatpush1.xpose.msra.mxu0 0.0
    %705 = vmatprep.subr.mxu0 0.0
    %706 = vmatpush1.xpose.msra.mxu0 0.0
    %707 = vmatprep.subr.mxu0 0.0
    %708 = vmatpush1.xpose.msra.mxu0 0.0
    %709 = vmatprep.subr.mxu0 0.0
    %710 = vmatpush1.xpose.msra.mxu0 0.0
    %711 = vmatprep.subr.mxu0 0.0
    %712 = vmatpush1.xpose.msra.mxu0 0.0
    %713 = vmatprep.subr.mxu0 0.0
    %714 = vmatpush1.xpose.msra.mxu0 0.0
    %715 = vmatprep.subr.mxu0 0.0
    %716 = vmatpush1.xpose.msra.mxu0 0.0
    %717 = vmatprep.subr.mxu0 0.0
    %718 = vmatpush1.xpose.msra.mxu0 0.0
    %719 = vmatprep.subr.mxu0 0.0
    %720 = vmatpush1.xpose.msra.mxu0 0.0
    %721 = vmatprep.subr.mxu0 0.0
    %722 = vmatpush1.xpose.msra.mxu0 0.0
    %723 = vmatprep.subr.mxu0 0.0
    %724 = vmatpush1.xpose.msra.mxu0 0.0
    %725 = vmatprep.subr.mxu0 0.0
    %726 = vmatpush1.xpose.msra.mxu0 0.0
    %727 = vmatprep.subr.mxu0 0.0
    %728 = vmatpush1.xpose.msra.mxu0 0.0
    %729 = vmatprep.subr.mxu0 0.0
    %730 = vmatpush1.xpose.msra.mxu0 0.0
    %731 = vmatprep.subr.mxu0 0.0
    %732 = vmatpush1.xpose.msra.mxu0 0.0
    %733 = vmatprep.subr.mxu0 0.0
    %734 = vmatpush1.xpose.msra.mxu0 0.0
    %735 = vmatprep.subr.mxu0 0.0
    %736 = vmatpush1.xpose.msra.mxu0 0.0
    %737 = vmatprep.subr.mxu0 0.0
    %738 = vmatpush1.xpose.msra.mxu0 0.0
    %739 = vmatprep.subr.mxu0 0.0
    %740 = vmatpush1.xpose.msra.mxu0 0.0
    %741 = vmatprep.subr.mxu0 0.0
    %742 = vmatpush1.xpose.msra.mxu0 0.0
    %743 = vmatprep.mubr.f32.mxu0 0.0
    %744 = vmatmul.mubr.f32.gmra.mrb[0].mxu0 %v675
    %v745 = vpop.f32.mrb[0].mxu0
    %v746 = vadd.f32 0.0, %v745
    %v747 = vpop.f32.mrb[0].mxu0
    %748 = vdwg.mxu0
    %v749 = vmul.f32 %v746, 0.35355338
    %v750 = vadd.f32 %v749, %v598
    %v751 = vsel %vm674, %v750, -inf
    %752 = vmax.xlane.f32.xlu0 %v751
    %v753 = vpop.xlane.xlu0 %752
    %v754 = vsub.f32 %v750, %v753
    %v755 = vmul.f32 %v754, 1.442695
    %v756 = vpow.pop %v755
    %v757 = vsel %vm674, %v756, 0.0
    %758 = vadd.xlane.f32.xlu0 %v757
    %v759 = vpop.xlane.xlu0 %758
    %v760 = vrcp.pop %v759
    %v761 = vmul.f32 %v756, %v760
    %762 = vrot.lane.b32.xlu0 %v666, 64
    %v763 = vpop.permute.xlu0 %762
    %v766 = vsel %vm674, %v761, 0
    %768 = vmatprep.subr.mxu0 0.0
    %769 = vmatpush1.msra.mxu0 %v763
    %770 = vmatprep.subr.mxu0 0.0
    %771 = vmatpush1.msra.mxu0 0.0
    %772 = vmatprep.subr.mxu0 0.0
    %773 = vmatpush1.msra.mxu0 0.0
    %774 = vmatprep.subr.mxu0 0.0
    %775 = vmatpush1.msra.mxu0 0.0
    %776 = vmatprep.subr.mxu0 0.0
    %777 = vmatpush1.msra.mxu0 0.0
    %778 = vmatprep.subr.mxu0 0.0
    %779 = vmatpush1.msra.mxu0 0.0
    %780 = vmatprep.subr.mxu0 0.0
    %781 = vmatpush1.msra.mxu0 0.0
    %782 = vmatprep.subr.mxu0 0.0
    %783 = vmatpush1.msra.mxu0 0.0
    %784 = vmatprep.subr.mxu0 0.0
    %785 = vmatpush1.msra.mxu0 0.0
    %786 = vmatprep.subr.mxu0 0.0
    %787 = vmatpush1.msra.mxu0 0.0
    %788 = vmatprep.subr.mxu0 0.0
    %789 = vmatpush1.msra.mxu0 0.0
    %790 = vmatprep.subr.mxu0 0.0
    %791 = vmatpush1.msra.mxu0 0.0
    %792 = vmatprep.subr.mxu0 0.0
    %793 = vmatpush1.msra.mxu0 0.0
    %794 = vmatprep.subr.mxu0 0.0
    %795 = vmatpush1.msra.mxu0 0.0
    %796 = vmatprep.subr.mxu0 0.0
    %797 = vmatpush1.msra.mxu0 0.0
    %798 = vmatprep.subr.mxu0 0.0
    %799 = vmatpush1.msra.mxu0 0.0
    %800 = vmatprep.subr.mxu0 0.0
    %801 = vmatpush1.msra.mxu0 0.0
    %802 = vmatprep.subr.mxu0 0.0
    %803 = vmatpush1.msra.mxu0 0.0
    %804 = vmatprep.subr.mxu0 0.0
    %805 = vmatpush1.msra.mxu0 0.0
    %806 = vmatprep.subr.mxu0 0.0
    %807 = vmatpush1.msra.mxu0 0.0
    %808 = vmatprep.subr.mxu0 0.0
    %809 = vmatpush1.msra.mxu0 0.0
    %810 = vmatprep.subr.mxu0 0.0
    %811 = vmatpush1.msra.mxu0 0.0
    %812 = vmatprep.subr.mxu0 0.0
    %813 = vmatpush1.msra.mxu0 0.0
    %814 = vmatprep.subr.mxu0 0.0
    %815 = vmatpush1.msra.mxu0 0.0
    %816 = vmatprep.subr.mxu0 0.0
    %817 = vmatpush1.msra.mxu0 0.0
    %818 = vmatprep.subr.mxu0 0.0
    %819 = vmatpush1.msra.mxu0 0.0
    %820 = vmatprep.subr.mxu0 0.0
    %821 = vmatpush1.msra.mxu0 0.0
    %822 = vmatprep.subr.mxu0 0.0
    %823 = vmatpush1.msra.mxu0 0.0
    %824 = vmatprep.subr.mxu0 0.0
    %825 = vmatpush1.msra.mxu0 0.0
    %826 = vmatprep.subr.mxu0 0.0
    %827 = vmatpush1.msra.mxu0 0.0
    %828 = vmatprep.subr.mxu0 0.0
    %829 = vmatpush1.msra.mxu0 0.0
    %830 = vmatprep.subr.mxu0 0.0
    %831 = vmatpush1.msra.mxu0 0.0
    %832 = vmatprep.mubr.f32.mxu0 0.0
    %833 = vmatmul.mubr.f32.gmra.mrb[0].mxu0 %v766
    %v834 = vpop.f32.mrb[0].mxu0
    %v835 = vadd.f32 0.0, %v834
    %v836 = vpop.f32.mrb[0].mxu0
    %837 = vdwg.mxu0
    %v838 = vpack.c.bf16 %v835, %v835
    %839 = vrot.lane.b32.xlu0 %v666, 120
    %v840 = vpop.permute.xlu0 %839
    %841 = vrot.lane.b32.xlu0 %v666, 88
    %v842 = vpop.permute.xlu0 %841
    %v843 = vsel %vm674, %v840, 0
    %v845 = vsel %vm674, %v842, 0
    %847 = vmatprep.subr.mxu0 0.0
    %848 = vmatpush1.xpose.msra.mxu0 %v845
    %849 = vmatprep.subr.mxu0 0.0
    %850 = vmatpush1.xpose.msra.mxu0 0.0
    %851 = vmatprep.subr.mxu0 0.0
    %852 = vmatpush1.xpose.msra.mxu0 0.0
    %853 = vmatprep.subr.mxu0 0.0
    %854 = vmatpush1.xpose.msra.mxu0 0.0
    %855 = vmatprep.subr.mxu0 0.0
    %856 = vmatpush1.xpose.msra.mxu0 0.0
    %857 = vmatprep.subr.mxu0 0.0
    %858 = vmatpush1.xpose.msra.mxu0 0.0
    %859 = vmatprep.subr.mxu0 0.0
    %860 = vmatpush1.xpose.msra.mxu0 0.0
    %861 = vmatprep.subr.mxu0 0.0
    %862 = vmatpush1.xpose.msra.mxu0 0.0
    %863 = vmatprep.subr.mxu0 0.0
    %864 = vmatpush1.xpose.msra.mxu0 0.0
    %865 = vmatprep.subr.mxu0 0.0
    %866 = vmatpush1.xpose.msra.mxu0 0.0
    %867 = vmatprep.subr.mxu0 0.0
    %868 = vmatpush1.xpose.msra.mxu0 0.0
    %869 = vmatprep.subr.mxu0 0.0
    %870 = vmatpush1.xpose.msra.mxu0 0.0
    %871 = vmatprep.subr.mxu0 0.0
    %872 = vmatpush1.xpose.msra.mxu0 0.0
    %873 = vmatprep.subr.mxu0 0.0
    %874 = vmatpush1.xpose.msra.mxu0 0.0
    %875 = vmatprep.subr.mxu0 0.0
    %876 = vmatpush1.xpose.msra.mxu0 0.0
    %877 = vmatprep.subr.mxu0 0.0
    %878 = vmatpush1.xpose.msra.mxu0 0.0
    %879 = vmatprep.subr.mxu0 0.0
    %880 = vmatpush1.xpose.msra.mxu0 0.0
    %881 = vmatprep.subr.mxu0 0.0
    %882 = vmatpush1.xpose.msra.mxu0 0.0
    %883 = vmatprep.subr.mxu0 0.0
    %884 = vmatpush1.xpose.msra.mxu0 0.0
    %885 = vmatprep.subr.mxu0 0.0
    %886 = vmatpush1.xpose.msra.mxu0 0.0
    %887 = vmatprep.subr.mxu0 0.0
    %888 = vmatpush1.xpose.msra.mxu0 0.0
    %889 = vmatprep.subr.mxu0 0.0
    %890 = vmatpush1.xpose.msra.mxu0 0.0
    %891 = vmatprep.subr.mxu0 0.0
    %892 = vmatpush1.xpose.msra.mxu0 0.0
    %893 = vmatprep.subr.mxu0 0.0
    %894 = vmatpush1.xpose.msra.mxu0 0.0
    %895 = vmatprep.subr.mxu0 0.0
    %896 = vmatpush1.xpose.msra.mxu0 0.0
    %897 = vmatprep.subr.mxu0 0.0
    %898 = vmatpush1.xpose.msra.mxu0 0.0
    %899 = vmatprep.subr.mxu0 0.0
    %900 = vmatpush1.xpose.msra.mxu0 0.0
    %901 = vmatprep.subr.mxu0 0.0
    %902 = vmatpush1.xpose.msra.mxu0 0.0
    %903 = vmatprep.subr.mxu0 0.0
    %904 = vmatpush1.xpose.msra.mxu0 0.0
    %905 = vmatprep.subr.mxu0 0.0
    %906 = vmatpush1.xpose.msra.mxu0 0.0
    %907 = vmatprep.subr.mxu0 0.0
    %908 = vmatpush1.xpose.msra.mxu0 0.0
    %909 = vmatprep.subr.mxu0 0.0
    %910 = vmatpush1.xpose.msra.mxu0 0.0
    %911 = vmatprep.mubr.f32.mxu0 0.0
    %912 = vmatmul.mubr.f32.gmra.mrb[0].mxu0 %v843
    %v913 = vpop.f32.mrb[0].mxu0
    %v914 = vadd.f32 0.0, %v913
    %v915 = vpop.f32.mrb[0].mxu0
    %916 = vdwg.mxu0
    %v917 = vmul.f32 %v914, 0.35355338
    %v918 = vadd.f32 %v917, %v598
    %v919 = vsel %vm674, %v918, -inf
    %920 = vmax.xlane.f32.xlu0 %v919
    %v921 = vpop.xlane.xlu0 %920
    %v922 = vsub.f32 %v918, %v921
    %v923 = vmul.f32 %v922, 1.442695
    %v924 = vpow.pop %v923
    %v925 = vsel %vm674, %v924, 0.0
    %926 = vadd.xlane.f32.xlu0 %v925
    %v927 = vpop.xlane.xlu0 %926
    %v928 = vrcp.pop %v927
    %v929 = vmul.f32 %v924, %v928
    %930 = vrot.lane.b32.xlu0 %v666, 56
    %v931 = vpop.permute.xlu0 %930
    %v934 = vsel %vm674, %v929, 0
    %936 = vmatprep.subr.mxu0 0.0
    %937 = vmatpush1.msra.mxu0 %v931
    %938 = vmatprep.subr.mxu0 0.0
    %939 = vmatpush1.msra.mxu0 0.0
    %940 = vmatprep.subr.mxu0 0.0
    %941 = vmatpush1.msra.mxu0 0.0
    %942 = vmatprep.subr.mxu0 0.0
    %943 = vmatpush1.msra.mxu0 0.0
    %944 = vmatprep.subr.mxu0 0.0
    %945 = vmatpush1.msra.mxu0 0.0
    %946 = vmatprep.subr.mxu0 0.0
    %947 = vmatpush1.msra.mxu0 0.0
    %948 = vmatprep.subr.mxu0 0.0
    %949 = vmatpush1.msra.mxu0 0.0
    %950 = vmatprep.subr.mxu0 0.0
    %951 = vmatpush1.msra.mxu0 0.0
    %952 = vmatprep.subr.mxu0 0.0
    %953 = vmatpush1.msra.mxu0 0.0
    %954 = vmatprep.subr.mxu0 0.0
    %955 = vmatpush1.msra.mxu0 0.0
    %956 = vmatprep.subr.mxu0 0.0
    %957 = vmatpush1.msra.mxu0 0.0
    %958 = vmatprep.subr.mxu0 0.0
    %959 = vmatpush1.msra.mxu0 0.0
    %960 = vmatprep.subr.mxu0 0.0
    %961 = vmatpush1.msra.mxu0 0.0
    %962 = vmatprep.subr.mxu0 0.0
    %963 = vmatpush1.msra.mxu0 0.0
    %964 = vmatprep.subr.mxu0 0.0
    %965 = vmatpush1.msra.mxu0 0.0
    %966 = vmatprep.subr.mxu0 0.0
    %967 = vmatpush1.msra.mxu0 0.0
    %968 = vmatprep.subr.mxu0 0.0
    %969 = vmatpush1.msra.mxu0 0.0
    %970 = vmatprep.subr.mxu0 0.0
    %971 = vmatpush1.msra.mxu0 0.0
    %972 = vmatprep.subr.mxu0 0.0
    %973 = vmatpush1.msra.mxu0 0.0
    %974 = vmatprep.subr.mxu0 0.0
    %975 = vmatpush1.msra.mxu0 0.0
    %976 = vmatprep.subr.mxu0 0.0
    %977 = vmatpush1.msra.mxu0 0.0
    %978 = vmatprep.subr.mxu0 0.0
    %979 = vmatpush1.msra.mxu0 0.0
    %980 = vmatprep.subr.mxu0 0.0
    %981 = vmatpush1.msra.mxu0 0.0
    %982 = vmatprep.subr.mxu0 0.0
    %983 = vmatpush1.msra.mxu0 0.0
    %984 = vmatprep.subr.mxu0 0.0
    %985 = vmatpush1.msra.mxu0 0.0
    %986 = vmatprep.subr.mxu0 0.0
    %987 = vmatpush1.msra.mxu0 0.0
    %988 = vmatprep.subr.mxu0 0.0
    %989 = vmatpush1.msra.mxu0 0.0
    %990 = vmatprep.subr.mxu0 0.0
    %991 = vmatpush1.msra.mxu0 0.0
    %992 = vmatprep.subr.mxu0 0.0
    %993 = vmatpush1.msra.mxu0 0.0
    %994 = vmatprep.subr.mxu0 0.0
    %995 = vmatpush1.msra.mxu0 0.0
    %996 = vmatprep.subr.mxu0 0.0
    %997 = vmatpush1.msra.mxu0 0.0
    %998 = vmatprep.subr.mxu0 0.0
    %999 = vmatpush1.msra.mxu0 0.0
    %1000 = vmatprep.mubr.f32.mxu0 0.0
    %1001 = vmatmul.mubr.f32.gmra.mrb[0].mxu0 %v934
    %v1002 = vpop.f32.mrb[0].mxu0
    %v1003 = vadd.f32 0.0, %v1002
    %v1004 = vpop.f32.mrb[0].mxu0
    %1005 = vdwg.mxu0
    %v1006 = vpack.c.bf16 %v1003, %v1003
    %v1008 = vsel %vm674, %v1006, 0
    %v1011 = vsel %vm588, %v604, 0
    %1013 = vmatprep.subr.bf16.mxu0 0
    %1014 = vmatpush1.bf16.msra.mxu0 %v1011
    %1015 = vmatprep.subr.bf16.mxu0 0
    %1016 = vmatpush1.bf16.msra.mxu0 0
    %1017 = vmatprep.subr.bf16.mxu0 0
    %1018 = vmatpush1.bf16.msra.mxu0 0
    %1019 = vmatprep.subr.bf16.mxu0 0
    %1020 = vmatpush1.bf16.msra.mxu0 0
    %1021 = vmatprep.subr.bf16.mxu0 0
    %1022 = vmatpush1.bf16.msra.mxu0 0
    %1023 = vmatprep.subr.bf16.mxu0 0
    %1024 = vmatpush1.bf16.msra.mxu0 0
    %1025 = vmatprep.subr.bf16.mxu0 0
    %1026 = vmatpush1.bf16.msra.mxu0 0
    %1027 = vmatprep.subr.bf16.mxu0 0
    %1028 = vmatpush1.bf16.msra.mxu0 0
    %1029 = vmatprep.subr.bf16.mxu0 0
    %1030 = vmatpush1.bf16.msra.mxu0 0
    %1031 = vmatprep.subr.bf16.mxu0 0
    %1032 = vmatpush1.bf16.msra.mxu0 0
    %1033 = vmatprep.subr.bf16.mxu0 0
    %1034 = vmatpush1.bf16.msra.mxu0 0
    %1035 = vmatprep.subr.bf16.mxu0 0
    %1036 = vmatpush1.bf16.msra.mxu0 0
    %1037 = vmatprep.subr.bf16.mxu0 0
    %1038 = vmatpush1.bf16.msra.mxu0 0
    %1039 = vmatprep.subr.bf16.mxu0 0
    %1040 = vmatpush1.bf16.msra.mxu0 0
    %1041 = vmatprep.subr.bf16.mxu0 0
    %1042 = vmatpush1.bf16.msra.mxu0 0
    %1043 = vmatprep.subr.bf16.mxu0 0
    %1044 = vmatpush1.bf16.msra.mxu0 0
    %1045 = vmatprep.mubr.bf16.mxu0 0
    %1046 = vmatmul.mubr.bf16.gmra.mrb[0].mxu0 %v1008
    %v1047 = vpop.f32.mrb[0].mxu0
    %v1048 = vadd.f32 0.0, %v1047
    %v1049 = vpop.f32.mrb[0].mxu0
    %v1050 = vpop.f32.mrb[0].mxu0
    %v1051 = vpop.f32.mrb[0].mxu0
    %1052 = vdwg.mxu0
    %v1054 = vsel %vm674, %v838, 0
    %v1057 = vsel %vm588, %v603, 0
    %1059 = vmatprep.subr.bf16.mxu0 0
    %1060 = vmatpush1.bf16.msra.mxu0 %v1057
    %1061 = vmatprep.subr.bf16.mxu0 0
    %1062 = vmatpush1.bf16.msra.mxu0 0
    %1063 = vmatprep.subr.bf16.mxu0 0
    %1064 = vmatpush1.bf16.msra.mxu0 0
    %1065 = vmatprep.subr.bf16.mxu0 0
    %1066 = vmatpush1.bf16.msra.mxu0 0
    %1067 = vmatprep.subr.bf16.mxu0 0
    %1068 = vmatpush1.bf16.msra.mxu0 0
    %1069 = vmatprep.subr.bf16.mxu0 0
    %1070 = vmatpush1.bf16.msra.mxu0 0
    %1071 = vmatprep.subr.bf16.mxu0 0
    %1072 = vmatpush1.bf16.msra.mxu0 0
    %1073 = vmatprep.subr.bf16.mxu0 0
    %1074 = vmatpush1.bf16.msra.mxu0 0
    %1075 = vmatprep.subr.bf16.mxu0 0
    %1076 = vmatpush1.bf16.msra.mxu0 0
    %1077 = vmatprep.subr.bf16.mxu0 0
    %1078 = vmatpush1.bf16.msra.mxu0 0
    %1079 = vmatprep.subr.bf16.mxu0 0
    %1080 = vmatpush1.bf16.msra.mxu0 0
    %1081 = vmatprep.subr.bf16.mxu0 0
    %1082 = vmatpush1.bf16.msra.mxu0 0
    %1083 = vmatprep.subr.bf16.mxu0 0
    %1084 = vmatpush1.bf16.msra.mxu0 0
    %1085 = vmatprep.subr.bf16.mxu0 0
    %1086 = vmatpush1.bf16.msra.mxu0 0
    %1087 = vmatprep.subr.bf16.mxu0 0
    %1088 = vmatpush1.bf16.msra.mxu0 0
    %1089 = vmatprep.subr.bf16.mxu0 0
    %1090 = vmatpush1.bf16.msra.mxu0 0
    %1091 = vmatprep.mubr.bf16.mxu0 0
    %1092 = vmatmul.mubr.bf16.gmra.mrb[0].mxu0 %v1054
    %v1093 = vpop.f32.mrb[0].mxu0
    %v1094 = vadd.f32 %v1048, %v1093
    %v1095 = vpop.f32.mrb[0].mxu0
    %v1096 = vpop.f32.mrb[0].mxu0
    %v1097 = vpop.f32.mrb[0].mxu0
    %1098 = vdwg.mxu0
    %1099 = vrot.lane.b32.xlu0 %v666, 112
    %v1100 = vpop.permute.xlu0 %1099
    %1101 = vrot.lane.b32.xlu0 %v666, 80
    %v1102 = vpop.permute.xlu0 %1101
    %v1103 = vsel %vm674, %v1100, 0
    %v1105 = vsel %vm674, %v1102, 0
    %1107 = vmatprep.subr.mxu0 0.0
    %1108 = vmatpush1.xpose.msra.mxu0 %v1105
    %1109 = vmatprep.subr.mxu0 0.0
    %1110 = vmatpush1.xpose.msra.mxu0 0.0
    %1111 = vmatprep.subr.mxu0 0.0
    %1112 = vmatpush1.xpose.msra.mxu0 0.0
    %1113 = vmatprep.subr.mxu0 0.0
    %1114 = vmatpush1.xpose.msra.mxu0 0.0
    %1115 = vmatprep.subr.mxu0 0.0
    %1116 = vmatpush1.xpose.msra.mxu0 0.0
    %1117 = vmatprep.subr.mxu0 0.0
    %1118 = vmatpush1.xpose.msra.mxu0 0.0
    %1119 = vmatprep.subr.mxu0 0.0
    %1120 = vmatpush1.xpose.msra.mxu0 0.0
    %1121 = vmatprep.subr.mxu0 0.0
    %1122 = vmatpush1.xpose.msra.mxu0 0.0
    %1123 = vmatprep.subr.mxu0 0.0
    %1124 = vmatpush1.xpose.msra.mxu0 0.0
    %1125 = vmatprep.subr.mxu0 0.0
    %1126 = vmatpush1.xpose.msra.mxu0 0.0
    %1127 = vmatprep.subr.mxu0 0.0
    %1128 = vmatpush1.xpose.msra.mxu0 0.0
    %1129 = vmatprep.subr.mxu0 0.0
    %1130 = vmatpush1.xpose.msra.mxu0 0.0
    %1131 = vmatprep.subr.mxu0 0.0
    %1132 = vmatpush1.xpose.msra.mxu0 0.0
    %1133 = vmatprep.subr.mxu0 0.0
    %1134 = vmatpush1.xpose.msra.mxu0 0.0
    %1135 = vmatprep.subr.mxu0 0.0
    %1136 = vmatpush1.xpose.msra.mxu0 0.0
    %1137 = vmatprep.subr.mxu0 0.0
    %1138 = vmatpush1.xpose.msra.mxu0 0.0
    %1139 = vmatprep.subr.mxu0 0.0
    %1140 = vmatpush1.xpose.msra.mxu0 0.0
    %1141 = vmatprep.subr.mxu0 0.0
    %1142 = vmatpush1.xpose.msra.mxu0 0.0
    %1143 = vmatprep.subr.mxu0 0.0
    %1144 = vmatpush1.xpose.msra.mxu0 0.0
    %1145 = vmatprep.subr.mxu0 0.0
    %1146 = vmatpush1.xpose.msra.mxu0 0.0
    %1147 = vmatprep.subr.mxu0 0.0
    %1148 = vmatpush1.xpose.msra.mxu0 0.0
    %1149 = vmatprep.subr.mxu0 0.0
    %1150 = vmatpush1.xpose.msra.mxu0 0.0
    %1151 = vmatprep.subr.mxu0 0.0
    %1152 = vmatpush1.xpose.msra.mxu0 0.0
    %1153 = vmatprep.subr.mxu0 0.0
    %1154 = vmatpush1.xpose.msra.mxu0 0.0
    %1155 = vmatprep.subr.mxu0 0.0
    %1156 = vmatpush1.xpose.msra.mxu0 0.0
    %1157 = vmatprep.subr.mxu0 0.0
    %1158 = vmatpush1.xpose.msra.mxu0 0.0
    %1159 = vmatprep.subr.mxu0 0.0
    %1160 = vmatpush1.xpose.msra.mxu0 0.0
    %1161 = vmatprep.subr.mxu0 0.0
    %1162 = vmatpush1.xpose.msra.mxu0 0.0
    %1163 = vmatprep.subr.mxu0 0.0
    %1164 = vmatpush1.xpose.msra.mxu0 0.0
    %1165 = vmatprep.subr.mxu0 0.0
    %1166 = vmatpush1.xpose.msra.mxu0 0.0
    %1167 = vmatprep.subr.mxu0 0.0
    %1168 = vmatpush1.xpose.msra.mxu0 0.0
    %1169 = vmatprep.subr.mxu0 0.0
    %1170 = vmatpush1.xpose.msra.mxu0 0.0
    %1171 = vmatprep.mubr.f32.mxu0 0.0
    %1172 = vmatmul.mubr.f32.gmra.mrb[0].mxu0 %v1103
    %v1173 = vpop.f32.mrb[0].mxu0
    %v1174 = vadd.f32 0.0, %v1173
    %v1175 = vpop.f32.mrb[0].mxu0
    %1176 = vdwg.mxu0
    %v1177 = vmul.f32 %v1174, 0.35355338
    %v1178 = vadd.f32 %v1177, %v598
    %v1179 = vsel %vm674, %v1178, -inf
    %1180 = vmax.xlane.f32.xlu0 %v1179
    %v1181 = vpop.xlane.xlu0 %1180
    %v1182 = vsub.f32 %v1178, %v1181
    %v1183 = vmul.f32 %v1182, 1.442695
    %v1184 = vpow.pop %v1183
    %v1185 = vsel %vm674, %v1184, 0.0
    %1186 = vadd.xlane.f32.xlu0 %v1185
    %v1187 = vpop.xlane.xlu0 %1186
    %v1188 = vrcp.pop %v1187
    %v1189 = vmul.f32 %v1184, %v1188
    %1190 = vrot.lane.b32.xlu0 %v666, 48
    %v1191 = vpop.permute.xlu0 %1190
    %v1194 = vsel %vm674, %v1189, 0
    %1196 = vmatprep.subr.mxu0 0.0
    %1197 = vmatpush1.msra.mxu0 %v1191
    %1198 = vmatprep.subr.mxu0 0.0
    %1199 = vmatpush1.msra.mxu0 0.0
    %1200 = vmatprep.subr.mxu0 0.0
    %1201 = vmatpush1.msra.mxu0 0.0
    %1202 = vmatprep.subr.mxu0 0.0
    %1203 = vmatpush1.msra.mxu0 0.0
    %1204 = vmatprep.subr.mxu0 0.0
    %1205 = vmatpush1.msra.mxu0 0.0
    %1206 = vmatprep.subr.mxu0 0.0
    %1207 = vmatpush1.msra.mxu0 0.0
    %1208 = vmatprep.subr.mxu0 0.0
    %1209 = vmatpush1.msra.mxu0 0.0
    %1210 = vmatprep.subr.mxu0 0.0
    %1211 = vmatpush1.msra.mxu0 0.0
    %1212 = vmatprep.subr.mxu0 0.0
    %1213 = vmatpush1.msra.mxu0 0.0
    %1214 = vmatprep.subr.mxu0 0.0
    %1215 = vmatpush1.msra.mxu0 0.0
    %1216 = vmatprep.subr.mxu0 0.0
    %1217 = vmatpush1.msra.mxu0 0.0
    %1218 = vmatprep.subr.mxu0 0.0
    %1219 = vmatpush1.msra.mxu0 0.0
    %1220 = vmatprep.subr.mxu0 0.0
    %1221 = vmatpush1.msra.mxu0 0.0
    %1222 = vmatprep.subr.mxu0 0.0
    %1223 = vmatpush1.msra.mxu0 0.0
    %1224 = vmatprep.subr.mxu0 0.0
    %1225 = vmatpush1.msra.mxu0 0.0
    %1226 = vmatprep.subr.mxu0 0.0
    %1227 = vmatpush1.msra.mxu0 0.0
    %1228 = vmatprep.subr.mxu0 0.0
    %1229 = vmatpush1.msra.mxu0 0.0
    %1230 = vmatprep.subr.mxu0 0.0
    %1231 = vmatpush1.msra.mxu0 0.0
    %1232 = vmatprep.subr.mxu0 0.0
    %1233 = vmatpush1.msra.mxu0 0.0
    %1234 = vmatprep.subr.mxu0 0.0
    %1235 = vmatpush1.msra.mxu0 0.0
    %1236 = vmatprep.subr.mxu0 0.0
    %1237 = vmatpush1.msra.mxu0 0.0
    %1238 = vmatprep.subr.mxu0 0.0
    %1239 = vmatpush1.msra.mxu0 0.0
    %1240 = vmatprep.subr.mxu0 0.0
    %1241 = vmatpush1.msra.mxu0 0.0
    %1242 = vmatprep.subr.mxu0 0.0
    %1243 = vmatpush1.msra.mxu0 0.0
    %1244 = vmatprep.subr.mxu0 0.0
    %1245 = vmatpush1.msra.mxu0 0.0
    %1246 = vmatprep.subr.mxu0 0.0
    %1247 = vmatpush1.msra.mxu0 0.0
    %1248 = vmatprep.subr.mxu0 0.0
    %1249 = vmatpush1.msra.mxu0 0.0
    %1250 = vmatprep.subr.mxu0 0.0
    %1251 = vmatpush1.msra.mxu0 0.0
    %1252 = vmatprep.subr.mxu0 0.0
    %1253 = vmatpush1.msra.mxu0 0.0
    %1254 = vmatprep.subr.mxu0 0.0
    %1255 = vmatpush1.msra.mxu0 0.0
    %1256 = vmatprep.subr.mxu0 0.0
    %1257 = vmatpush1.msra.mxu0 0.0
    %1258 = vmatprep.subr.mxu0 0.0
    %1259 = vmatpush1.msra.mxu0 0.0
    %1260 = vmatprep.mubr.f32.mxu0 0.0
    %1261 = vmatmul.mubr.f32.gmra.mrb[0].mxu0 %v1194
    %v1262 = vpop.f32.mrb[0].mxu0
    %v1263 = vadd.f32 0.0, %v1262
    %v1264 = vpop.f32.mrb[0].mxu0
    %1265 = vdwg.mxu0
    %v1266 = vpack.c.bf16 %v1263, %v1263
    %v1268 = vsel %vm674, %v1266, 0
    %v1271 = vsel %vm588, %v605, 0
    %1273 = vmatprep.subr.bf16.mxu0 0
    %1274 = vmatpush1.bf16.msra.mxu0 %v1271
    %1275 = vmatprep.subr.bf16.mxu0 0
    %1276 = vmatpush1.bf16.msra.mxu0 0
    %1277 = vmatprep.subr.bf16.mxu0 0
    %1278 = vmatpush1.bf16.msra.mxu0 0
    %1279 = vmatprep.subr.bf16.mxu0 0
    %1280 = vmatpush1.bf16.msra.mxu0 0
    %1281 = vmatprep.subr.bf16.mxu0 0
    %1282 = vmatpush1.bf16.msra.mxu0 0
    %1283 = vmatprep.subr.bf16.mxu0 0
    %1284 = vmatpush1.bf16.msra.mxu0 0
    %1285 = vmatprep.subr.bf16.mxu0 0
    %1286 = vmatpush1.bf16.msra.mxu0 0
    %1287 = vmatprep.subr.bf16.mxu0 0
    %1288 = vmatpush1.bf16.msra.mxu0 0
    %1289 = vmatprep.subr.bf16.mxu0 0
    %1290 = vmatpush1.bf16.msra.mxu0 0
    %1291 = vmatprep.subr.bf16.mxu0 0
    %1292 = vmatpush1.bf16.msra.mxu0 0
    %1293 = vmatprep.subr.bf16.mxu0 0
    %1294 = vmatpush1.bf16.msra.mxu0 0
    %1295 = vmatprep.subr.bf16.mxu0 0
    %1296 = vmatpush1.bf16.msra.mxu0 0
    %1297 = vmatprep.subr.bf16.mxu0 0
    %1298 = vmatpush1.bf16.msra.mxu0 0
    %1299 = vmatprep.subr.bf16.mxu0 0
    %1300 = vmatpush1.bf16.msra.mxu0 0
    %1301 = vmatprep.subr.bf16.mxu0 0
    %1302 = vmatpush1.bf16.msra.mxu0 0
    %1303 = vmatprep.subr.bf16.mxu0 0
    %1304 = vmatpush1.bf16.msra.mxu0 0
    %1305 = vmatprep.mubr.bf16.mxu0 0
    %1306 = vmatmul.mubr.bf16.gmra.mrb[0].mxu0 %v1268
    %v1307 = vpop.f32.mrb[0].mxu0
    %v1308 = vadd.f32 0.0, %v1307
    %v1309 = vpop.f32.mrb[0].mxu0
    %v1310 = vpop.f32.mrb[0].mxu0
    %v1311 = vpop.f32.mrb[0].mxu0
    %1312 = vdwg.mxu0
    %v1313 = vadd.f32 %v1094, %v1308
    %1314 = vrot.lane.b32.xlu0 %v666, 104
    %v1315 = vpop.permute.xlu0 %1314
    %1316 = vrot.lane.b32.xlu0 %v666, 72
    %v1317 = vpop.permute.xlu0 %1316
    %v1318 = vsel %vm674, %v1315, 0
    %v1320 = vsel %vm674, %v1317, 0
    %1322 = vmatprep.subr.mxu0 0.0
    %1323 = vmatpush1.xpose.msra.mxu0 %v1320
    %1324 = vmatprep.subr.mxu0 0.0
    %1325 = vmatpush1.xpose.msra.mxu0 0.0
    %1326 = vmatprep.subr.mxu0 0.0
    %1327 = vmatpush1.xpose.msra.mxu0 0.0
    %1328 = vmatprep.subr.mxu0 0.0
    %1329 = vmatpush1.xpose.msra.mxu0 0.0
    %1330 = vmatprep.subr.mxu0 0.0
    %1331 = vmatpush1.xpose.msra.mxu0 0.0
    %1332 = vmatprep.subr.mxu0 0.0
    %1333 = vmatpush1.xpose.msra.mxu0 0.0
    %1334 = vmatprep.subr.mxu0 0.0
    %1335 = vmatpush1.xpose.msra.mxu0 0.0
    %1336 = vmatprep.subr.mxu0 0.0
    %1337 = vmatpush1.xpose.msra.mxu0 0.0
    %1338 = vmatprep.subr.mxu0 0.0
    %1339 = vmatpush1.xpose.msra.mxu0 0.0
    %1340 = vmatprep.subr.mxu0 0.0
    %1341 = vmatpush1.xpose.msra.mxu0 0.0
    %1342 = vmatprep.subr.mxu0 0.0
    %1343 = vmatpush1.xpose.msra.mxu0 0.0
    %1344 = vmatprep.subr.mxu0 0.0
    %1345 = vmatpush1.xpose.msra.mxu0 0.0
    %1346 = vmatprep.subr.mxu0 0.0
    %1347 = vmatpush1.xpose.msra.mxu0 0.0
    %1348 = vmatprep.subr.mxu0 0.0
    %1349 = vmatpush1.xpose.msra.mxu0 0.0
    %1350 = vmatprep.subr.mxu0 0.0
    %1351 = vmatpush1.xpose.msra.mxu0 0.0
    %1352 = vmatprep.subr.mxu0 0.0
    %1353 = vmatpush1.xpose.msra.mxu0 0.0
    %1354 = vmatprep.subr.mxu0 0.0
    %1355 = vmatpush1.xpose.msra.mxu0 0.0
    %1356 = vmatprep.subr.mxu0 0.0
    %1357 = vmatpush1.xpose.msra.mxu0 0.0
    %1358 = vmatprep.subr.mxu0 0.0
    %1359 = vmatpush1.xpose.msra.mxu0 0.0
    %1360 = vmatprep.subr.mxu0 0.0
    %1361 = vmatpush1.xpose.msra.mxu0 0.0
    %1362 = vmatprep.subr.mxu0 0.0
    %1363 = vmatpush1.xpose.msra.mxu0 0.0
    %1364 = vmatprep.subr.mxu0 0.0
    %1365 = vmatpush1.xpose.msra.mxu0 0.0
    %1366 = vmatprep.subr.mxu0 0.0
    %1367 = vmatpush1.xpose.msra.mxu0 0.0
    %1368 = vmatprep.subr.mxu0 0.0
    %1369 = vmatpush1.xpose.msra.mxu0 0.0
    %1370 = vmatprep.subr.mxu0 0.0
    %1371 = vmatpush1.xpose.msra.mxu0 0.0
    %1372 = vmatprep.subr.mxu0 0.0
    %1373 = vmatpush1.xpose.msra.mxu0 0.0
    %1374 = vmatprep.subr.mxu0 0.0
    %1375 = vmatpush1.xpose.msra.mxu0 0.0
    %1376 = vmatprep.subr.mxu0 0.0
    %1377 = vmatpush1.xpose.msra.mxu0 0.0
    %1378 = vmatprep.subr.mxu0 0.0
    %1379 = vmatpush1.xpose.msra.mxu0 0.0
    %1380 = vmatprep.subr.mxu0 0.0
    %1381 = vmatpush1.xpose.msra.mxu0 0.0
    %1382 = vmatprep.subr.mxu0 0.0
    %1383 = vmatpush1.xpose.msra.mxu0 0.0
    %1384 = vmatprep.subr.mxu0 0.0
    %1385 = vmatpush1.xpose.msra.mxu0 0.0
    %1386 = vmatprep.mubr.f32.mxu0 0.0
    %1387 = vmatmul.mubr.f32.gmra.mrb[0].mxu0 %v1318
    %v1388 = vpop.f32.mrb[0].mxu0
    %v1389 = vadd.f32 0.0, %v1388
    %v1390 = vpop.f32.mrb[0].mxu0
    %1391 = vdwg.mxu0
    %v1392 = vmul.f32 %v1389, 0.35355338
    %v1393 = vadd.f32 %v1392, %v598
    %v1394 = vsel %vm674, %v1393, -inf
    %1395 = vmax.xlane.f32.xlu0 %v1394
    %v1396 = vpop.xlane.xlu0 %1395
    %v1397 = vsub.f32 %v1393, %v1396
    %v1398 = vmul.f32 %v1397, 1.442695
    %v1399 = vpow.pop %v1398
    %v1400 = vsel %vm674, %v1399, 0.0
    %1401 = vadd.xlane.f32.xlu0 %v1400
    %v1402 = vpop.xlane.xlu0 %1401
    %v1403 = vrcp.pop %v1402
    %v1404 = vmul.f32 %v1399, %v1403
    %1405 = vrot.lane.b32.xlu0 %v666, 40
    %v1406 = vpop.permute.xlu0 %1405
    %v1409 = vsel %vm674, %v1404, 0
    %1411 = vmatprep.subr.mxu0 0.0
    %1412 = vmatpush1.msra.mxu0 %v1406
    %1413 = vmatprep.subr.mxu0 0.0
    %1414 = vmatpush1.msra.mxu0 0.0
    %1415 = vmatprep.subr.mxu0 0.0
    %1416 = vmatpush1.msra.mxu0 0.0
    %1417 = vmatprep.subr.mxu0 0.0
    %1418 = vmatpush1.msra.mxu0 0.0
    %1419 = vmatprep.subr.mxu0 0.0
    %1420 = vmatpush1.msra.mxu0 0.0
    %1421 = vmatprep.subr.mxu0 0.0
    %1422 = vmatpush1.msra.mxu0 0.0
    %1423 = vmatprep.subr.mxu0 0.0
    %1424 = vmatpush1.msra.mxu0 0.0
    %1425 = vmatprep.subr.mxu0 0.0
    %1426 = vmatpush1.msra.mxu0 0.0
    %1427 = vmatprep.subr.mxu0 0.0
    %1428 = vmatpush1.msra.mxu0 0.0
    %1429 = vmatprep.subr.mxu0 0.0
    %1430 = vmatpush1.msra.mxu0 0.0
    %1431 = vmatprep.subr.mxu0 0.0
    %1432 = vmatpush1.msra.mxu0 0.0
    %1433 = vmatprep.subr.mxu0 0.0
    %1434 = vmatpush1.msra.mxu0 0.0
    %1435 = vmatprep.subr.mxu0 0.0
    %1436 = vmatpush1.msra.mxu0 0.0
    %1437 = vmatprep.subr.mxu0 0.0
    %1438 = vmatpush1.msra.mxu0 0.0
    %1439 = vmatprep.subr.mxu0 0.0
    %1440 = vmatpush1.msra.mxu0 0.0
    %1441 = vmatprep.subr.mxu0 0.0
    %1442 = vmatpush1.msra.mxu0 0.0
    %1443 = vmatprep.subr.mxu0 0.0
    %1444 = vmatpush1.msra.mxu0 0.0
    %1445 = vmatprep.subr.mxu0 0.0
    %1446 = vmatpush1.msra.mxu0 0.0
    %1447 = vmatprep.subr.mxu0 0.0
    %1448 = vmatpush1.msra.mxu0 0.0
    %1449 = vmatprep.subr.mxu0 0.0
    %1450 = vmatpush1.msra.mxu0 0.0
    %1451 = vmatprep.subr.mxu0 0.0
    %1452 = vmatpush1.msra.mxu0 0.0
    %1453 = vmatprep.subr.mxu0 0.0
    %1454 = vmatpush1.msra.mxu0 0.0
    %1455 = vmatprep.subr.mxu0 0.0
    %1456 = vmatpush1.msra.mxu0 0.0
    %1457 = vmatprep.subr.mxu0 0.0
    %1458 = vmatpush1.msra.mxu0 0.0
    %1459 = vmatprep.subr.mxu0 0.0
    %1460 = vmatpush1.msra.mxu0 0.0
    %1461 = vmatprep.subr.mxu0 0.0
    %1462 = vmatpush1.msra.mxu0 0.0
    %1463 = vmatprep.subr.mxu0 0.0
    %1464 = vmatpush1.msra.mxu0 0.0
    %1465 = vmatprep.subr.mxu0 0.0
    %1466 = vmatpush1.msra.mxu0 0.0
    %1467 = vmatprep.subr.mxu0 0.0
    %1468 = vmatpush1.msra.mxu0 0.0
    %1469 = vmatprep.subr.mxu0 0.0
    %1470 = vmatpush1.msra.mxu0 0.0
    %1471 = vmatprep.subr.mxu0 0.0
    %1472 = vmatpush1.msra.mxu0 0.0
    %1473 = vmatprep.subr.mxu0 0.0
    %1474 = vmatpush1.msra.mxu0 0.0
    %1475 = vmatprep.mubr.f32.mxu0 0.0
    %1476 = vmatmul.mubr.f32.gmra.mrb[0].mxu0 %v1409
    %v1477 = vpop.f32.mrb[0].mxu0
    %v1478 = vadd.f32 0.0, %v1477
    %v1479 = vpop.f32.mrb[0].mxu0
    %1480 = vdwg.mxu0
    %v1481 = vpack.c.bf16 %v1478, %v1478
    %v1483 = vsel %vm674, %v1481, 0
    %v1486 = vsel %vm588, %v606, 0
    %1488 = vmatprep.subr.bf16.mxu0 0
    %1489 = vmatpush1.bf16.msra.mxu0 %v1486
    %1490 = vmatprep.subr.bf16.mxu0 0
    %1491 = vmatpush1.bf16.msra.mxu0 0
    %1492 = vmatprep.subr.bf16.mxu0 0
    %1493 = vmatpush1.bf16.msra.mxu0 0
    %1494 = vmatprep.subr.bf16.mxu0 0
    %1495 = vmatpush1.bf16.msra.mxu0 0
    %1496 = vmatprep.subr.bf16.mxu0 0
    %1497 = vmatpush1.bf16.msra.mxu0 0
    %1498 = vmatprep.subr.bf16.mxu0 0
    %1499 = vmatpush1.bf16.msra.mxu0 0
    %1500 = vmatprep.subr.bf16.mxu0 0
    %1501 = vmatpush1.bf16.msra.mxu0 0
    %1502 = vmatprep.subr.bf16.mxu0 0
    %1503 = vmatpush1.bf16.msra.mxu0 0
    %1504 = vmatprep.subr.bf16.mxu0 0
    %1505 = vmatpush1.bf16.msra.mxu0 0
    %1506 = vmatprep.subr.bf16.mxu0 0
    %1507 = vmatpush1.bf16.msra.mxu0 0
    %1508 = vmatprep.subr.bf16.mxu0 0
    %1509 = vmatpush1.bf16.msra.mxu0 0
    %1510 = vmatprep.subr.bf16.mxu0 0
    %1511 = vmatpush1.bf16.msra.mxu0 0
    %1512 = vmatprep.subr.bf16.mxu0 0
    %1513 = vmatpush1.bf16.msra.mxu0 0
    %1514 = vmatprep.subr.bf16.mxu0 0
    %1515 = vmatpush1.bf16.msra.mxu0 0
    %1516 = vmatprep.subr.bf16.mxu0 0
    %1517 = vmatpush1.bf16.msra.mxu0 0
    %1518 = vmatprep.subr.bf16.mxu0 0
    %1519 = vmatpush1.bf16.msra.mxu0 0
    %1520 = vmatprep.mubr.bf16.mxu0 0
    %1521 = vmatmul.mubr.bf16.gmra.mrb[0].mxu0 %v1483
    %v1522 = vpop.f32.mrb[0].mxu0
    %v1523 = vadd.f32 0.0, %v1522
    %v1524 = vpop.f32.mrb[0].mxu0
    %v1525 = vpop.f32.mrb[0].mxu0
    %v1526 = vpop.f32.mrb[0].mxu0
    %1527 = vdwg.mxu0
    %v1528 = vadd.f32 %v1313, %v1523
    %v1529 = vld [vmem:[%s7] sm:$0x1]
    %v1531 = vlaneseq
    %v1532 = vshrl.u32 %v1531, 7
    %v1533 = vsub.s32 0, %v1532
    %v1534 = vrot.slane %v1529, %v1533
    %v1536 = vadd.f32 %v1528, %v1534
    %v1537 = vadd.f32 %v590, %v1536
    %v1538 = vld [vmem:[%s8] sm:$0x1]
    %v1539 = vld [vmem:[%s9] sm:$0x1]
    %v1540 = vsel %vm627, %v1537, 0.0
    %1541 = vadd.xlane.f32.xlu0 %v1540
    %v1542 = vpop.xlane.xlu0 %1541
    %v1543 = vrcp.pop 32.0
    %v1544 = vmul.f32 %v1542, %v1543
    %v1545 = vsub.f32 %v1537, %v1544
    %v1546 = vmul.f32 %v1545, %v1545
    %v1547 = vsel %vm627, %v1546, 0.0
    %1548 = vadd.xlane.f32.xlu0 %v1547
    %v1549 = vpop.xlane.xlu0 %1548
    %v1550 = vmul.f32 %v1549, %v1543
    %v1551 = vadd.f32 %v1550, 1e-05
    %v1552 = vrsqrt.pop %v1551
    %v1553 = vmul.f32 %v1545, %v1552
    %v1555 = vlaneseq
    %v1556 = vshrl.u32 %v1555, 7
    %v1557 = vsub.s32 0, %v1556
    %v1558 = vrot.slane %v1538, %v1557
    %v1560 = vmul.f32 %v1553, %v1558
    %v1562 = vlaneseq
    %v1563 = vshrl.u32 %v1562, 7
    %v1564 = vsub.s32 0, %v1563
    %v1565 = vrot.slane %v1539, %v1564
    %v1567 = vadd.f32 %v1560, %v1565
    %v1568 = vpack.c.bf16 %v1567, %v1567
    %v1569 = vld [vmem:[%s10] sm:$0xf]
    %v1570 = vld [vmem:[%s10 + $0x4] sm:$0xf]
    %v1571 = vld [vmem:[%s10 + $0x8] sm:$0xf]
    %v1572 = vld [vmem:[%s10 + $0xc] sm:$0xf]
    %v1573 = vld [vmem:[%s11] sm:$0x1]
    %v1575 = vlaneseq
    %v1576 = vshrl.u32 %v1575, 7
    %v1577 = vsub.s32 0, %v1576
    %v1578 = vrot.slane %v1573, %v1577
    %v1584 = vunpack.c.l.b16 %v1569
    %v1585 = vunpack.c.l.b16 %v1570
    %v1586 = vunpack.c.l.b16 %v1571
    %v1587 = vunpack.c.l.b16 %v1572
    %v1588 = vpack.c.b16 %v1585, %v1584
    %v1589 = vpack.c.b16 %v1587, %v1586
    %v1593 = vsel %vm627, %v1568, 0
    %1595 = vmatprep.subr.bf16.mxu0 0
    %1596 = vmatpush1.bf16.msra.mxu0 %v1588
    %1597 = vmatprep.subr.bf16.mxu0 0
    %1598 = vmatpush1.bf16.msra.mxu0 %v1589
    %1599 = vmatprep.subr.bf16.mxu0 0
    %1600 = vmatpush1.bf16.msra.mxu0 0
    %1601 = vmatprep.subr.bf16.mxu0 0
    %1602 = vmatpush1.bf16.msra.mxu0 0
    %1603 = vmatprep.subr.bf16.mxu0 0
    %1604 = vmatpush1.bf16.msra.mxu0 0
    %1605 = vmatprep.subr.bf16.mxu0 0
    %1606 = vmatpush1.bf16.msra.mxu0 0
    %1607 = vmatprep.subr.bf16.mxu0 0
    %1608 = vmatpush1.bf16.msra.mxu0 0
    %1609 = vmatprep.subr.bf16.mxu0 0
    %1610 = vmatpush1.bf16.msra.mxu0 0
    %1611 = vmatprep.subr.bf16.mxu0 0
    %1612 = vmatpush1.bf16.msra.mxu0 0
    %1613 = vmatprep.subr.bf16.mxu0 0
    %1614 = vmatpush1.bf16.msra.mxu0 0
    %1615 = vmatprep.subr.bf16.mxu0 0
    %1616 = vmatpush1.bf16.msra.mxu0 0
    %1617 = vmatprep.subr.bf16.mxu0 0
    %1618 = vmatpush1.bf16.msra.mxu0 0
    %1619 = vmatprep.subr.bf16.mxu0 0
    %1620 = vmatpush1.bf16.msra.mxu0 0
    %1621 = vmatprep.subr.bf16.mxu0 0
    %1622 = vmatpush1.bf16.msra.mxu0 0
    %1623 = vmatprep.subr.bf16.mxu0 0
    %1624 = vmatpush1.bf16.msra.mxu0 0
    %1625 = vmatprep.subr.bf16.mxu0 0
    %1626 = vmatpush1.bf16.msra.mxu0 0
    %1627 = vmatprep.mubr.bf16.mxu0 0
    %1628 = vmatmul.mubr.bf16.gmra.mrb[0].mxu0 %v1593
    %v1629 = vpop.f32.mrb[0].mxu0
    %v1630 = vadd.f32 %v1578, %v1629
    %v1631 = vpop.f32.mrb[0].mxu0
    %v1632 = vpop.f32.mrb[0].mxu0
    %v1633 = vpop.f32.mrb[0].mxu0
    %1634 = vdwg.mxu0
    %v1635 = vmax.f32 %v1630, 0.0
    %v1636 = vpack.c.bf16 %v1635, %v1635
    %v1637 = vld [vmem:[%s12] sm:$0xf]
    %v1638 = vld [vmem:[%s12 + $0x4] sm:$0xf]
    %v1639 = vld [vmem:[%s12 + $0x8] sm:$0xf]
    %v1640 = vld [vmem:[%s12 + $0xc] sm:$0xf]
    %v1641 = vld [vmem:[%s12 + $0x10] sm:$0xf]
    %v1642 = vld [vmem:[%s12 + $0x14] sm:$0xf]
    %v1643 = vld [vmem:[%s12 + $0x18] sm:$0xf]
    %v1644 = vld [vmem:[%s12 + $0x1c] sm:$0xf]
    %v1645 = vld [vmem:[%s12 + $0x20] sm:$0xf]
    %v1646 = vld [vmem:[%s12 + $0x24] sm:$0xf]
    %v1647 = vld [vmem:[%s12 + $0x28] sm:$0xf]
    %v1648 = vld [vmem:[%s12 + $0x2c] sm:$0xf]
    %v1649 = vld [vmem:[%s12 + $0x30] sm:$0xf]
    %v1650 = vld [vmem:[%s12 + $0x34] sm:$0xf]
    %v1651 = vld [vmem:[%s12 + $0x38] sm:$0xf]
    %v1652 = vld [vmem:[%s12 + $0x3c] sm:$0xf]
    %v1653 = vld [vmem:[%s13] sm:$0x1]
    %v1655 = vlaneseq
    %v1656 = vshrl.u32 %v1655, 7
    %v1657 = vsub.s32 0, %v1656
    %v1658 = vrot.slane %v1653, %v1657
    %v1676 = vunpack.c.l.b16 %v1637
    %v1677 = vunpack.c.l.b16 %v1638
    %v1678 = vunpack.c.l.b16 %v1639
    %v1679 = vunpack.c.l.b16 %v1640
    %v1680 = vunpack.c.l.b16 %v1641
    %v1681 = vunpack.c.l.b16 %v1642
    %v1682 = vunpack.c.l.b16 %v1643
    %v1683 = vunpack.c.l.b16 %v1644
    %v1684 = vunpack.c.l.b16 %v1645
    %v1685 = vunpack.c.l.b16 %v1646
    %v1686 = vunpack.c.l.b16 %v1647
    %v1687 = vunpack.c.l.b16 %v1648
    %v1688 = vunpack.c.l.b16 %v1649
    %v1689 = vunpack.c.l.b16 %v1650
    %v1690 = vunpack.c.l.b16 %v1651
    %v1691 = vunpack.c.l.b16 %v1652
    %v1692 = vpack.c.b16 %v1677, %v1676
    %v1693 = vpack.c.b16 %v1679, %v1678
    %v1694 = vpack.c.b16 %v1681, %v1680
    %v1695 = vpack.c.b16 %v1683, %v1682
    %v1696 = vpack.c.b16 %v1685, %v1684
    %v1697 = vpack.c.b16 %v1687, %v1686
    %v1698 = vpack.c.b16 %v1689, %v1688
    %v1699 = vpack.c.b16 %v1691, %v1690
    %1708 = vmatprep.subr.bf16.mxu0 0
    %1709 = vmatpush1.bf16.msra.mxu0 %v1692
    %1710 = vmatprep.subr.bf16.mxu0 0
    %1711 = vmatpush1.bf16.msra.mxu0 %v1693
    %1712 = vmatprep.subr.bf16.mxu0 0
    %1713 = vmatpush1.bf16.msra.mxu0 %v1694
    %1714 = vmatprep.subr.bf16.mxu0 0
    %1715 = vmatpush1.bf16.msra.mxu0 %v1695
    %1716 = vmatprep.subr.bf16.mxu0 0
    %1717 = vmatpush1.bf16.msra.mxu0 %v1696
    %1718 = vmatprep.subr.bf16.mxu0 0
    %1719 = vmatpush1.bf16.msra.mxu0 %v1697
    %1720 = vmatprep.subr.bf16.mxu0 0
    %1721 = vmatpush1.bf16.msra.mxu0 %v1698
    %1722 = vmatprep.subr.bf16.mxu0 0
    %1723 = vmatpush1.bf16.msra.mxu0 %v1699
    %1724 = vmatprep.subr.bf16.mxu0 0
    %1725 = vmatpush1.bf16.msra.mxu0 0
    %1726 = vmatprep.subr.bf16.mxu0 0
    %1727 = vmatpush1.bf16.msra.mxu0 0
    %1728 = vmatprep.subr.bf16.mxu0 0
    %1729 = vmatpush1.bf16.msra.mxu0 0
    %1730 = vmatprep.subr.bf16.mxu0 0
    %1731 = vmatpush1.bf16.msra.mxu0 0
    %1732 = vmatprep.subr.bf16.mxu0 0
    %1733 = vmatpush1.bf16.msra.mxu0 0
    %1734 = vmatprep.subr.bf16.mxu0 0
    %1735 = vmatpush1.bf16.msra.mxu0 0
    %1736 = vmatprep.subr.bf16.mxu0 0
    %1737 = vmatpush1.bf16.msra.mxu0 0
    %1738 = vmatprep.subr.bf16.mxu0 0
    %1739 = vmatpush1.bf16.msra.mxu0 0
    %1740 = vmatprep.mubr.bf16.mxu0 0
    %1741 = vmatmul.mubr.bf16.gmra.mrb[0].mxu0 %v1636
    %v1742 = vpop.f32.mrb[0].mxu0
    %v1743 = vadd.f32 %v1658, %v1742
    %v1744 = vpop.f32.mrb[0].mxu0
    %v1745 = vpop.f32.mrb[0].mxu0
    %v1746 = vpop.f32.mrb[0].mxu0
    %1747 = vdwg.mxu0
    %v1748 = vadd.f32 %v1567, %v1743
    %v1749 = vld [vmem:[%s14] sm:$0x1]
    %v1750 = vld [vmem:[%s15] sm:$0x1]
    %v1751 = vsel %vm627, %v1748, 0.0
    %1752 = vadd.xlane.f32.xlu0 %v1751
    %v1753 = vpop.xlane.xlu0 %1752
    %v1754 = vmul.f32 %v1753, %v1543
    %v1755 = vsub.f32 %v1748, %v1754
    %v1756 = vmul.f32 %v1755, %v1755
    %v1757 = vsel %vm627, %v1756, 0.0
    %1758 = vadd.xlane.f32.xlu0 %v1757
    %v1759 = vpop.xlane.xlu0 %1758
    %v1760 = vmul.f32 %v1759, %v1543
    %v1761 = vadd.f32 %v1760, 1e-05
    %v1762 = vrsqrt.pop %v1761
    %v1763 = vmul.f32 %v1755, %v1762
    %v1765 = vlaneseq
    %v1766 = vshrl.u32 %v1765, 7
    %v1767 = vsub.s32 0, %v1766
    %v1768 = vrot.slane %v1749, %v1767
    %v1770 = vmul.f32 %v1763, %v1768
    %v1772 = vlaneseq
    %v1773 = vshrl.u32 %v1772, 7
    %v1774 = vsub.s32 0, %v1773
    %v1775 = vrot.slane %v1750, %v1774
    %v1777 = vadd.f32 %v1770, %v1775
    %s1778 = scalar_lea.vmem %s4, 16
    %v1779 = vld [vmem:[%s1778] sm:$0xf]
    %v1780 = vld [vmem:[%s1778 + $0x4] sm:$0xf]
    %v1781 = vld [vmem:[%s1778 + $0x8] sm:$0xf]
    %v1782 = vld [vmem:[%s1778 + $0xc] sm:$0xf]
    %s1783 = scalar_lea.vmem %s6, 16
    %v1784 = vld [vmem:[%s1783] sm:$0xf]
    %v1785 = vld [vmem:[%s1783 + $0x4] sm:$0xf]
    %v1786 = vld [vmem:[%s1783 + $0x8] sm:$0xf]
    %v1787 = vld [vmem:[%s1783 + $0xc] sm:$0xf]
    %v1788 = vpack.c.bf16 %v1777, %v1777
    %s1789 = scalar_lea.vmem %s5, 1
    %v1790 = vld [vmem:[%s1789] sm:$0x1]
    %v1792 = vlaneseq
    %v1793 = vshrl.u32 %v1792, 7
    %v1794 = vsub.s32 0, %v1793
    %v1795 = vrot.slane %v1790, %v1794
    %v1801 = vunpack.c.l.b16 %v1779
    %v1802 = vunpack.c.l.b16 %v1780
    %v1803 = vunpack.c.l.b16 %v1781
    %v1804 = vunpack.c.l.b16 %v1782
    %v1805 = vpack.c.b16 %v1802, %v1801
    %v1806 = vpack.c.b16 %v1804, %v1803
    %v1810 = vsel %vm627, %v1788, 0
    %1812 = vmatprep.subr.bf16.mxu0 0
    %1813 = vmatpush1.bf16.msra.mxu0 %v1805
    %1814 = vmatprep.subr.bf16.mxu0 0
    %1815 = vmatpush1.bf16.msra.mxu0 %v1806
    %1816 = vmatprep.subr.bf16.mxu0 0
    %1817 = vmatpush1.bf16.msra.mxu0 0
    %1818 = vmatprep.subr.bf16.mxu0 0
    %1819 = vmatpush1.bf16.msra.mxu0 0
    %1820 = vmatprep.subr.bf16.mxu0 0
    %1821 = vmatpush1.bf16.msra.mxu0 0
    %1822 = vmatprep.subr.bf16.mxu0 0
    %1823 = vmatpush1.bf16.msra.mxu0 0
    %1824 = vmatprep.subr.bf16.mxu0 0
    %1825 = vmatpush1.bf16.msra.mxu0 0
    %1826 = vmatprep.subr.bf16.mxu0 0
    %1827 = vmatpush1.bf16.msra.mxu0 0
    %1828 = vmatprep.subr.bf16.mxu0 0
    %1829 = vmatpush1.bf16.msra.mxu0 0
    %1830 = vmatprep.subr.bf16.mxu0 0
    %1831 = vmatpush1.bf16.msra.mxu0 0
    %1832 = vmatprep.subr.bf16.mxu0 0
    %1833 = vmatpush1.bf16.msra.mxu0 0
    %1834 = vmatprep.subr.bf16.mxu0 0
    %1835 = vmatpush1.bf16.msra.mxu0 0
    %1836 = vmatprep.subr.bf16.mxu0 0
    %1837 = vmatpush1.bf16.msra.mxu0 0
    %1838 = vmatprep.subr.bf16.mxu0 0
    %1839 = vmatpush1.bf16.msra.mxu0 0
    %1840 = vmatprep.subr.bf16.mxu0 0
    %1841 = vmatpush1.bf16.msra.mxu0 0
    %1842 = vmatprep.subr.bf16.mxu0 0
    %1843 = vmatpush1.bf16.msra.mxu0 0
    %1844 = vmatprep.mubr.bf16.mxu0 0
    %1845 = vmatmul.mubr.bf16.gmra.mrb[0].mxu0 %v1810
    %v1846 = vpop.f32.mrb[0].mxu0
    %v1847 = vadd.f32 %v1795, %v1846
    %v1848 = vpop.f32.mrb[0].mxu0
    %v1849 = vpop.f32.mrb[0].mxu0
    %v1850 = vpop.f32.mrb[0].mxu0
    %1851 = vdwg.mxu0
    %1853 = vrot.lane.b32.xlu0 %v1847, 96
    %v1854 = vpop.permute.xlu0 %1853
    %v1855 = vsel %vm674, %v1847, 0
    %v1857 = vsel %vm674, %v1854, 0
    %1859 = vmatprep.subr.mxu0 0.0
    %1860 = vmatpush1.xpose.msra.mxu0 %v1857
    %1861 = vmatprep.subr.mxu0 0.0
    %1862 = vmatpush1.xpose.msra.mxu0 0.0
    %1863 = vmatprep.subr.mxu0 0.0
    %1864 = vmatpush1.xpose.msra.mxu0 0.0
    %1865 = vmatprep.subr.mxu0 0.0
    %1866 = vmatpush1.xpose.msra.mxu0 0.0
    %1867 = vmatprep.subr.mxu0 0.0
    %1868 = vmatpush1.xpose.msra.mxu0 0.0
    %1869 = vmatprep.subr.mxu0 0.0
    %1870 = vmatpush1.xpose.msra.mxu0 0.0
    %1871 = vmatprep.subr.mxu0 0.0
    %1872 = vmatpush1.xpose.msra.mxu0 0.0
    %1873 = vmatprep.subr.mxu0 0.0
    %1874 = vmatpush1.xpose.msra.mxu0 0.0
    %1875 = vmatprep.subr.mxu0 0.0
    %1876 = vmatpush1.xpose.msra.mxu0 0.0
    %1877 = vmatprep.subr.mxu0 0.0
    %1878 = vmatpush1.xpose.msra.mxu0 0.0
    %1879 = vmatprep.subr.mxu0 0.0
    %1880 = vmatpush1.xpose.msra.mxu0 0.0
    %1881 = vmatprep.subr.mxu0 0.0
    %1882 = vmatpush1.xpose.msra.mxu0 0.0
    %1883 = vmatprep.subr.mxu0 0.0
    %1884 = vmatpush1.xpose.msra.mxu0 0.0
    %1885 = vmatprep.subr.mxu0 0.0
    %1886 = vmatpush1.xpose.msra.mxu0 0.0
    %1887 = vmatprep.subr.mxu0 0.0
    %1888 = vmatpush1.xpose.msra.mxu0 0.0
    %1889 = vmatprep.subr.mxu0 0.0
    %1890 = vmatpush1.xpose.msra.mxu0 0.0
    %1891 = vmatprep.subr.mxu0 0.0
    %1892 = vmatpush1.xpose.msra.mxu0 0.0
    %1893 = vmatprep.subr.mxu0 0.0
    %1894 = vmatpush1.xpose.msra.mxu0 0.0
    %1895 = vmatprep.subr.mxu0 0.0
    %1896 = vmatpush1.xpose.msra.mxu0 0.0
    %1897 = vmatprep.subr.mxu0 0.0
    %1898 = vmatpush1.xpose.msra.mxu0 0.0
    %1899 = vmatprep.subr.mxu0 0.0
    %1900 = vmatpush1.xpose.msra.mxu0 0.0
    %1901 = vmatprep.subr.mxu0 0.0
    %1902 = vmatpush1.xpose.msra.mxu0 0.0
    %1903 = vmatprep.subr.mxu0 0.0
    %1904 = vmatpush1.xpose.msra.mxu0 0.0
    %1905 = vmatprep.subr.mxu0 0.0
    %1906 = vmatpush1.xpose.msra.mxu0 0.0
    %1907 = vmatprep.subr.mxu0 0.0
    %1908 = vmatpush1.xpose.msra.mxu0 0.0
    %1909 = vmatprep.subr.mxu0 0.0
    %1910 = vmatpush1.xpose.msra.mxu0 0.0
    %1911 = vmatprep.subr.mxu0 0.0
    %1912 = vmatpush1.xpose.msra.mxu0 0.0
    %1913 = vmatprep.subr.mxu0 0.0
    %1914 = vmatpush1.xpose.msra.mxu0 0.0
    %1915 = vmatprep.subr.mxu0 0.0
    %1916 = vmatpush1.xpose.msra.mxu0 0.0
    %1917 = vmatprep.subr.mxu0 0.0
    %1918 = vmatpush1.xpose.msra.mxu0 0.0
    %1919 = vmatprep.subr.mxu0 0.0
    %1920 = vmatpush1.xpose.msra.mxu0 0.0
    %1921 = vmatprep.subr.mxu0 0.0
    %1922 = vmatpush1.xpose.msra.mxu0 0.0
    %1923 = vmatprep.mubr.f32.mxu0 0.0
    %1924 = vmatmul.mubr.f32.gmra.mrb[0].mxu0 %v1855
    %v1925 = vpop.f32.mrb[0].mxu0
    %v1926 = vadd.f32 0.0, %v1925
    %v1927 = vpop.f32.mrb[0].mxu0
    %1928 = vdwg.mxu0
    %v1929 = vmul.f32 %v1926, 0.35355338
    %v1930 = vadd.f32 %v1929, %v598
    %v1931 = vsel %vm674, %v1930, -inf
    %1932 = vmax.xlane.f32.xlu0 %v1931
    %v1933 = vpop.xlane.xlu0 %1932
    %v1934 = vsub.f32 %v1930, %v1933
    %v1935 = vmul.f32 %v1934, 1.442695
    %v1936 = vpow.pop %v1935
    %v1937 = vsel %vm674, %v1936, 0.0
    %1938 = vadd.xlane.f32.xlu0 %v1937
    %v1939 = vpop.xlane.xlu0 %1938
    %v1940 = vrcp.pop %v1939
    %v1941 = vmul.f32 %v1936, %v1940
    %1942 = vrot.lane.b32.xlu0 %v1847, 64
    %v1943 = vpop.permute.xlu0 %1942
    %v1946 = vsel %vm674, %v1941, 0
    %1948 = vmatprep.subr.mxu0 0.0
    %1949 = vmatpush1.msra.mxu0 %v1943
    %1950 = vmatprep.subr.mxu0 0.0
    %1951 = vmatpush1.msra.mxu0 0.0
    %1952 = vmatprep.subr.mxu0 0.0
    %1953 = vmatpush1.msra.mxu0 0.0
    %1954 = vmatprep.subr.mxu0 0.0
    %1955 = vmatpush1.msra.mxu0 0.0
    %1956 = vmatprep.subr.mxu0 0.0
    %1957 = vmatpush1.msra.mxu0 0.0
    %1958 = vmatprep.subr.mxu0 0.0
    %1959 = vmatpush1.msra.mxu0 0.0
    %1960 = vmatprep.subr.mxu0 0.0
    %1961 = vmatpush1.msra.mxu0 0.0
    %1962 = vmatprep.subr.mxu0 0.0
    %1963 = vmatpush1.msra.mxu0 0.0
    %1964 = vmatprep.subr.mxu0 0.0
    %1965 = vmatpush1.msra.mxu0 0.0
    %1966 = vmatprep.subr.mxu0 0.0
    %1967 = vmatpush1.msra.mxu0 0.0
    %1968 = vmatprep.subr.mxu0 0.0
    %1969 = vmatpush1.msra.mxu0 0.0
    %1970 = vmatprep.subr.mxu0 0.0
    %1971 = vmatpush1.msra.mxu0 0.0
    %1972 = vmatprep.subr.mxu0 0.0
    %1973 = vmatpush1.msra.mxu0 0.0
    %1974 = vmatprep.subr.mxu0 0.0
    %1975 = vmatpush1.msra.mxu0 0.0
    %1976 = vmatprep.subr.mxu0 0.0
    %1977 = vmatpush1.msra.mxu0 0.0
    %1978 = vmatprep.subr.mxu0 0.0
    %1979 = vmatpush1.msra.mxu0 0.0
    %1980 = vmatprep.subr.mxu0 0.0
    %1981 = vmatpush1.msra.mxu0 0.0
    %1982 = vmatprep.subr.mxu0 0.0
    %1983 = vmatpush1.msra.mxu0 0.0
    %1984 = vmatprep.subr.mxu0 0.0
    %1985 = vmatpush1.msra.mxu0 0.0
    %1986 = vmatprep.subr.mxu0 0.0
    %1987 = vmatpush1.msra.mxu0 0.0
    %1988 = vmatprep.subr.mxu0 0.0
    %1989 = vmatpush1.msra.mxu0 0.0
    %1990 = vmatprep.subr.mxu0 0.0
    %1991 = vmatpush1.msra.mxu0 0.0
    %1992 = vmatprep.subr.mxu0 0.0
    %1993 = vmatpush1.msra.mxu0 0.0
    %1994 = vmatprep.subr.mxu0 0.0
    %1995 = vmatpush1.msra.mxu0 0.0
    %1996 = vmatprep.subr.mxu0 0.0
    %1997 = vmatpush1.msra.mxu0 0.0
    %1998 = vmatprep.subr.mxu0 0.0
    %1999 = vmatpush1.msra.mxu0 0.0
    %2000 = vmatprep.subr.mxu0 0.0
    %2001 = vmatpush1.msra.mxu0 0.0
    %2002 = vmatprep.subr.mxu0 0.0
    %2003 = vmatpush1.msra.mxu0 0.0
    %2004 = vmatprep.subr.mxu0 0.0
    %2005 = vmatpush1.msra.mxu0 0.0
    %2006 = vmatprep.subr.mxu0 0.0
    %2007 = vmatpush1.msra.mxu0 0.0
    %2008 = vmatprep.subr.mxu0 0.0
    %2009 = vmatpush1.msra.mxu0 0.0
    %2010 = vmatprep.subr.mxu0 0.0
    %2011 = vmatpush1.msra.mxu0 0.0
    %2012 = vmatprep.mubr.f32.mxu0 0.0
    %2013 = vmatmul.mubr.f32.gmra.mrb[0].mxu0 %v1946
    %v2014 = vpop.f32.mrb[0].mxu0
    %v2015 = vadd.f32 0.0, %v2014
    %v2016 = vpop.f32.mrb[0].mxu0
    %2017 = vdwg.mxu0
    %v2018 = vpack.c.bf16 %v2015, %v2015
    %2019 = vrot.lane.b32.xlu0 %v1847, 120
    %v2020 = vpop.permute.xlu0 %2019
    %2021 = vrot.lane.b32.xlu0 %v1847, 88
    %v2022 = vpop.permute.xlu0 %2021
    %v2023 = vsel %vm674, %v2020, 0
    %v2025 = vsel %vm674, %v2022, 0
    %2027 = vmatprep.subr.mxu0 0.0
    %2028 = vmatpush1.xpose.msra.mxu0 %v2025
    %2029 = vmatprep.subr.mxu0 0.0
    %2030 = vmatpush1.xpose.msra.mxu0 0.0
    %2031 = vmatprep.subr.mxu0 0.0
    %2032 = vmatpush1.xpose.msra.mxu0 0.0
    %2033 = vmatprep.subr.mxu0 0.0
    %2034 = vmatpush1.xpose.msra.mxu0 0.0
    %2035 = vmatprep.subr.mxu0 0.0
    %2036 = vmatpush1.xpose.msra.mxu0 0.0
    %2037 = vmatprep.subr.mxu0 0.0
    %2038 = vmatpush1.xpose.msra.mxu0 0.0
    %2039 = vmatprep.subr.mxu0 0.0
    %2040 = vmatpush1.xpose.msra.mxu0 0.0
    %2041 = vmatprep.subr.mxu0 0.0
    %2042 = vmatpush1.xpose.msra.mxu0 0.0
    %2043 = vmatprep.subr.mxu0 0.0
    %2044 = vmatpush1.xpose.msra.mxu0 0.0
    %2045 = vmatprep.subr.mxu0 0.0
    %2046 = vmatpush1.xpose.msra.mxu0 0.0
    %2047 = vmatprep.subr.mxu0 0.0
    %2048 = vmatpush1.xpose.msra.mxu0 0.0
    %2049 = vmatprep.subr.mxu0 0.0
    %2050 = vmatpush1.xpose.msra.mxu0 0.0
    %2051 = vmatprep.subr.mxu0 0.0
    %2052 = vmatpush1.xpose.msra.mxu0 0.0
    %2053 = vmatprep.subr.mxu0 0.0
    %2054 = vmatpush1.xpose.msra.mxu0 0.0
    %2055 = vmatprep.subr.mxu0 0.0
    %2056 = vmatpush1.xpose.msra.mxu0 0.0
    %2057 = vmatprep.subr.mxu0 0.0
    %2058 = vmatpush1.xpose.msra.mxu0 0.0
    %2059 = vmatprep.subr.mxu0 0.0
    %2060 = vmatpush1.xpose.msra.mxu0 0.0
    %2061 = vmatprep.subr.mxu0 0.0
    %2062 = vmatpush1.xpose.msra.mxu0 0.0
    %2063 = vmatprep.subr.mxu0 0.0
    %2064 = vmatpush1.xpose.msra.mxu0 0.0
    %2065 = vmatprep.subr.mxu0 0.0
    %2066 = vmatpush1.xpose.msra.mxu0 0.0
    %2067 = vmatprep.subr.mxu0 0.0
    %2068 = vmatpush1.xpose.msra.mxu0 0.0
    %2069 = vmatprep.subr.mxu0 0.0
    %2070 = vmatpush1.xpose.msra.mxu0 0.0
    %2071 = vmatprep.subr.mxu0 0.0
    %2072 = vmatpush1.xpose.msra.mxu0 0.0
    %2073 = vmatprep.subr.mxu0 0.0
    %2074 = vmatpush1.xpose.msra.mxu0 0.0
    %2075 = vmatprep.subr.mxu0 0.0
    %2076 = vmatpush1.xpose.msra.mxu0 0.0
    %2077 = vmatprep.subr.mxu0 0.0
    %2078 = vmatpush1.xpose.msra.mxu0 0.0
    %2079 = vmatprep.subr.mxu0 0.0
    %2080 = vmatpush1.xpose.msra.mxu0 0.0
    %2081 = vmatprep.subr.mxu0 0.0
    %2082 = vmatpush1.xpose.msra.mxu0 0.0
    %2083 = vmatprep.subr.mxu0 0.0
    %2084 = vmatpush1.xpose.msra.mxu0 0.0
    %2085 = vmatprep.subr.mxu0 0.0
    %2086 = vmatpush1.xpose.msra.mxu0 0.0
    %2087 = vmatprep.subr.mxu0 0.0
    %2088 = vmatpush1.xpose.msra.mxu0 0.0
    %2089 = vmatprep.subr.mxu0 0.0
    %2090 = vmatpush1.xpose.msra.mxu0 0.0
    %2091 = vmatprep.mubr.f32.mxu0 0.0
    %2092 = vmatmul.mubr.f32.gmra.mrb[0].mxu0 %v2023
    %v2093 = vpop.f32.mrb[0].mxu0
    %v2094 = vadd.f32 0.0, %v2093
    %v2095 = vpop.f32.mrb[0].mxu0
    %2096 = vdwg.mxu0
    %v2097 = vmul.f32 %v2094, 0.35355338
    %v2098 = vadd.f32 %v2097, %v598
    %v2099 = vsel %vm674, %v2098, -inf
    %2100 = vmax.xlane.f32.xlu0 %v2099
    %v2101 = vpop.xlane.xlu0 %2100
    %v2102 = vsub.f32 %v2098, %v2101
    %v2103 = vmul.f32 %v2102, 1.442695
    %v2104 = vpow.pop %v2103
    %v2105 = vsel %vm674, %v2104, 0.0
    %2106 = vadd.xlane.f32.xlu0 %v2105
    %v2107 = vpop.xlane.xlu0 %2106
    %v2108 = vrcp.pop %v2107
    %v2109 = vmul.f32 %v2104, %v2108
    %2110 = vrot.lane.b32.xlu0 %v1847, 56
    %v2111 = vpop.permute.xlu0 %2110
    %v2114 = vsel %vm674, %v2109, 0
    %2116 = vmatprep.subr.mxu0 0.0
    %2117 = vmatpush1.msra.mxu0 %v2111
    %2118 = vmatprep.subr.mxu0 0.0
    %2119 = vmatpush1.msra.mxu0 0.0
    %2120 = vmatprep.subr.mxu0 0.0
    %2121 = vmatpush1.msra.mxu0 0.0
    %2122 = vmatprep.subr.mxu0 0.0
    %2123 = vmatpush1.msra.mxu0 0.0
    %2124 = vmatprep.subr.mxu0 0.0
    %2125 = vmatpush1.msra.mxu0 0.0
    %2126 = vmatprep.subr.mxu0 0.0
    %2127 = vmatpush1.msra.mxu0 0.0
    %2128 = vmatprep.subr.mxu0 0.0
    %2129 = vmatpush1.msra.mxu0 0.0
    %2130 = vmatprep.subr.mxu0 0.0
    %2131 = vmatpush1.msra.mxu0 0.0
    %2132 = vmatprep.subr.mxu0 0.0
    %2133 = vmatpush1.msra.mxu0 0.0
    %2134 = vmatprep.subr.mxu0 0.0
    %2135 = vmatpush1.msra.mxu0 0.0
    %2136 = vmatprep.subr.mxu0 0.0
    %2137 = vmatpush1.msra.mxu0 0.0
    %2138 = vmatprep.subr.mxu0 0.0
    %2139 = vmatpush1.msra.mxu0 0.0
    %2140 = vmatprep.subr.mxu0 0.0
    %2141 = vmatpush1.msra.mxu0 0.0
    %2142 = vmatprep.subr.mxu0 0.0
    %2143 = vmatpush1.msra.mxu0 0.0
    %2144 = vmatprep.subr.mxu0 0.0
    %2145 = vmatpush1.msra.mxu0 0.0
    %2146 = vmatprep.subr.mxu0 0.0
    %2147 = vmatpush1.msra.mxu0 0.0
    %2148 = vmatprep.subr.mxu0 0.0
    %2149 = vmatpush1.msra.mxu0 0.0
    %2150 = vmatprep.subr.mxu0 0.0
    %2151 = vmatpush1.msra.mxu0 0.0
    %2152 = vmatprep.subr.mxu0 0.0
    %2153 = vmatpush1.msra.mxu0 0.0
    %2154 = vmatprep.subr.mxu0 0.0
    %2155 = vmatpush1.msra.mxu0 0.0
    %2156 = vmatprep.subr.mxu0 0.0
    %2157 = vmatpush1.msra.mxu0 0.0
    %2158 = vmatprep.subr.mxu0 0.0
    %2159 = vmatpush1.msra.mxu0 0.0
    %2160 = vmatprep.subr.mxu0 0.0
    %2161 = vmatpush1.msra.mxu0 0.0
    %2162 = vmatprep.subr.mxu0 0.0
    %2163 = vmatpush1.msra.mxu0 0.0
    %2164 = vmatprep.subr.mxu0 0.0
    %2165 = vmatpush1.msra.mxu0 0.0
    %2166 = vmatprep.subr.mxu0 0.0
    %2167 = vmatpush1.msra.mxu0 0.0
    %2168 = vmatprep.subr.mxu0 0.0
    %2169 = vmatpush1.msra.mxu0 0.0
    %2170 = vmatprep.subr.mxu0 0.0
    %2171 = vmatpush1.msra.mxu0 0.0
    %2172 = vmatprep.subr.mxu0 0.0
    %2173 = vmatpush1.msra.mxu0 0.0
    %2174 = vmatprep.subr.mxu0 0.0
    %2175 = vmatpush1.msra.mxu0 0.0
    %2176 = vmatprep.subr.mxu0 0.0
    %2177 = vmatpush1.msra.mxu0 0.0
    %2178 = vmatprep.subr.mxu0 0.0
    %2179 = vmatpush1.msra.mxu0 0.0
    %2180 = vmatprep.mubr.f32.mxu0 0.0
    %2181 = vmatmul.mubr.f32.gmra.mrb[0].mxu0 %v2114
    %v2182 = vpop.f32.mrb[0].mxu0
    %v2183 = vadd.f32 0.0, %v2182
    %v2184 = vpop.f32.mrb[0].mxu0
    %2185 = vdwg.mxu0
    %v2186 = vpack.c.bf16 %v2183, %v2183
    %v2188 = vsel %vm674, %v2186, 0
    %v2191 = vsel %vm588, %v1785, 0
    %2193 = vmatprep.subr.bf16.mxu0 0
    %2194 = vmatpush1.bf16.msra.mxu0 %v2191
    %2195 = vmatprep.subr.bf16.mxu0 0
    %2196 = vmatpush1.bf16.msra.mxu0 0
    %2197 = vmatprep.subr.bf16.mxu0 0
    %2198 = vmatpush1.bf16.msra.mxu0 0
    %2199 = vmatprep.subr.bf16.mxu0 0
    %2200 = vmatpush1.bf16.msra.mxu0 0
    %2201 = vmatprep.subr.bf16.mxu0 0
    %2202 = vmatpush1.bf16.msra.mxu0 0
    %2203 = vmatprep.subr.bf16.mxu0 0
    %2204 = vmatpush1.bf16.msra.mxu0 0
    %2205 = vmatprep.subr.bf16.mxu0 0
    %2206 = vmatpush1.bf16.msra.mxu0 0
    %2207 = vmatprep.subr.bf16.mxu0 0
    %2208 = vmatpush1.bf16.msra.mxu0 0
    %2209 = vmatprep.subr.bf16.mxu0 0
    %2210 = vmatpush1.bf16.msra.mxu0 0
    %2211 = vmatprep.subr.bf16.mxu0 0
    %2212 = vmatpush1.bf16.msra.mxu0 0
    %2213 = vmatprep.subr.bf16.mxu0 0
    %2214 = vmatpush1.bf16.msra.mxu0 0
    %2215 = vmatprep.subr.bf16.mxu0 0
    %2216 = vmatpush1.bf16.msra.mxu0 0
    %2217 = vmatprep.subr.bf16.mxu0 0
    %2218 = vmatpush1.bf16.msra.mxu0 0
    %2219 = vmatprep.subr.bf16.mxu0 0
    %2220 = vmatpush1.bf16.msra.mxu0 0
    %2221 = vmatprep.subr.bf16.mxu0 0
    %2222 = vmatpush1.bf16.msra.mxu0 0
    %2223 = vmatprep.subr.bf16.mxu0 0
    %2224 = vmatpush1.bf16.msra.mxu0 0
    %2225 = vmatprep.mubr.bf16.mxu0 0
    %2226 = vmatmul.mubr.bf16.gmra.mrb[0].mxu0 %v2188
    %v2227 = vpop.f32.mrb[0].mxu0
    %v2228 = vadd.f32 0.0, %v2227
    %v2229 = vpop.f32.mrb[0].mxu0
    %v2230 = vpop.f32.mrb[0].mxu0
    %v2231 = vpop.f32.mrb[0].mxu0
    %2232 = vdwg.mxu0
    %v2234 = vsel %vm674, %v2018, 0
    %v2237 = vsel %vm588, %v1784, 0
    %2239 = vmatprep.subr.bf16.mxu0 0
    %2240 = vmatpush1.bf16.msra.mxu0 %v2237
    %2241 = vmatprep.subr.bf16.mxu0 0
    %2242 = vmatpush1.bf16.msra.mxu0 0
    %2243 = vmatprep.subr.bf16.mxu0 0
    %2244 = vmatpush1.bf16.msra.mxu0 0
    %2245 = vmatprep.subr.bf16.mxu0 0
    %2246 = vmatpush1.bf16.msra.mxu0 0
    %2247 = vmatprep.subr.bf16.mxu0 0
    %2248 = vmatpush1.bf16.msra.mxu0 0
    %2249 = vmatprep.subr.bf16.mxu0 0
    %2250 = vmatpush1.bf16.msra.mxu0 0
    %2251 = vmatprep.subr.bf16.mxu0 0
    %2252 = vmatpush1.bf16.msra.mxu0 0
    %2253 = vmatprep.subr.bf16.mxu0 0
    %2254 = vmatpush1.bf16.msra.mxu0 0
    %2255 = vmatprep.subr.bf16.mxu0 0
    %2256 = vmatpush1.bf16.msra.mxu0 0
    %2257 = vmatprep.subr.bf16.mxu0 0
    %2258 = vmatpush1.bf16.msra.mxu0 0
    %2259 = vmatprep.subr.bf16.mxu0 0
    %2260 = vmatpush1.bf16.msra.mxu0 0
    %2261 = vmatprep.subr.bf16.mxu0 0
    %2262 = vmatpush1.bf16.msra.mxu0 0
    %2263 = vmatprep.subr.bf16.mxu0 0
    %2264 = vmatpush1.bf16.msra.mxu0 0
    %2265 = vmatprep.subr.bf16.mxu0 0
    %2266 = vmatpush1.bf16.msra.mxu0 0
    %2267 = vmatprep.subr.bf16.mxu0 0
    %2268 = vmatpush1.bf16.msra.mxu0 0
    %2269 = vmatprep.subr.bf16.mxu0 0
    %2270 = vmatpush1.bf16.msra.mxu0 0
    %2271 = vmatprep.mubr.bf16.mxu0 0
    %2272 = vmatmul.mubr.bf16.gmra.mrb[0].mxu0 %v2234
    %v2273 = vpop.f32.mrb[0].mxu0
    %v2274 = vadd.f32 %v2228, %v2273
    %v2275 = vpop.f32.mrb[0].mxu0
    %v2276 = vpop.f32.mrb[0].mxu0
    %v2277 = vpop.f32.mrb[0].mxu0
    %2278 = vdwg.mxu0
    %2279 = vrot.lane.b32.xlu0 %v1847, 112
    %v2280 = vpop.permute.xlu0 %2279
    %2281 = vrot.lane.b32.xlu0 %v1847, 80
    %v2282 = vpop.permute.xlu0 %2281
    %v2283 = vsel %vm674, %v2280, 0
    %v2285 = vsel %vm674, %v2282, 0
    %2287 = vmatprep.subr.mxu0 0.0
    %2288 = vmatpush1.xpose.msra.mxu0 %v2285
    %2289 = vmatprep.subr.mxu0 0.0
    %2290 = vmatpush1.xpose.msra.mxu0 0.0
    %2291 = vmatprep.subr.mxu0 0.0
    %2292 = vmatpush1.xpose.msra.mxu0 0.0
    %2293 = vmatprep.subr.mxu0 0.0
    %2294 = vmatpush1.xpose.msra.mxu0 0.0
    %2295 = vmatprep.subr.mxu0 0.0
    %2296 = vmatpush1.xpose.msra.mxu0 0.0
    %2297 = vmatprep.subr.mxu0 0.0
    %2298 = vmatpush1.xpose.msra.mxu0 0.0
    %2299 = vmatprep.subr.mxu0 0.0
    %2300 = vmatpush1.xpose.msra.mxu0 0.0
    %2301 = vmatprep.subr.mxu0 0.0
    %2302 = vmatpush1.xpose.msra.mxu0 0.0
    %2303 = vmatprep.subr.mxu0 0.0
    %2304 = vmatpush1.xpose.msra.mxu0 0.0
    %2305 = vmatprep.subr.mxu0 0.0
    %2306 = vmatpush1.xpose.msra.mxu0 0.0
    %2307 = vmatprep.subr.mxu0 0.0
    %2308 = vmatpush1.xpose.msra.mxu0 0.0
    %2309 = vmatprep.subr.mxu0 0.0
    %2310 = vmatpush1.xpose.msra.mxu0 0.0
    %2311 = vmatprep.subr.mxu0 0.0
    %2312 = vmatpush1.xpose.msra.mxu0 0.0
    %2313 = vmatprep.subr.mxu0 0.0
    %2314 = vmatpush1.xpose.msra.mxu0 0.0
    %2315 = vmatprep.subr.mxu0 0.0
    %2316 = vmatpush1.xpose.msra.mxu0 0.0
    %2317 = vmatprep.subr.mxu0 0.0
    %2318 = vmatpush1.xpose.msra.mxu0 0.0
    %2319 = vmatprep.subr.mxu0 0.0
    %2320 = vmatpush1.xpose.msra.mxu0 0.0
    %2321 = vmatprep.subr.mxu0 0.0
    %2322 = vmatpush1.xpose.msra.mxu0 0.0
    %2323 = vmatprep.subr.mxu0 0.0
    %2324 = vmatpush1.xpose.msra.mxu0 0.0
    %2325 = vmatprep.subr.mxu0 0.0
    %2326 = vmatpush1.xpose.msra.mxu0 0.0
    %2327 = vmatprep.subr.mxu0 0.0
    %2328 = vmatpush1.xpose.msra.mxu0 0.0
    %2329 = vmatprep.subr.mxu0 0.0
    %2330 = vmatpush1.xpose.msra.mxu0 0.0
    %2331 = vmatprep.subr.mxu0 0.0
    %2332 = vmatpush1.xpose.msra.mxu0 0.0
    %2333 = vmatprep.subr.mxu0 0.0
    %2334 = vmatpush1.xpose.msra.mxu0 0.0
    %2335 = vmatprep.subr.mxu0 0.0
    %2336 = vmatpush1.xpose.msra.mxu0 0.0
    %2337 = vmatprep.subr.mxu0 0.0
    %2338 = vmatpush1.xpose.msra.mxu0 0.0
    %2339 = vmatprep.subr.mxu0 0.0
    %2340 = vmatpush1.xpose.msra.mxu0 0.0
    %2341 = vmatprep.subr.mxu0 0.0
    %2342 = vmatpush1.xpose.msra.mxu0 0.0
    %2343 = vmatprep.subr.mxu0 0.0
    %2344 = vmatpush1.xpose.msra.mxu0 0.0
    %2345 = vmatprep.subr.mxu0 0.0
    %2346 = vmatpush1.xpose.msra.mxu0 0.0
    %2347 = vmatprep.subr.mxu0 0.0
    %2348 = vmatpush1.xpose.msra.mxu0 0.0
    %2349 = vmatprep.subr.mxu0 0.0
    %2350 = vmatpush1.xpose.msra.mxu0 0.0
    %2351 = vmatprep.mubr.f32.mxu0 0.0
    %2352 = vmatmul.mubr.f32.gmra.mrb[0].mxu0 %v2283
    %v2353 = vpop.f32.mrb[0].mxu0
    %v2354 = vadd.f32 0.0, %v2353
    %v2355 = vpop.f32.mrb[0].mxu0
    %2356 = vdwg.mxu0
    %v2357 = vmul.f32 %v2354, 0.35355338
    %v2358 = vadd.f32 %v2357, %v598
    %v2359 = vsel %vm674, %v2358, -inf
    %2360 = vmax.xlane.f32.xlu0 %v2359
    %v2361 = vpop.xlane.xlu0 %2360
    %v2362 = vsub.f32 %v2358, %v2361
    %v2363 = vmul.f32 %v2362, 1.442695
    %v2364 = vpow.pop %v2363
    %v2365 = vsel %vm674, %v2364, 0.0
    %2366 = vadd.xlane.f32.xlu0 %v2365
    %v2367 = vpop.xlane.xlu0 %2366
    %v2368 = vrcp.pop %v2367
    %v2369 = vmul.f32 %v2364, %v2368
    %2370 = vrot.lane.b32.xlu0 %v1847, 48
    %v2371 = vpop.permute.xlu0 %2370
    %v2374 = vsel %vm674, %v2369, 0
    %2376 = vmatprep.subr.mxu0 0.0
    %2377 = vmatpush1.msra.mxu0 %v2371
    %2378 = vmatprep.subr.mxu0 0.0
    %2379 = vmatpush1.msra.mxu0 0.0
    %2380 = vmatprep.subr.mxu0 0.0
    %2381 = vmatpush1.msra.mxu0 0.0
    %2382 = vmatprep.subr.mxu0 0.0
    %2383 = vmatpush1.msra.mxu0 0.0
    %2384 = vmatprep.subr.mxu0 0.0
    %2385 = vmatpush1.msra.mxu0 0.0
    %2386 = vmatprep.subr.mxu0 0.0
    %2387 = vmatpush1.msra.mxu0 0.0
    %2388 = vmatprep.subr.mxu0 0.0
    %2389 = vmatpush1.msra.mxu0 0.0
    %2390 = vmatprep.subr.mxu0 0.0
    %2391 = vmatpush1.msra.mxu0 0.0
    %2392 = vmatprep.subr.mxu0 0.0
    %2393 = vmatpush1.msra.mxu0 0.0
    %2394 = vmatprep.subr.mxu0 0.0
    %2395 = vmatpush1.msra.mxu0 0.0
    %2396 = vmatprep.subr.mxu0 0.0
    %2397 = vmatpush1.msra.mxu0 0.0
    %2398 = vmatprep.subr.mxu0 0.0
    %2399 = vmatpush1.msra.mxu0 0.0
    %2400 = vmatprep.subr.mxu0 0.0
    %2401 = vmatpush1.msra.mxu0 0.0
    %2402 = vmatprep.subr.mxu0 0.0
    %2403 = vmatpush1.msra.mxu0 0.0
    %2404 = vmatprep.subr.mxu0 0.0
    %2405 = vmatpush1.msra.mxu0 0.0
    %2406 = vmatprep.subr.mxu0 0.0
    %2407 = vmatpush1.msra.mxu0 0.0
    %2408 = vmatprep.subr.mxu0 0.0
    %2409 = vmatpush1.msra.mxu0 0.0
    %2410 = vmatprep.subr.mxu0 0.0
    %2411 = vmatpush1.msra.mxu0 0.0
    %2412 = vmatprep.subr.mxu0 0.0
    %2413 = vmatpush1.msra.mxu0 0.0
    %2414 = vmatprep.subr.mxu0 0.0
    %2415 = vmatpush1.msra.mxu0 0.0
    %2416 = vmatprep.subr.mxu0 0.0
    %2417 = vmatpush1.msra.mxu0 0.0
    %2418 = vmatprep.subr.mxu0 0.0
    %2419 = vmatpush1.msra.mxu0 0.0
    %2420 = vmatprep.subr.mxu0 0.0
    %2421 = vmatpush1.msra.mxu0 0.0
    %2422 = vmatprep.subr.mxu0 0.0
    %2423 = vmatpush1.msra.mxu0 0.0
    %2424 = vmatprep.subr.mxu0 0.0
    %2425 = vmatpush1.msra.mxu0 0.0
    %2426 = vmatprep.subr.mxu0 0.0
    %2427 = vmatpush1.msra.mxu0 0.0
    %2428 = vmatprep.subr.mxu0 0.0
    %2429 = vmatpush1.msra.mxu0 0.0
    %2430 = vmatprep.subr.mxu0 0.0
    %2431 = vmatpush1.msra.mxu0 0.0
    %2432 = vmatprep.subr.mxu0 0.0
    %2433 = vmatpush1.msra.mxu0 0.0
    %2434 = vmatprep.subr.mxu0 0.0
    %2435 = vmatpush1.msra.mxu0 0.0
    %2436 = vmatprep.subr.mxu0 0.0
    %2437 = vmatpush1.msra.mxu0 0.0
    %2438 = vmatprep.subr.mxu0 0.0
    %2439 = vmatpush1.msra.mxu0 0.0
    %2440 = vmatprep.mubr.f32.mxu0 0.0
    %2441 = vmatmul.mubr.f32.gmra.mrb[0].mxu0 %v2374
    %v2442 = vpop.f32.mrb[0].mxu0
    %v2443 = vadd.f32 0.0, %v2442
    %v2444 = vpop.f32.mrb[0].mxu0
    %2445 = vdwg.mxu0
    %v2446 = vpack.c.bf16 %v2443, %v2443
    %v2448 = vsel %vm674, %v2446, 0
    %v2451 = vsel %vm588, %v1786, 0
    %2453 = vmatprep.subr.bf16.mxu0 0
    %2454 = vmatpush1.bf16.msra.mxu0 %v2451
    %2455 = vmatprep.subr.bf16.mxu0 0
    %2456 = vmatpush1.bf16.msra.mxu0 0
    %2457 = vmatprep.subr.bf16.mxu0 0
    %2458 = vmatpush1.bf16.msra.mxu0 0
    %2459 = vmatprep.subr.bf16.mxu0 0
    %2460 = vmatpush1.bf16.msra.mxu0 0
    %2461 = vmatprep.subr.bf16.mxu0 0
    %2462 = vmatpush1.bf16.msra.mxu0 0
    %2463 = vmatprep.subr.bf16.mxu0 0
    %2464 = vmatpush1.bf16.msra.mxu0 0
    %2465 = vmatprep.subr.bf16.mxu0 0
    %2466 = vmatpush1.bf16.msra.mxu0 0
    %2467 = vmatprep.subr.bf16.mxu0 0
    %2468 = vmatpush1.bf16.msra.mxu0 0
    %2469 = vmatprep.subr.bf16.mxu0 0
    %2470 = vmatpush1.bf16.msra.mxu0 0
    %2471 = vmatprep.subr.bf16.mxu0 0
    %2472 = vmatpush1.bf16.msra.mxu0 0
    %2473 = vmatprep.subr.bf16.mxu0 0
    %2474 = vmatpush1.bf16.msra.mxu0 0
    %2475 = vmatprep.subr.bf16.mxu0 0
    %2476 = vmatpush1.bf16.msra.mxu0 0
    %2477 = vmatprep.subr.bf16.mxu0 0
    %2478 = vmatpush1.bf16.msra.mxu0 0
    %2479 = vmatprep.subr.bf16.mxu0 0
    %2480 = vmatpush1.bf16.msra.mxu0 0
    %2481 = vmatprep.subr.bf16.mxu0 0
    %2482 = vmatpush1.bf16.msra.mxu0 0
    %2483 = vmatprep.subr.bf16.mxu0 0
    %2484 = vmatpush1.bf16.msra.mxu0 0
    %2485 = vmatprep.mubr.bf16.mxu0 0
    %2486 = vmatmul.mubr.bf16.gmra.mrb[0].mxu0 %v2448
    %v2487 = vpop.f32.mrb[0].mxu0
    %v2488 = vadd.f32 0.0, %v2487
    %v2489 = vpop.f32.mrb[0].mxu0
    %v2490 = vpop.f32.mrb[0].mxu0
    %v2491 = vpop.f32.mrb[0].mxu0
    %2492 = vdwg.mxu0
    %v2493 = vadd.f32 %v2274, %v2488
    %2494 = vrot.lane.b32.xlu0 %v1847, 104
    %v2495 = vpop.permute.xlu0 %2494
    %2496 = vrot.lane.b32.xlu0 %v1847, 72
    %v2497 = vpop.permute.xlu0 %2496
    %v2498 = vsel %vm674, %v2495, 0
    %v2500 = vsel %vm674, %v2497, 0
    %2502 = vmatprep.subr.mxu0 0.0
    %2503 = vmatpush1.xpose.msra.mxu0 %v2500
    %2504 = vmatprep.subr.mxu0 0.0
    %2505 = vmatpush1.xpose.msra.mxu0 0.0
    %2506 = vmatprep.subr.mxu0 0.0
    %2507 = vmatpush1.xpose.msra.mxu0 0.0
    %2508 = vmatprep.subr.mxu0 0.0
    %2509 = vmatpush1.xpose.msra.mxu0 0.0
    %2510 = vmatprep.subr.mxu0 0.0
    %2511 = vmatpush1.xpose.msra.mxu0 0.0
    %2512 = vmatprep.subr.mxu0 0.0
    %2513 = vmatpush1.xpose.msra.mxu0 0.0
    %2514 = vmatprep.subr.mxu0 0.0
    %2515 = vmatpush1.xpose.msra.mxu0 0.0
    %2516 = vmatprep.subr.mxu0 0.0
    %2517 = vmatpush1.xpose.msra.mxu0 0.0
    %2518 = vmatprep.subr.mxu0 0.0
    %2519 = vmatpush1.xpose.msra.mxu0 0.0
    %2520 = vmatprep.subr.mxu0 0.0
    %2521 = vmatpush1.xpose.msra.mxu0 0.0
    %2522 = vmatprep.subr.mxu0 0.0
    %2523 = vmatpush1.xpose.msra.mxu0 0.0
    %2524 = vmatprep.subr.mxu0 0.0
    %2525 = vmatpush1.xpose.msra.mxu0 0.0
    %2526 = vmatprep.subr.mxu0 0.0
    %2527 = vmatpush1.xpose.msra.mxu0 0.0
    %2528 = vmatprep.subr.mxu0 0.0
    %2529 = vmatpush1.xpose.msra.mxu0 0.0
    %2530 = vmatprep.subr.mxu0 0.0
    %2531 = vmatpush1.xpose.msra.mxu0 0.0
    %2532 = vmatprep.subr.mxu0 0.0
    %2533 = vmatpush1.xpose.msra.mxu0 0.0
    %2534 = vmatprep.subr.mxu0 0.0
    %2535 = vmatpush1.xpose.msra.mxu0 0.0
    %2536 = vmatprep.subr.mxu0 0.0
    %2537 = vmatpush1.xpose.msra.mxu0 0.0
    %2538 = vmatprep.subr.mxu0 0.0
    %2539 = vmatpush1.xpose.msra.mxu0 0.0
    %2540 = vmatprep.subr.mxu0 0.0
    %2541 = vmatpush1.xpose.msra.mxu0 0.0
    %2542 = vmatprep.subr.mxu0 0.0
    %2543 = vmatpush1.xpose.msra.mxu0 0.0
    %2544 = vmatprep.subr.mxu0 0.0
    %2545 = vmatpush1.xpose.msra.mxu0 0.0
    %2546 = vmatprep.subr.mxu0 0.0
    %2547 = vmatpush1.xpose.msra.mxu0 0.0
    %2548 = vmatprep.subr.mxu0 0.0
    %2549 = vmatpush1.xpose.msra.mxu0 0.0
    %2550 = vmatprep.subr.mxu0 0.0
    %2551 = vmatpush1.xpose.msra.mxu0 0.0
    %2552 = vmatprep.subr.mxu0 0.0
    %2553 = vmatpush1.xpose.msra.mxu0 0.0
    %2554 = vmatprep.subr.mxu0 0.0
    %2555 = vmatpush1.xpose.msra.mxu0 0.0
    %2556 = vmatprep.subr.mxu0 0.0
    %2557 = vmatpush1.xpose.msra.mxu0 0.0
    %2558 = vmatprep.subr.mxu0 0.0
    %2559 = vmatpush1.xpose.msra.mxu0 0.0
    %2560 = vmatprep.subr.mxu0 0.0
    %2561 = vmatpush1.xpose.msra.mxu0 0.0
    %2562 = vmatprep.subr.mxu0 0.0
    %2563 = vmatpush1.xpose.msra.mxu0 0.0
    %2564 = vmatprep.subr.mxu0 0.0
    %2565 = vmatpush1.xpose.msra.mxu0 0.0
    %2566 = vmatprep.mubr.f32.mxu0 0.0
    %2567 = vmatmul.mubr.f32.gmra.mrb[0].mxu0 %v2498
    %v2568 = vpop.f32.mrb[0].mxu0
    %v2569 = vadd.f32 0.0, %v2568
    %v2570 = vpop.f32.mrb[0].mxu0
    %2571 = vdwg.mxu0
    %v2572 = vmul.f32 %v2569, 0.35355338
    %v2573 = vadd.f32 %v2572, %v598
    %v2574 = vsel %vm674, %v2573, -inf
    %2575 = vmax.xlane.f32.xlu0 %v2574
    %v2576 = vpop.xlane.xlu0 %2575
    %v2577 = vsub.f32 %v2573, %v2576
    %v2578 = vmul.f32 %v2577, 1.442695
    %v2579 = vpow.pop %v2578
    %v2580 = vsel %vm674, %v2579, 0.0
    %2581 = vadd.xlane.f32.xlu0 %v2580
    %v2582 = vpop.xlane.xlu0 %2581
    %v2583 = vrcp.pop %v2582
    %v2584 = vmul.f32 %v2579, %v2583
    %2585 = vrot.lane.b32.xlu0 %v1847, 40
    %v2586 = vpop.permute.xlu0 %2585
    %v2589 = vsel %vm674, %v2584, 0
    %2591 = vmatprep.subr.mxu0 0.0
    %2592 = vmatpush1.msra.mxu0 %v2586
    %2593 = vmatprep.subr.mxu0 0.0
    %2594 = vmatpush1.msra.mxu0 0.0
    %2595 = vmatprep.subr.mxu0 0.0
    %2596 = vmatpush1.msra.mxu0 0.0
    %2597 = vmatprep.subr.mxu0 0.0
    %2598 = vmatpush1.msra.mxu0 0.0
    %2599 = vmatprep.subr.mxu0 0.0
    %2600 = vmatpush1.msra.mxu0 0.0
    %2601 = vmatprep.subr.mxu0 0.0
    %2602 = vmatpush1.msra.mxu0 0.0
    %2603 = vmatprep.subr.mxu0 0.0
    %2604 = vmatpush1.msra.mxu0 0.0
    %2605 = vmatprep.subr.mxu0 0.0
    %2606 = vmatpush1.msra.mxu0 0.0
    %2607 = vmatprep.subr.mxu0 0.0
    %2608 = vmatpush1.msra.mxu0 0.0
    %2609 = vmatprep.subr.mxu0 0.0
    %2610 = vmatpush1.msra.mxu0 0.0
    %2611 = vmatprep.subr.mxu0 0.0
    %2612 = vmatpush1.msra.mxu0 0.0
    %2613 = vmatprep.subr.mxu0 0.0
    %2614 = vmatpush1.msra.mxu0 0.0
    %2615 = vmatprep.subr.mxu0 0.0
    %2616 = vmatpush1.msra.mxu0 0.0
    %2617 = vmatprep.subr.mxu0 0.0
    %2618 = vmatpush1.msra.mxu0 0.0
    %2619 = vmatprep.subr.mxu0 0.0
    %2620 = vmatpush1.msra.mxu0 0.0
    %2621 = vmatprep.subr.mxu0 0.0
    %2622 = vmatpush1.msra.mxu0 0.0
    %2623 = vmatprep.subr.mxu0 0.0
    %2624 = vmatpush1.msra.mxu0 0.0
    %2625 = vmatprep.subr.mxu0 0.0
    %2626 = vmatpush1.msra.mxu0 0.0
    %2627 = vmatprep.subr.mxu0 0.0
    %2628 = vmatpush1.msra.mxu0 0.0
    %2629 = vmatprep.subr.mxu0 0.0
    %2630 = vmatpush1.msra.mxu0 0.0
    %2631 = vmatprep.subr.mxu0 0.0
    %2632 = vmatpush1.msra.mxu0 0.0
    %2633 = vmatprep.subr.mxu0 0.0
    %2634 = vmatpush1.msra.mxu0 0.0
    %2635 = vmatprep.subr.mxu0 0.0
    %2636 = vmatpush1.msra.mxu0 0.0
    %2637 = vmatprep.subr.mxu0 0.0
    %2638 = vmatpush1.msra.mxu0 0.0
    %2639 = vmatprep.subr.mxu0 0.0
    %2640 = vmatpush1.msra.mxu0 0.0
    %2641 = vmatprep.subr.mxu0 0.0
    %2642 = vmatpush1.msra.mxu0 0.0
    %2643 = vmatprep.subr.mxu0 0.0
    %2644 = vmatpush1.msra.mxu0 0.0
    %2645 = vmatprep.subr.mxu0 0.0
    %2646 = vmatpush1.msra.mxu0 0.0
    %2647 = vmatprep.subr.mxu0 0.0
    %2648 = vmatpush1.msra.mxu0 0.0
    %2649 = vmatprep.subr.mxu0 0.0
    %2650 = vmatpush1.msra.mxu0 0.0
    %2651 = vmatprep.subr.mxu0 0.0
    %2652 = vmatpush1.msra.mxu0 0.0
    %2653 = vmatprep.subr.mxu0 0.0
    %2654 = vmatpush1.msra.mxu0 0.0
    %2655 = vmatprep.mubr.f32.mxu0 0.0
    %2656 = vmatmul.mubr.f32.gmra.mrb[0].mxu0 %v2589
    %v2657 = vpop.f32.mrb[0].mxu0
    %v2658 = vadd.f32 0.0, %v2657
    %v2659 = vpop.f32.mrb[0].mxu0
    %2660 = vdwg.mxu0
    %v2661 = vpack.c.bf16 %v2658, %v2658
    %v2663 = vsel %vm674, %v2661, 0
    %v2666 = vsel %vm588, %v1787, 0
    %2668 = vmatprep.subr.bf16.mxu0 0
    %2669 = vmatpush1.bf16.msra.mxu0 %v2666
    %2670 = vmatprep.subr.bf16.mxu0 0
    %2671 = vmatpush1.bf16.msra.mxu0 0
    %2672 = vmatprep.subr.bf16.mxu0 0
    %2673 = vmatpush1.bf16.msra.mxu0 0
    %2674 = vmatprep.subr.bf16.mxu0 0
    %2675 = vmatpush1.bf16.msra.mxu0 0
    %2676 = vmatprep.subr.bf16.mxu0 0
    %2677 = vmatpush1.bf16.msra.mxu0 0
    %2678 = vmatprep.subr.bf16.mxu0 0
    %2679 = vmatpush1.bf16.msra.mxu0 0
    %2680 = vmatprep.subr.bf16.mxu0 0
    %2681 = vmatpush1.bf16.msra.mxu0 0
    %2682 = vmatprep.subr.bf16.mxu0 0
    %2683 = vmatpush1.bf16.msra.mxu0 0
    %2684 = vmatprep.subr.bf16.mxu0 0
    %2685 = vmatpush1.bf16.msra.mxu0 0
    %2686 = vmatprep.subr.bf16.mxu0 0
    %2687 = vmatpush1.bf16.msra.mxu0 0
    %2688 = vmatprep.subr.bf16.mxu0 0
    %2689 = vmatpush1.bf16.msra.mxu0 0
    %2690 = vmatprep.subr.bf16.mxu0 0
    %2691 = vmatpush1.bf16.msra.mxu0 0
    %2692 = vmatprep.subr.bf16.mxu0 0
    %2693 = vmatpush1.bf16.msra.mxu0 0
    %2694 = vmatprep.subr.bf16.mxu0 0
    %2695 = vmatpush1.bf16.msra.mxu0 0
    %2696 = vmatprep.subr.bf16.mxu0 0
    %2697 = vmatpush1.bf16.msra.mxu0 0
    %2698 = vmatprep.subr.bf16.mxu0 0
    %2699 = vmatpush1.bf16.msra.mxu0 0
    %2700 = vmatprep.mubr.bf16.mxu0 0
    %2701 = vmatmul.mubr.bf16.gmra.mrb[0].mxu0 %v2663
    %v2702 = vpop.f32.mrb[0].mxu0
    %v2703 = vadd.f32 0.0, %v2702
    %v2704 = vpop.f32.mrb[0].mxu0
    %v2705 = vpop.f32.mrb[0].mxu0
    %v2706 = vpop.f32.mrb[0].mxu0
    %2707 = vdwg.mxu0
    %v2708 = vadd.f32 %v2493, %v2703
    %s2709 = scalar_lea.vmem %s7, 1
    %v2710 = vld [vmem:[%s2709] sm:$0x1]
    %v2712 = vlaneseq
    %v2713 = vshrl.u32 %v2712, 7
    %v2714 = vsub.s32 0, %v2713
    %v2715 = vrot.slane %v2710, %v2714
    %v2717 = vadd.f32 %v2708, %v2715
    %v2718 = vadd.f32 %v1777, %v2717
    %s2719 = scalar_lea.vmem %s8, 1
    %v2720 = vld [vmem:[%s2719] sm:$0x1]
    %s2721 = scalar_lea.vmem %s9, 1
    %v2722 = vld [vmem:[%s2721] sm:$0x1]
    %v2723 = vsel %vm627, %v2718, 0.0
    %2724 = vadd.xlane.f32.xlu0 %v2723
    %v2725 = vpop.xlane.xlu0 %2724
    %v2726 = vmul.f32 %v2725, %v1543
    %v2727 = vsub.f32 %v2718, %v2726
    %v2728 = vmul.f32 %v2727, %v2727
    %v2729 = vsel %vm627, %v2728, 0.0
    %2730 = vadd.xlane.f32.xlu0 %v2729
    %v2731 = vpop.xlane.xlu0 %2730
    %v2732 = vmul.f32 %v2731, %v1543
    %v2733 = vadd.f32 %v2732, 1e-05
    %v2734 = vrsqrt.pop %v2733
    %v2735 = vmul.f32 %v2727, %v2734
    %v2737 = vlaneseq
    %v2738 = vshrl.u32 %v2737, 7
    %v2739 = vsub.s32 0, %v2738
    %v2740 = vrot.slane %v2720, %v2739
    %v2742 = vmul.f32 %v2735, %v2740
    %v2744 = vlaneseq
    %v2745 = vshrl.u32 %v2744, 7
    %v2746 = vsub.s32 0, %v2745
    %v2747 = vrot.slane %v2722, %v2746
    %v2749 = vadd.f32 %v2742, %v2747
    %v2750 = vpack.c.bf16 %v2749, %v2749
    %s2751 = scalar_lea.vmem %s10, 16
    %v2752 = vld [vmem:[%s2751] sm:$0xf]
    %v2753 = vld [vmem:[%s2751 + $0x4] sm:$0xf]
    %v2754 = vld [vmem:[%s2751 + $0x8] sm:$0xf]
    %v2755 = vld [vmem:[%s2751 + $0xc] sm:$0xf]
    %s2756 = scalar_lea.vmem %s11, 1
    %v2757 = vld [vmem:[%s2756] sm:$0x1]
    %v2759 = vlaneseq
    %v2760 = vshrl.u32 %v2759, 7
    %v2761 = vsub.s32 0, %v2760
    %v2762 = vrot.slane %v2757, %v2761
    %v2768 = vunpack.c.l.b16 %v2752
    %v2769 = vunpack.c.l.b16 %v2753
    %v2770 = vunpack.c.l.b16 %v2754
    %v2771 = vunpack.c.l.b16 %v2755
    %v2772 = vpack.c.b16 %v2769, %v2768
    %v2773 = vpack.c.b16 %v2771, %v2770
    %v2777 = vsel %vm627, %v2750, 0
    %2779 = vmatprep.subr.bf16.mxu0 0
    %2780 = vmatpush1.bf16.msra.mxu0 %v2772
    %2781 = vmatprep.subr.bf16.mxu0 0
    %2782 = vmatpush1.bf16.msra.mxu0 %v2773
    %2783 = vmatprep.subr.bf16.mxu0 0
    %2784 = vmatpush1.bf16.msra.mxu0 0
    %2785 = vmatprep.subr.bf16.mxu0 0
    %2786 = vmatpush1.bf16.msra.mxu0 0
    %2787 = vmatprep.subr.bf16.mxu0 0
    %2788 = vmatpush1.bf16.msra.mxu0 0
    %2789 = vmatprep.subr.bf16.mxu0 0
    %2790 = vmatpush1.bf16.msra.mxu0 0
    %2791 = vmatprep.subr.bf16.mxu0 0
    %2792 = vmatpush1.bf16.msra.mxu0 0
    %2793 = vmatprep.subr.bf16.mxu0 0
    %2794 = vmatpush1.bf16.msra.mxu0 0
    %2795 = vmatprep.subr.bf16.mxu0 0
    %2796 = vmatpush1.bf16.msra.mxu0 0
    %2797 = vmatprep.subr.bf16.mxu0 0
    %2798 = vmatpush1.bf16.msra.mxu0 0
    %2799 = vmatprep.subr.bf16.mxu0 0
    %2800 = vmatpush1.bf16.msra.mxu0 0
    %2801 = vmatprep.subr.bf16.mxu0 0
    %2802 = vmatpush1.bf16.msra.mxu0 0
    %2803 = vmatprep.subr.bf16.mxu0 0
    %2804 = vmatpush1.bf16.msra.mxu0 0
    %2805 = vmatprep.subr.bf16.mxu0 0
    %2806 = vmatpush1.bf16.msra.mxu0 0
    %2807 = vmatprep.subr.bf16.mxu0 0
    %2808 = vmatpush1.bf16.msra.mxu0 0
    %2809 = vmatprep.subr.bf16.mxu0 0
    %2810 = vmatpush1.bf16.msra.mxu0 0
    %2811 = vmatprep.mubr.bf16.mxu0 0
    %2812 = vmatmul.mubr.bf16.gmra.mrb[0].mxu0 %v2777
    %v2813 = vpop.f32.mrb[0].mxu0
    %v2814 = vadd.f32 %v2762, %v2813
    %v2815 = vpop.f32.mrb[0].mxu0
    %v2816 = vpop.f32.mrb[0].mxu0
    %v2817 = vpop.f32.mrb[0].mxu0
    %2818 = vdwg.mxu0
    %v2819 = vmax.f32 %v2814, 0.0
    %v2820 = vpack.c.bf16 %v2819, %v2819
    %s2821 = scalar_lea.vmem %s12, 64
    %v2822 = vld [vmem:[%s2821] sm:$0xf]
    %v2823 = vld [vmem:[%s2821 + $0x4] sm:$0xf]
    %v2824 = vld [vmem:[%s2821 + $0x8] sm:$0xf]
    %v2825 = vld [vmem:[%s2821 + $0xc] sm:$0xf]
    %v2826 = vld [vmem:[%s2821 + $0x10] sm:$0xf]
    %v2827 = vld [vmem:[%s2821 + $0x14] sm:$0xf]
    %v2828 = vld [vmem:[%s2821 + $0x18] sm:$0xf]
    %v2829 = vld [vmem:[%s2821 + $0x1c] sm:$0xf]
    %v2830 = vld [vmem:[%s2821 + $0x20] sm:$0xf]
    %v2831 = vld [vmem:[%s2821 + $0x24] sm:$0xf]
    %v2832 = vld [vmem:[%s2821 + $0x28] sm:$0xf]
    %v2833 = vld [vmem:[%s2821 + $0x2c] sm:$0xf]
    %v2834 = vld [vmem:[%s2821 + $0x30] sm:$0xf]
    %v2835 = vld [vmem:[%s2821 + $0x34] sm:$0xf]
    %v2836 = vld [vmem:[%s2821 + $0x38] sm:$0xf]
    %v2837 = vld [vmem:[%s2821 + $0x3c] sm:$0xf]
    %s2838 = scalar_lea.vmem %s13, 1
    %v2839 = vld [vmem:[%s2838] sm:$0x1]
    %v2841 = vlaneseq
    %v2842 = vshrl.u32 %v2841, 7
    %v2843 = vsub.s32 0, %v2842
    %v2844 = vrot.slane %v2839, %v2843
    %v2862 = vunpack.c.l.b16 %v2822
    %v2863 = vunpack.c.l.b16 %v2823
    %v2864 = vunpack.c.l.b16 %v2824
    %v2865 = vunpack.c.l.b16 %v2825
    %v2866 = vunpack.c.l.b16 %v2826
    %v2867 = vunpack.c.l.b16 %v2827
    %v2868 = vunpack.c.l.b16 %v2828
    %v2869 = vunpack.c.l.b16 %v2829
    %v2870 = vunpack.c.l.b16 %v2830
    %v2871 = vunpack.c.l.b16 %v2831
    %v2872 = vunpack.c.l.b16 %v2832
    %v2873 = vunpack.c.l.b16 %v2833
    %v2874 = vunpack.c.l.b16 %v2834
    %v2875 = vunpack.c.l.b16 %v2835
    %v2876 = vunpack.c.l.b16 %v2836
    %v2877 = vunpack.c.l.b16 %v2837
    %v2878 = vpack.c.b16 %v2863, %v2862
    %v2879 = vpack.c.b16 %v2865, %v2864
    %v2880 = vpack.c.b16 %v2867, %v2866
    %v2881 = vpack.c.b16 %v2869, %v2868
    %v2882 = vpack.c.b16 %v2871, %v2870
    %v2883 = vpack.c.b16 %v2873, %v2872
    %v2884 = vpack.c.b16 %v2875, %v2874
    %v2885 = vpack.c.b16 %v2877, %v2876
    %2894 = vmatprep.subr.bf16.mxu0 0
    %2895 = vmatpush1.bf16.msra.mxu0 %v2878
    %2896 = vmatprep.subr.bf16.mxu0 0
    %2897 = vmatpush1.bf16.msra.mxu0 %v2879
    %2898 = vmatprep.subr.bf16.mxu0 0
    %2899 = vmatpush1.bf16.msra.mxu0 %v2880
    %2900 = vmatprep.subr.bf16.mxu0 0
    %2901 = vmatpush1.bf16.msra.mxu0 %v2881
    %2902 = vmatprep.subr.bf16.mxu0 0
    %2903 = vmatpush1.bf16.msra.mxu0 %v2882
    %2904 = vmatprep.subr.bf16.mxu0 0
    %2905 = vmatpush1.bf16.msra.mxu0 %v2883
    %2906 = vmatprep.subr.bf16.mxu0 0
    %2907 = vmatpush1.bf16.msra.mxu0 %v2884
    %2908 = vmatprep.subr.bf16.mxu0 0
    %2909 = vmatpush1.bf16.msra.mxu0 %v2885
    %2910 = vmatprep.subr.bf16.mxu0 0
    %2911 = vmatpush1.bf16.msra.mxu0 0
    %2912 = vmatprep.subr.bf16.mxu0 0
    %2913 = vmatpush1.bf16.msra.mxu0 0
    %2914 = vmatprep.subr.bf16.mxu0 0
    %2915 = vmatpush1.bf16.msra.mxu0 0
    %2916 = vmatprep.subr.bf16.mxu0 0
    %2917 = vmatpush1.bf16.msra.mxu0 0
    %2918 = vmatprep.subr.bf16.mxu0 0
    %2919 = vmatpush1.bf16.msra.mxu0 0
    %2920 = vmatprep.subr.bf16.mxu0 0
    %2921 = vmatpush1.bf16.msra.mxu0 0
    %2922 = vmatprep.subr.bf16.mxu0 0
    %2923 = vmatpush1.bf16.msra.mxu0 0
    %2924 = vmatprep.subr.bf16.mxu0 0
    %2925 = vmatpush1.bf16.msra.mxu0 0
    %2926 = vmatprep.mubr.bf16.mxu0 0
    %2927 = vmatmul.mubr.bf16.gmra.mrb[0].mxu0 %v2820
    %v2928 = vpop.f32.mrb[0].mxu0
    %v2929 = vadd.f32 %v2844, %v2928
    %v2930 = vpop.f32.mrb[0].mxu0
    %v2931 = vpop.f32.mrb[0].mxu0
    %v2932 = vpop.f32.mrb[0].mxu0
    %2933 = vdwg.mxu0
    %v2934 = vadd.f32 %v2749, %v2929
    %s2935 = scalar_lea.vmem %s14, 1
    %v2936 = vld [vmem:[%s2935] sm:$0x1]
    %s2937 = scalar_lea.vmem %s15, 1
    %v2938 = vld [vmem:[%s2937] sm:$0x1]
    %v2939 = vsel %vm627, %v2934, 0.0
    %2940 = vadd.xlane.f32.xlu0 %v2939
    %v2941 = vpop.xlane.xlu0 %2940
    %v2942 = vmul.f32 %v2941, %v1543
    %v2943 = vsub.f32 %v2934, %v2942
    %v2944 = vmul.f32 %v2943, %v2943
    %v2945 = vsel %vm627, %v2944, 0.0
    %2946 = vadd.xlane.f32.xlu0 %v2945
    %v2947 = vpop.xlane.xlu0 %2946
    %v2948 = vmul.f32 %v2947, %v1543
    %v2949 = vadd.f32 %v2948, 1e-05
    %v2950 = vrsqrt.pop %v2949
    %v2951 = vmul.f32 %v2943, %v2950
    %v2953 = vlaneseq
    %v2954 = vshrl.u32 %v2953, 7
    %v2955 = vsub.s32 0, %v2954
    %v2956 = vrot.slane %v2936, %v2955
    %v2958 = vmul.f32 %v2951, %v2956
    %v2960 = vlaneseq
    %v2961 = vshrl.u32 %v2960, 7
    %v2962 = vsub.s32 0, %v2961
    %v2963 = vrot.slane %v2938, %v2962
    %v2965 = vadd.f32 %v2958, %v2963
    %vm2966 = vcmask 257024
    %v2967 = vsel %vm2966, %v2965, 0.0
    %v2968 = vrot.slane %v2967, 4
    %v2969 = vadd.f32 %v2967, %v2968
    %v2970 = vrot.slane %v2969, 2
    %v2971 = vadd.f32 %v2969, %v2970
    %v2972 = vrot.slane %v2971, 1
    %v2973 = vadd.f32 %v2971, %v2972
    %v2975 = vrot.slane %v2965, 4
    %v2977 = vsel %vm2966, %v2975, 0.0
    %v2978 = vrot.slane %v2977, 4
    %v2979 = vadd.f32 %v2977, %v2978
    %v2980 = vrot.slane %v2979, 2
    %v2981 = vadd.f32 %v2979, %v2980
    %v2982 = vrot.slane %v2981, 1
    %v2983 = vadd.f32 %v2981, %v2982
    %vm2984 = vcmask 1040384
    %v2985 = vsel %vm2984, %v2973, %v2983
    %v2986 = vmul.f32 %v2985, 0.25
    %v2987 = vpack.c.bf16 %v2986, %v2986
    %v2988 = vld [vmem:[%s16] sm:$0xf]
    %v2989 = vld [vmem:[%s16 + $0x4] sm:$0xf]
    %v2990 = vld [vmem:[%s16 + $0x8] sm:$0xf]
    %v2991 = vld [vmem:[%s16 + $0xc] sm:$0xf]
    %v2992 = vld [vmem:[%s17] sm:$0x1]
    %v2994 = vlaneseq
    %v2995 = vshrl.u32 %v2994, 7
    %v2996 = vsub.s32 0, %v2995
    %v2997 = vrot.slane %v2992, %v2996
    %v3003 = vunpack.c.l.b16 %v2988
    %v3004 = vunpack.c.l.b16 %v2989
    %v3005 = vunpack.c.l.b16 %v2990
    %v3006 = vunpack.c.l.b16 %v2991
    %v3007 = vpack.c.b16 %v3004, %v3003
    %v3008 = vpack.c.b16 %v3006, %v3005
    %v3012 = vsel %vm627, %v2987, 0
    %3014 = vmatprep.subr.bf16.mxu0 0
    %3015 = vmatpush1.bf16.msra.mxu0 %v3007
    %3016 = vmatprep.subr.bf16.mxu0 0
    %3017 = vmatpush1.bf16.msra.mxu0 %v3008
    %3018 = vmatprep.subr.bf16.mxu0 0
    %3019 = vmatpush1.bf16.msra.mxu0 0
    %3020 = vmatprep.subr.bf16.mxu0 0
    %3021 = vmatpush1.bf16.msra.mxu0 0
    %3022 = vmatprep.subr.bf16.mxu0 0
    %3023 = vmatpush1.bf16.msra.mxu0 0
    %3024 = vmatprep.subr.bf16.mxu0 0
    %3025 = vmatpush1.bf16.msra.mxu0 0
    %3026 = vmatprep.subr.bf16.mxu0 0
    %3027 = vmatpush1.bf16.msra.mxu0 0
    %3028 = vmatprep.subr.bf16.mxu0 0
    %3029 = vmatpush1.bf16.msra.mxu0 0
    %3030 = vmatprep.subr.bf16.mxu0 0
    %3031 = vmatpush1.bf16.msra.mxu0 0
    %3032 = vmatprep.subr.bf16.mxu0 0
    %3033 = vmatpush1.bf16.msra.mxu0 0
    %3034 = vmatprep.subr.bf16.mxu0 0
    %3035 = vmatpush1.bf16.msra.mxu0 0
    %3036 = vmatprep.subr.bf16.mxu0 0
    %3037 = vmatpush1.bf16.msra.mxu0 0
    %3038 = vmatprep.subr.bf16.mxu0 0
    %3039 = vmatpush1.bf16.msra.mxu0 0
    %3040 = vmatprep.subr.bf16.mxu0 0
    %3041 = vmatpush1.bf16.msra.mxu0 0
    %3042 = vmatprep.subr.bf16.mxu0 0
    %3043 = vmatpush1.bf16.msra.mxu0 0
    %3044 = vmatprep.subr.bf16.mxu0 0
    %3045 = vmatpush1.bf16.msra.mxu0 0
    %3046 = vmatprep.mubr.bf16.mxu0 0
    %3047 = vmatmul.mubr.bf16.gmra.mrb[0].mxu0 %v3012
    %v3048 = vpop.f32.mrb[0].mxu0
    %v3049 = vadd.f32 %v2997, %v3048
    %v3050 = vpop.f32.mrb[0].mxu0
    %v3051 = vpop.f32.mrb[0].mxu0
    %v3052 = vpop.f32.mrb[0].mxu0
    %3053 = vdwg.mxu0
    %vm3054 = vcmask 246784
    %3055 = vst.msk [vmem:[#allocation2] sm:$0x3] %vm3054, %v3049
    // Predicated region
    $region74: #{vit_forward.1} parent=1 // pred_check
      _
    $region75: #{vit_forward.1} parent=1 // pred_check_branch
      %3057 = sbr.rel (0) target = $region77
    $region76: #{vit_forward.1} parent=1 // pred_region
      %s3059 = ssub.s32 32, 32
      %3060 = vsyncadd [#allocation3], %s3059
      %s3062 = sshll.u32 [#allocation2], 4
      %s3063 = int_to_ptr.vmem [resolvable:$true] %s3062
      %3065 = dma.vmem_to_hbm [thread:$0]  %s3063, 32, %s18, [#allocation3]
    $region77: #{vit_forward.1} parent=1 // pred_fallthru
      _
    // Predicated region
    $region78: #{vit_forward.1} parent=1 // pred_check
      _
    $region79: #{vit_forward.1} parent=1 // pred_check_branch
      %3067 = sbr.rel (0) target = $region81
    $region80: #{vit_forward.1} parent=1 // pred_region
      %3068 = dma.done [#allocation3], 32
    $region81: #{vit_forward.1} parent=1 // pred_fallthru
      _
    %3069 = vsyncpa [#allocation3], 1

</llo_original>
